<compile_context>
chip_gen: v7x
topology: tpu7x:2x2x1
jax: 0.10.0
libtpu: 0.0.40
codegen_flags: <defaults>
</compile_context>

<pallas_src>
import functools

import numpy as np
import jax
import jax.numpy as jnp
from jax.experimental import pallas as pl
from jax.experimental.pallas import tpu as pltpu


def _round_up(x: int, m: int) -> int:
    return ((x + m - 1) // m) * m


def _mlp_kernel(*refs, layer_specs, mxu_precision):
    """refs = (x_ref, *param_refs, o_ref).

    layer_specs: tuple of "dense" / "skip".
      dense -> consumes (w, b)        : h = h @ w + b
      skip  -> consumes (w_h, w_x, b) : h = h @ w_h + x_in @ w_x + b
               (identical to concat([h, x_in]) @ w, but avoids lane concat)
    ReLU (in f32, on the VPU) after every layer except the last.
    Operands are cast to the weight dtype (bf16 by default); accumulation is
    always f32 via preferred_element_type.
    """
    x_ref = refs[0]
    o_ref = refs[-1]
    params = refs[1:-1]

    def dot(a, w):
        a = a.astype(w.dtype)
        if mxu_precision is None:
            return jnp.dot(a, w, preferred_element_type=jnp.float32)
        return jnp.dot(a, w, precision=mxu_precision,
                       preferred_element_type=jnp.float32)

    x_in = x_ref[...]
    h = x_in
    idx = 0
    n_layers = len(layer_specs)
    for i, kind in enumerate(layer_specs):
        if kind == "skip":
            w_h = params[idx][...]
            w_x = params[idx + 1][...]
            b = params[idx + 2][...]
            idx += 3
            h = dot(h, w_h) + dot(x_in, w_x) + b
        else:
            w = params[idx][...]
            b = params[idx + 1][...]
            idx += 2
            h = dot(h, w) + b
        if i < n_layers - 1:
            h = jnp.maximum(h, 0.0)
    o_ref[...] = h.astype(o_ref.dtype)


def _vmem_capacity_bytes() -> int:
    try:
        return int(pltpu.get_tpu_info().vmem_capacity_bytes)
    except Exception:
        return 64 << 20  # conservative (v7x-sized) fallback


def _choose_tile_rows(n: int, requested: int, vmem_cap_bytes: int) -> int:
    # Per-generation cap: 64 MiB-VMEM parts (v7x) get a smaller max tile.
    cap = 4096 if vmem_cap_bytes <= (64 << 20) else 8192
    tile = max(8, min(int(requested), cap))
    tile = _round_up(tile, 8)
    n_r8 = _round_up(max(int(n), 1), 8)
    if tile >= n_r8:
        # A single block would cover everything.  Split into >=2 grid steps so
        # the "parallel" axis can shard across both v7x TensorCores (and so
        # the pipeline overlaps), unless n is too small to split.
        if n_r8 >= 16:
            tile = _round_up(-(-n_r8 // 2), 8)
        else:
            tile = n_r8
    return tile


def mlp_forward(x, params, *, hidden_dim, skip_layers=(4,), tile_n=2048,
                compute_dtype=jnp.bfloat16):
    """NeRF MLP forward. params: list of (W[in,out], b[out]) per layer.

    compute_dtype: jnp.bfloat16 (default, single-pass MXU, f32 accumulate) or
    jnp.float32 (Precision.HIGH, ~1e-4-accurate 3-pass matmuls).
    """
    input_dim = params[0][0].shape[0]
    output_dim = params[-1][0].shape[1]

    *lead, d = x.shape
    assert d == input_dim, (d, input_dim)
    x2 = x.reshape(-1, d)
    n = x2.shape[0]

    use_f32 = np.dtype(compute_dtype) == np.dtype(np.float32)
    mxu_precision = jax.lax.Precision.HIGH if use_f32 else None

    # Pad the feature dim to a multiple of 64 (aligned DMAs, clean matmul K).
    in_pad = _round_up(input_dim, 64)
    pad_k = in_pad - input_dim
    if pad_k:
        x2 = jnp.pad(x2, ((0, 0), (0, pad_k)))

    vmem_cap = _vmem_capacity_bytes()
    tile_n = _choose_tile_rows(n, tile_n, vmem_cap)
    grid = (pl.cdiv(n, tile_n),)
    # Raise the scoped-VMEM limit (v5e default is only 16 MiB) but leave
    # headroom under the physical capacity (64 MiB on v7x).
    vmem_limit = min(max(vmem_cap - (16 << 20), 32 << 20), 96 << 20)

    layer_specs = []
    flat_params = []
    for i, (w, b) in enumerate(params):
        b2 = b.reshape(1, -1).astype(jnp.float32)  # bias added in f32
        if i in skip_layers and i > 0:
            # Split the skip-layer weight instead of concatenating activations.
            w_h = w[:hidden_dim, :]
            w_x = w[hidden_dim:, :]
            if pad_k:
                w_x = jnp.pad(w_x, ((0, pad_k), (0, 0)))
            layer_specs.append("skip")
            flat_params += [w_h.astype(compute_dtype),
                            w_x.astype(compute_dtype), b2]
        else:
            if i == 0 and pad_k:
                w = jnp.pad(w, ((0, pad_k), (0, 0)))
            layer_specs.append("dense")
            flat_params += [w.astype(compute_dtype), b2]

    flops = 2 * n * sum(int(w.shape[0]) * int(w.shape[1]) for (w, _) in params)
    bytes_accessed = (x2.size * x2.dtype.itemsize
                      + n * output_dim * x.dtype.itemsize
                      + sum(int(p.size) * p.dtype.itemsize for p in flat_params))
    cost = pl.CostEstimate(flops=int(flops), transcendentals=0,
                           bytes_accessed=int(bytes_accessed))

    kernel = functools.partial(_mlp_kernel, layer_specs=tuple(layer_specs),
                               mxu_precision=mxu_precision)

    def run(single_buffer_weights: bool):
        in_specs = [pl.BlockSpec((tile_n, in_pad), lambda i: (i, 0))]
        for p in flat_params:
            # Weights/biases: full-array blocks, constant index map -> fetched
            # once and kept VMEM-resident; single-buffered (no point in a
            # second pipeline buffer for a constant block).
            if single_buffer_weights:
                in_specs.append(pl.BlockSpec(p.shape, lambda i: (0, 0),
                                             pipeline_mode=pl.Buffered(1)))
            else:
                in_specs.append(pl.BlockSpec(p.shape, lambda i: (0, 0)))
        out_spec = pl.BlockSpec((tile_n, output_dim), lambda i: (i, 0))

        call = pl.pallas_call(
            kernel,
            out_shape=jax.ShapeDtypeStruct((n, output_dim), x.dtype),
            grid_spec=pltpu.PrefetchScalarGridSpec(
                num_scalar_prefetch=0,
                grid=grid,
                in_specs=in_specs,
                out_specs=out_spec,
            ),
            compiler_params=pltpu.CompilerParams(
                dimension_semantics=("parallel",),
                vmem_limit_bytes=int(vmem_limit)),
            cost_estimate=cost,
        )
        return call(x2, *flat_params)

    try:
        out = jax.block_until_ready(run(True))
    except Exception:
        # Fallback for jax builds without BlockSpec(pipeline_mode=...).
        out = jax.block_until_ready(run(False))

    return out.reshape(*lead, output_dim)


def mlp_forward_ref(x, params, *, skip_layers=(4,), compute_dtype=jnp.float32):
    """Pure-JAX reference matching the PyTorch MLPNetwork.forward exactly
    (compute_dtype=float32), or mirroring the kernel's bf16-operand /
    f32-accumulate arithmetic (compute_dtype=bfloat16)."""
    num_layers = len(params)
    use_f32 = np.dtype(compute_dtype) == np.dtype(np.float32)
    x_in = x
    h = x
    for i, (w, b) in enumerate(params):
        if i in skip_layers and i > 0:
            h = jnp.concatenate([h, x_in], axis=-1)
        if use_f32:
            h = jnp.dot(h, w, precision=jax.lax.Precision.HIGHEST) + b
        else:
            h = jnp.dot(h.astype(compute_dtype), w.astype(compute_dtype),
                        preferred_element_type=jnp.float32) + b
        if i < num_layers - 1:
            h = jax.nn.relu(h)
    return h


def make_params(key, *, input_dim, output_dim, hidden_dim, num_layers,
                skip_layers):
    """Build (W[in,out], b[out]) per layer, mirroring MLPNetwork.__init__."""
    params = []
    keys = jax.random.split(key, 2 * num_layers)
    for i in range(num_layers):
        if i == 0:
            in_d = input_dim
        elif i in skip_layers:
            in_d = hidden_dim + input_dim
        else:
            in_d = hidden_dim
        out_d = output_dim if i == num_layers - 1 else hidden_dim
        w = jax.random.normal(keys[2 * i], (in_d, out_d), jnp.float32)
        w = w * (1.0 / np.sqrt(in_d))
        b = 0.01 * jax.random.normal(keys[2 * i + 1], (out_d,), jnp.float32)
        params.append((w, b))
    return params


if __name__ == "__main__":
    # Small NeRF-like config: 63-dim positionally-encoded input, 4-dim output
    # (rgb + sigma), 8 layers with a skip connection at layer 4.
    input_dim = 63
    output_dim = 4
    hidden_dim = 128
    num_layers = 8
    skip_layers = (4,)

    key = jax.random.PRNGKey(0)
    pkey, xkey = jax.random.split(key)
    params = make_params(pkey, input_dim=input_dim, output_dim=output_dim,
                         hidden_dim=hidden_dim, num_layers=num_layers,
                         skip_layers=skip_layers)
    # Batch of rays x samples: (2, 64, 63) -> 128 rows through the MLP.
    x = jax.random.normal(xkey, (2, 64, input_dim), dtype=jnp.float32)

    out = mlp_forward(x, params, hidden_dim=hidden_dim,
                      skip_layers=skip_layers)
    out = jax.block_until_ready(out)
    assert out.shape == (2, 64, output_dim), out.shape

    # Structural check: against a reference that mirrors the kernel's
    # bf16-operand / f32-accumulate arithmetic.
    ref_bf16 = mlp_forward_ref(x, params, skip_layers=skip_layers,
                               compute_dtype=jnp.bfloat16)
    np.testing.assert_allclose(np.asarray(out), np.asarray(ref_bf16),
                               rtol=5e-2, atol=5e-2)
    # Numerics sanity check: against the exact f32 PyTorch-equivalent
    # reference (tolerance loosened for the bf16 compute path).
    ref_f32 = mlp_forward_ref(x, params, skip_layers=skip_layers)
    np.testing.assert_allclose(np.asarray(out), np.asarray(ref_f32),
                               rtol=1.2e-1, atol=1.2e-1)
    print("KERNEL_OK")
</pallas_src>

<mosaic_0001>
module attributes {stable_mosaic.version = 11 : i64} {
  func.func @_mlp_kernel(%arg0: i32, %arg1: memref<64x64xf32, #tpu.memory_space<vmem>>, %arg2: memref<64x128xbf16, #tpu.memory_space<vmem>>, %arg3: memref<1x128xf32, #tpu.memory_space<vmem>>, %arg4: memref<128x128xbf16, #tpu.memory_space<vmem>>, %arg5: memref<1x128xf32, #tpu.memory_space<vmem>>, %arg6: memref<128x128xbf16, #tpu.memory_space<vmem>>, %arg7: memref<1x128xf32, #tpu.memory_space<vmem>>, %arg8: memref<128x128xbf16, #tpu.memory_space<vmem>>, %arg9: memref<1x128xf32, #tpu.memory_space<vmem>>, %arg10: memref<128x128xbf16, #tpu.memory_space<vmem>>, %arg11: memref<64x128xbf16, #tpu.memory_space<vmem>>, %arg12: memref<1x128xf32, #tpu.memory_space<vmem>>, %arg13: memref<128x128xbf16, #tpu.memory_space<vmem>>, %arg14: memref<1x128xf32, #tpu.memory_space<vmem>>, %arg15: memref<128x128xbf16, #tpu.memory_space<vmem>>, %arg16: memref<1x128xf32, #tpu.memory_space<vmem>>, %arg17: memref<128x4xbf16, #tpu.memory_space<vmem>>, %arg18: memref<1x4xf32, #tpu.memory_space<vmem>>, %arg19: memref<64x4xf32, #tpu.memory_space<vmem>>) attributes {dimension_semantics = [#tpu.dimension_semantics<parallel>], iteration_bounds = array<i64: 2>, scalar_prefetch = 0 : i64, scratch_operands = 0 : i64, tpu.core_type = #tpu.core_type<tc>, window_params = [{transform_indices = @transform_0, window_bounds = array<i64: 64, 64>}, {pipeline_mode = #tpu.pipeline_mode<synchronous>, transform_indices = @transform_1, window_bounds = array<i64: 64, 128>}, {pipeline_mode = #tpu.pipeline_mode<synchronous>, transform_indices = @transform_2, window_bounds = array<i64: 1, 128>}, {pipeline_mode = #tpu.pipeline_mode<synchronous>, transform_indices = @transform_3, window_bounds = array<i64: 128, 128>}, {pipeline_mode = #tpu.pipeline_mode<synchronous>, transform_indices = @transform_4, window_bounds = array<i64: 1, 128>}, {pipeline_mode = #tpu.pipeline_mode<synchronous>, transform_indices = @transform_5, window_bounds = array<i64: 128, 128>}, {pipeline_mode = #tpu.pipeline_mode<synchronous>, transform_indices = @transform_6, window_bounds = array<i64: 1, 128>}, {pipeline_mode = #tpu.pipeline_mode<synchronous>, transform_indices = @transform_7, window_bounds = array<i64: 128, 128>}, {pipeline_mode = #tpu.pipeline_mode<synchronous>, transform_indices = @transform_8, window_bounds = array<i64: 1, 128>}, {pipeline_mode = #tpu.pipeline_mode<synchronous>, transform_indices = @transform_9, window_bounds = array<i64: 128, 128>}, {pipeline_mode = #tpu.pipeline_mode<synchronous>, transform_indices = @transform_10, window_bounds = array<i64: 64, 128>}, {pipeline_mode = #tpu.pipeline_mode<synchronous>, transform_indices = @transform_11, window_bounds = array<i64: 1, 128>}, {pipeline_mode = #tpu.pipeline_mode<synchronous>, transform_indices = @transform_12, window_bounds = array<i64: 128, 128>}, {pipeline_mode = #tpu.pipeline_mode<synchronous>, transform_indices = @transform_13, window_bounds = array<i64: 1, 128>}, {pipeline_mode = #tpu.pipeline_mode<synchronous>, transform_indices = @transform_14, window_bounds = array<i64: 128, 128>}, {pipeline_mode = #tpu.pipeline_mode<synchronous>, transform_indices = @transform_15, window_bounds = array<i64: 1, 128>}, {pipeline_mode = #tpu.pipeline_mode<synchronous>, transform_indices = @transform_16, window_bounds = array<i64: 128, 4>}, {pipeline_mode = #tpu.pipeline_mode<synchronous>, transform_indices = @transform_17, window_bounds = array<i64: 1, 4>}, {transform_indices = @transform_18, window_bounds = array<i64: 64, 4>}]} {
    %c0 = arith.constant 0 : index
    %c0_0 = arith.constant 0 : index
    %0 = vector.load %arg1[%c0, %c0_0] : memref<64x64xf32, #tpu.memory_space<vmem>>, vector<64x64xf32>
    %c0_1 = arith.constant 0 : index
    %c0_2 = arith.constant 0 : index
    %1 = vector.load %arg2[%c0_1, %c0_2] : memref<64x128xbf16, #tpu.memory_space<vmem>>, vector<64x128xbf16>
    %c0_3 = arith.constant 0 : index
    %c0_4 = arith.constant 0 : index
    %2 = vector.load %arg3[%c0_3, %c0_4] : memref<1x128xf32, #tpu.memory_space<vmem>>, vector<1x128xf32>
    %3 = arith.truncf %0 : vector<64x64xf32> to vector<64x64xbf16>
    %cst = arith.constant dense<0.000000e+00> : vector<64x128xf32>
    %4 = tpu.matmul %3, %1, %cst {dimension_numbers = #tpu.dot_dimension_numbers<[1], [0], [0], [1], [0, 0, 1, 1], [], []>} : vector<64x64xbf16>, vector<64x128xbf16>, vector<64x128xf32> -> vector<64x128xf32>
    %5 = vector.broadcast %2 : vector<1x128xf32> to vector<64x128xf32>
    %6 = arith.addf %4, %5 : vector<64x128xf32>
    %cst_5 = arith.constant 0.000000e+00 : f32
    %7 = vector.broadcast %cst_5 : f32 to vector<64x128xf32>
    %8 = arith.maximumf %6, %7 : vector<64x128xf32>
    %c0_6 = arith.constant 0 : index
    %c0_7 = arith.constant 0 : index
    %9 = vector.load %arg4[%c0_6, %c0_7] : memref<128x128xbf16, #tpu.memory_space<vmem>>, vector<128x128xbf16>
    %c0_8 = arith.constant 0 : index
    %c0_9 = arith.constant 0 : index
    %10 = vector.load %arg5[%c0_8, %c0_9] : memref<1x128xf32, #tpu.memory_space<vmem>>, vector<1x128xf32>
    %11 = arith.truncf %8 : vector<64x128xf32> to vector<64x128xbf16>
    %cst_10 = arith.constant dense<0.000000e+00> : vector<64x128xf32>
    %12 = tpu.matmul %11, %9, %cst_10 {dimension_numbers = #tpu.dot_dimension_numbers<[1], [0], [0], [1], [0, 0, 1, 1], [], []>} : vector<64x128xbf16>, vector<128x128xbf16>, vector<64x128xf32> -> vector<64x128xf32>
    %13 = vector.broadcast %10 : vector<1x128xf32> to vector<64x128xf32>
    %14 = arith.addf %12, %13 : vector<64x128xf32>
    %cst_11 = arith.constant 0.000000e+00 : f32
    %15 = vector.broadcast %cst_11 : f32 to vector<64x128xf32>
    %16 = arith.maximumf %14, %15 : vector<64x128xf32>
    %c0_12 = arith.constant 0 : index
    %c0_13 = arith.constant 0 : index
    %17 = vector.load %arg6[%c0_12, %c0_13] : memref<128x128xbf16, #tpu.memory_space<vmem>>, vector<128x128xbf16>
    %c0_14 = arith.constant 0 : index
    %c0_15 = arith.constant 0 : index
    %18 = vector.load %arg7[%c0_14, %c0_15] : memref<1x128xf32, #tpu.memory_space<vmem>>, vector<1x128xf32>
    %19 = arith.truncf %16 : vector<64x128xf32> to vector<64x128xbf16>
    %cst_16 = arith.constant dense<0.000000e+00> : vector<64x128xf32>
    %20 = tpu.matmul %19, %17, %cst_16 {dimension_numbers = #tpu.dot_dimension_numbers<[1], [0], [0], [1], [0, 0, 1, 1], [], []>} : vector<64x128xbf16>, vector<128x128xbf16>, vector<64x128xf32> -> vector<64x128xf32>
    %21 = vector.broadcast %18 : vector<1x128xf32> to vector<64x128xf32>
    %22 = arith.addf %20, %21 : vector<64x128xf32>
    %cst_17 = arith.constant 0.000000e+00 : f32
    %23 = vector.broadcast %cst_17 : f32 to vector<64x128xf32>
    %24 = arith.maximumf %22, %23 : vector<64x128xf32>
    %c0_18 = arith.constant 0 : index
    %c0_19 = arith.constant 0 : index
    %25 = vector.load %arg8[%c0_18, %c0_19] : memref<128x128xbf16, #tpu.memory_space<vmem>>, vector<128x128xbf16>
    %c0_20 = arith.constant 0 : index
    %c0_21 = arith.constant 0 : index
    %26 = vector.load %arg9[%c0_20, %c0_21] : memref<1x128xf32, #tpu.memory_space<vmem>>, vector<1x128xf32>
    %27 = arith.truncf %24 : vector<64x128xf32> to vector<64x128xbf16>
    %cst_22 = arith.constant dense<0.000000e+00> : vector<64x128xf32>
    %28 = tpu.matmul %27, %25, %cst_22 {dimension_numbers = #tpu.dot_dimension_numbers<[1], [0], [0], [1], [0, 0, 1, 1], [], []>} : vector<64x128xbf16>, vector<128x128xbf16>, vector<64x128xf32> -> vector<64x128xf32>
    %29 = vector.broadcast %26 : vector<1x128xf32> to vector<64x128xf32>
    %30 = arith.addf %28, %29 : vector<64x128xf32>
    %cst_23 = arith.constant 0.000000e+00 : f32
    %31 = vector.broadcast %cst_23 : f32 to vector<64x128xf32>
    %32 = arith.maximumf %30, %31 : vector<64x128xf32>
    %c0_24 = arith.constant 0 : index
    %c0_25 = arith.constant 0 : index
    %33 = vector.load %arg10[%c0_24, %c0_25] : memref<128x128xbf16, #tpu.memory_space<vmem>>, vector<128x128xbf16>
    %c0_26 = arith.constant 0 : index
    %c0_27 = arith.constant 0 : index
    %34 = vector.load %arg11[%c0_26, %c0_27] : memref<64x128xbf16, #tpu.memory_space<vmem>>, vector<64x128xbf16>
    %c0_28 = arith.constant 0 : index
    %c0_29 = arith.constant 0 : index
    %35 = vector.load %arg12[%c0_28, %c0_29] : memref<1x128xf32, #tpu.memory_space<vmem>>, vector<1x128xf32>
    %36 = arith.truncf %32 : vector<64x128xf32> to vector<64x128xbf16>
    %cst_30 = arith.constant dense<0.000000e+00> : vector<64x128xf32>
    %37 = tpu.matmul %36, %33, %cst_30 {dimension_numbers = #tpu.dot_dimension_numbers<[1], [0], [0], [1], [0, 0, 1, 1], [], []>} : vector<64x128xbf16>, vector<128x128xbf16>, vector<64x128xf32> -> vector<64x128xf32>
    %38 = arith.truncf %0 : vector<64x64xf32> to vector<64x64xbf16>
    %cst_31 = arith.constant dense<0.000000e+00> : vector<64x128xf32>
    %39 = tpu.matmul %38, %34, %cst_31 {dimension_numbers = #tpu.dot_dimension_numbers<[1], [0], [0], [1], [0, 0, 1, 1], [], []>} : vector<64x64xbf16>, vector<64x128xbf16>, vector<64x128xf32> -> vector<64x128xf32>
    %40 = arith.addf %37, %39 : vector<64x128xf32>
    %41 = vector.broadcast %35 : vector<1x128xf32> to vector<64x128xf32>
    %42 = arith.addf %40, %41 : vector<64x128xf32>
    %cst_32 = arith.constant 0.000000e+00 : f32
    %43 = vector.broadcast %cst_32 : f32 to vector<64x128xf32>
    %44 = arith.maximumf %42, %43 : vector<64x128xf32>
    %c0_33 = arith.constant 0 : index
    %c0_34 = arith.constant 0 : index
    %45 = vector.load %arg13[%c0_33, %c0_34] : memref<128x128xbf16, #tpu.memory_space<vmem>>, vector<128x128xbf16>
    %c0_35 = arith.constant 0 : index
    %c0_36 = arith.constant 0 : index
    %46 = vector.load %arg14[%c0_35, %c0_36] : memref<1x128xf32, #tpu.memory_space<vmem>>, vector<1x128xf32>
    %47 = arith.truncf %44 : vector<64x128xf32> to vector<64x128xbf16>
    %cst_37 = arith.constant dense<0.000000e+00> : vector<64x128xf32>
    %48 = tpu.matmul %47, %45, %cst_37 {dimension_numbers = #tpu.dot_dimension_numbers<[1], [0], [0], [1], [0, 0, 1, 1], [], []>} : vector<64x128xbf16>, vector<128x128xbf16>, vector<64x128xf32> -> vector<64x128xf32>
    %49 = vector.broadcast %46 : vector<1x128xf32> to vector<64x128xf32>
    %50 = arith.addf %48, %49 : vector<64x128xf32>
    %cst_38 = arith.constant 0.000000e+00 : f32
    %51 = vector.broadcast %cst_38 : f32 to vector<64x128xf32>
    %52 = arith.maximumf %50, %51 : vector<64x128xf32>
    %c0_39 = arith.constant 0 : index
    %c0_40 = arith.constant 0 : index
    %53 = vector.load %arg15[%c0_39, %c0_40] : memref<128x128xbf16, #tpu.memory_space<vmem>>, vector<128x128xbf16>
    %c0_41 = arith.constant 0 : index
    %c0_42 = arith.constant 0 : index
    %54 = vector.load %arg16[%c0_41, %c0_42] : memref<1x128xf32, #tpu.memory_space<vmem>>, vector<1x128xf32>
    %55 = arith.truncf %52 : vector<64x128xf32> to vector<64x128xbf16>
    %cst_43 = arith.constant dense<0.000000e+00> : vector<64x128xf32>
    %56 = tpu.matmul %55, %53, %cst_43 {dimension_numbers = #tpu.dot_dimension_numbers<[1], [0], [0], [1], [0, 0, 1, 1], [], []>} : vector<64x128xbf16>, vector<128x128xbf16>, vector<64x128xf32> -> vector<64x128xf32>
    %57 = vector.broadcast %54 : vector<1x128xf32> to vector<64x128xf32>
    %58 = arith.addf %56, %57 : vector<64x128xf32>
    %cst_44 = arith.constant 0.000000e+00 : f32
    %59 = vector.broadcast %cst_44 : f32 to vector<64x128xf32>
    %60 = arith.maximumf %58, %59 : vector<64x128xf32>
    %c0_45 = arith.constant 0 : index
    %c0_46 = arith.constant 0 : index
    %61 = vector.load %arg17[%c0_45, %c0_46] : memref<128x4xbf16, #tpu.memory_space<vmem>>, vector<128x4xbf16>
    %c0_47 = arith.constant 0 : index
    %c0_48 = arith.constant 0 : index
    %62 = vector.load %arg18[%c0_47, %c0_48] : memref<1x4xf32, #tpu.memory_space<vmem>>, vector<1x4xf32>
    %63 = arith.truncf %60 : vector<64x128xf32> to vector<64x128xbf16>
    %cst_49 = arith.constant dense<0.000000e+00> : vector<64x4xf32>
    %64 = tpu.matmul %63, %61, %cst_49 {dimension_numbers = #tpu.dot_dimension_numbers<[1], [0], [0], [1], [0, 0, 1, 1], [], []>} : vector<64x128xbf16>, vector<128x4xbf16>, vector<64x4xf32> -> vector<64x4xf32>
    %65 = vector.broadcast %62 : vector<1x4xf32> to vector<64x4xf32>
    %66 = arith.addf %64, %65 : vector<64x4xf32>
    %c0_50 = arith.constant 0 : index
    %c0_51 = arith.constant 0 : index
    %67 = vector.load %arg19[%c0_50, %c0_51] : memref<64x4xf32, #tpu.memory_space<vmem>>, vector<64x4xf32>
    tpu.vector_store %arg19[%c0_50, %c0_51], %66 {strides = array<i32>} : memref<64x4xf32, #tpu.memory_space<vmem>>, vector<64x4xf32>,
    return
  }
  func.func @transform_0(%arg0: i32) -> (i32, i32) {
    %c0_i32 = arith.constant 0 : i32
    %c0_i32_0 = arith.constant 0 : i32
    return %arg0, %c0_i32 : i32, i32
  }
  func.func @transform_1(%arg0: i32) -> (i32, i32) {
    %c0_i32 = arith.constant 0 : i32
    %c0_i32_0 = arith.constant 0 : i32
    %c0_i32_1 = arith.constant 0 : i32
    return %c0_i32, %c0_i32_0 : i32, i32
  }
  func.func @transform_2(%arg0: i32) -> (i32, i32) {
    %c0_i32 = arith.constant 0 : i32
    %c0_i32_0 = arith.constant 0 : i32
    %c0_i32_1 = arith.constant 0 : i32
    return %c0_i32, %c0_i32_0 : i32, i32
  }
  func.func @transform_3(%arg0: i32) -> (i32, i32) {
    %c0_i32 = arith.constant 0 : i32
    %c0_i32_0 = arith.constant 0 : i32
    %c0_i32_1 = arith.constant 0 : i32
    return %c0_i32, %c0_i32_0 : i32, i32
  }
  func.func @transform_4(%arg0: i32) -> (i32, i32) {
    %c0_i32 = arith.constant 0 : i32
    %c0_i32_0 = arith.constant 0 : i32
    %c0_i32_1 = arith.constant 0 : i32
    return %c0_i32, %c0_i32_0 : i32, i32
  }
  func.func @transform_5(%arg0: i32) -> (i32, i32) {
    %c0_i32 = arith.constant 0 : i32
    %c0_i32_0 = arith.constant 0 : i32
    %c0_i32_1 = arith.constant 0 : i32
    return %c0_i32, %c0_i32_0 : i32, i32
  }
  func.func @transform_6(%arg0: i32) -> (i32, i32) {
    %c0_i32 = arith.constant 0 : i32
    %c0_i32_0 = arith.constant 0 : i32
    %c0_i32_1 = arith.constant 0 : i32
    return %c0_i32, %c0_i32_0 : i32, i32
  }
  func.func @transform_7(%arg0: i32) -> (i32, i32) {
    %c0_i32 = arith.constant 0 : i32
    %c0_i32_0 = arith.constant 0 : i32
    %c0_i32_1 = arith.constant 0 : i32
    return %c0_i32, %c0_i32_0 : i32, i32
  }
  func.func @transform_8(%arg0: i32) -> (i32, i32) {
    %c0_i32 = arith.constant 0 : i32
    %c0_i32_0 = arith.constant 0 : i32
    %c0_i32_1 = arith.constant 0 : i32
    return %c0_i32, %c0_i32_0 : i32, i32
  }
  func.func @transform_9(%arg0: i32) -> (i32, i32) {
    %c0_i32 = arith.constant 0 : i32
    %c0_i32_0 = arith.constant 0 : i32
    %c0_i32_1 = arith.constant 0 : i32
    return %c0_i32, %c0_i32_0 : i32, i32
  }
  func.func @transform_10(%arg0: i32) -> (i32, i32) {
    %c0_i32 = arith.constant 0 : i32
    %c0_i32_0 = arith.constant 0 : i32
    %c0_i32_1 = arith.constant 0 : i32
    return %c0_i32, %c0_i32_0 : i32, i32
  }
  func.func @transform_11(%arg0: i32) -> (i32, i32) {
    %c0_i32 = arith.constant 0 : i32
    %c0_i32_0 = arith.constant 0 : i32
    %c0_i32_1 = arith.constant 0 : i32
    return %c0_i32, %c0_i32_0 : i32, i32
  }
  func.func @transform_12(%arg0: i32) -> (i32, i32) {
    %c0_i32 = arith.constant 0 : i32
    %c0_i32_0 = arith.constant 0 : i32
    %c0_i32_1 = arith.constant 0 : i32
    return %c0_i32, %c0_i32_0 : i32, i32
  }
  func.func @transform_13(%arg0: i32) -> (i32, i32) {
    %c0_i32 = arith.constant 0 : i32
    %c0_i32_0 = arith.constant 0 : i32
    %c0_i32_1 = arith.constant 0 : i32
    return %c0_i32, %c0_i32_0 : i32, i32
  }
  func.func @transform_14(%arg0: i32) -> (i32, i32) {
    %c0_i32 = arith.constant 0 : i32
    %c0_i32_0 = arith.constant 0 : i32
    %c0_i32_1 = arith.constant 0 : i32
    return %c0_i32, %c0_i32_0 : i32, i32
  }
  func.func @transform_15(%arg0: i32) -> (i32, i32) {
    %c0_i32 = arith.constant 0 : i32
    %c0_i32_0 = arith.constant 0 : i32
    %c0_i32_1 = arith.constant 0 : i32
    return %c0_i32, %c0_i32_0 : i32, i32
  }
  func.func @transform_16(%arg0: i32) -> (i32, i32) {
    %c0_i32 = arith.constant 0 : i32
    %c0_i32_0 = arith.constant 0 : i32
    %c0_i32_1 = arith.constant 0 : i32
    return %c0_i32, %c0_i32_0 : i32, i32
  }
  func.func @transform_17(%arg0: i32) -> (i32, i32) {
    %c0_i32 = arith.constant 0 : i32
    %c0_i32_0 = arith.constant 0 : i32
    %c0_i32_1 = arith.constant 0 : i32
    return %c0_i32, %c0_i32_0 : i32, i32
  }
  func.func @transform_18(%arg0: i32) -> (i32, i32) {
    %c0_i32 = arith.constant 0 : i32
    %c0_i32_0 = arith.constant 0 : i32
    return %arg0, %c0_i32 : i32, i32
  }
}

module attributes {stable_mosaic.version = 11 : i64} {
  func.func @_mlp_kernel(%arg0: i32, %arg1: memref<64x64xf32, #tpu.memory_space<vmem>>, %arg2: memref<64x128xbf16, #tpu.memory_space<vmem>>, %arg3: memref<1x128xf32, #tpu.memory_space<vmem>>, %arg4: memref<128x128xbf16, #tpu.memory_space<vmem>>, %arg5: memref<1x128xf32, #tpu.memory_space<vmem>>, %arg6: memref<128x128xbf16, #tpu.memory_space<vmem>>, %arg7: memref<1x128xf32, #tpu.memory_space<vmem>>, %arg8: memref<128x128xbf16, #tpu.memory_space<vmem>>, %arg9: memref<1x128xf32, #tpu.memory_space<vmem>>, %arg10: memref<128x128xbf16, #tpu.memory_space<vmem>>, %arg11: memref<64x128xbf16, #tpu.memory_space<vmem>>, %arg12: memref<1x128xf32, #tpu.memory_space<vmem>>, %arg13: memref<128x128xbf16, #tpu.memory_space<vmem>>, %arg14: memref<1x128xf32, #tpu.memory_space<vmem>>, %arg15: memref<128x128xbf16, #tpu.memory_space<vmem>>, %arg16: memref<1x128xf32, #tpu.memory_space<vmem>>, %arg17: memref<128x4xbf16, #tpu.memory_space<vmem>>, %arg18: memref<1x4xf32, #tpu.memory_space<vmem>>, %arg19: memref<64x4xf32, #tpu.memory_space<vmem>>) attributes {dimension_semantics = [#tpu.dimension_semantics<parallel>], iteration_bounds = array<i64: 2>, scalar_prefetch = 0 : i64, scratch_operands = 0 : i64, tpu.core_type = #tpu.core_type<tc>, window_params = [{transform_indices = @transform_0, window_bounds = array<i64: 64, 64>}, {pipeline_mode = #tpu.pipeline_mode<synchronous>, transform_indices = @transform_1, window_bounds = array<i64: 64, 128>}, {pipeline_mode = #tpu.pipeline_mode<synchronous>, transform_indices = @transform_2, window_bounds = array<i64: 1, 128>}, {pipeline_mode = #tpu.pipeline_mode<synchronous>, transform_indices = @transform_3, window_bounds = array<i64: 128, 128>}, {pipeline_mode = #tpu.pipeline_mode<synchronous>, transform_indices = @transform_4, window_bounds = array<i64: 1, 128>}, {pipeline_mode = #tpu.pipeline_mode<synchronous>, transform_indices = @transform_5, window_bounds = array<i64: 128, 128>}, {pipeline_mode = #tpu.pipeline_mode<synchronous>, transform_indices = @transform_6, window_bounds = array<i64: 1, 128>}, {pipeline_mode = #tpu.pipeline_mode<synchronous>, transform_indices = @transform_7, window_bounds = array<i64: 128, 128>}, {pipeline_mode = #tpu.pipeline_mode<synchronous>, transform_indices = @transform_8, window_bounds = array<i64: 1, 128>}, {pipeline_mode = #tpu.pipeline_mode<synchronous>, transform_indices = @transform_9, window_bounds = array<i64: 128, 128>}, {pipeline_mode = #tpu.pipeline_mode<synchronous>, transform_indices = @transform_10, window_bounds = array<i64: 64, 128>}, {pipeline_mode = #tpu.pipeline_mode<synchronous>, transform_indices = @transform_11, window_bounds = array<i64: 1, 128>}, {pipeline_mode = #tpu.pipeline_mode<synchronous>, transform_indices = @transform_12, window_bounds = array<i64: 128, 128>}, {pipeline_mode = #tpu.pipeline_mode<synchronous>, transform_indices = @transform_13, window_bounds = array<i64: 1, 128>}, {pipeline_mode = #tpu.pipeline_mode<synchronous>, transform_indices = @transform_14, window_bounds = array<i64: 128, 128>}, {pipeline_mode = #tpu.pipeline_mode<synchronous>, transform_indices = @transform_15, window_bounds = array<i64: 1, 128>}, {pipeline_mode = #tpu.pipeline_mode<synchronous>, transform_indices = @transform_16, window_bounds = array<i64: 128, 4>}, {pipeline_mode = #tpu.pipeline_mode<synchronous>, transform_indices = @transform_17, window_bounds = array<i64: 1, 4>}, {transform_indices = @transform_18, window_bounds = array<i64: 64, 4>}]} {
    %c0 = arith.constant 0 : index
    %c0_0 = arith.constant 0 : index
    %0 = vector.load %arg1[%c0, %c0_0] : memref<64x64xf32, #tpu.memory_space<vmem>>, vector<64x64xf32>
    %c0_1 = arith.constant 0 : index
    %c0_2 = arith.constant 0 : index
    %1 = vector.load %arg2[%c0_1, %c0_2] : memref<64x128xbf16, #tpu.memory_space<vmem>>, vector<64x128xbf16>
    %c0_3 = arith.constant 0 : index
    %c0_4 = arith.constant 0 : index
    %2 = vector.load %arg3[%c0_3, %c0_4] : memref<1x128xf32, #tpu.memory_space<vmem>>, vector<1x128xf32>
    %3 = arith.truncf %0 : vector<64x64xf32> to vector<64x64xbf16>
    %cst = arith.constant dense<0.000000e+00> : vector<64x128xf32>
    %4 = tpu.matmul %3, %1, %cst {dimension_numbers = #tpu.dot_dimension_numbers<[1], [0], [0], [1], [0, 0, 1, 1], [], []>} : vector<64x64xbf16>, vector<64x128xbf16>, vector<64x128xf32> -> vector<64x128xf32>
    %5 = vector.broadcast %2 : vector<1x128xf32> to vector<64x128xf32>
    %6 = arith.addf %4, %5 : vector<64x128xf32>
    %cst_5 = arith.constant 0.000000e+00 : f32
    %7 = vector.broadcast %cst_5 : f32 to vector<64x128xf32>
    %8 = arith.maximumf %6, %7 : vector<64x128xf32>
    %c0_6 = arith.constant 0 : index
    %c0_7 = arith.constant 0 : index
    %9 = vector.load %arg4[%c0_6, %c0_7] : memref<128x128xbf16, #tpu.memory_space<vmem>>, vector<128x128xbf16>
    %c0_8 = arith.constant 0 : index
    %c0_9 = arith.constant 0 : index
    %10 = vector.load %arg5[%c0_8, %c0_9] : memref<1x128xf32, #tpu.memory_space<vmem>>, vector<1x128xf32>
    %11 = arith.truncf %8 : vector<64x128xf32> to vector<64x128xbf16>
    %cst_10 = arith.constant dense<0.000000e+00> : vector<64x128xf32>
    %12 = tpu.matmul %11, %9, %cst_10 {dimension_numbers = #tpu.dot_dimension_numbers<[1], [0], [0], [1], [0, 0, 1, 1], [], []>} : vector<64x128xbf16>, vector<128x128xbf16>, vector<64x128xf32> -> vector<64x128xf32>
    %13 = vector.broadcast %10 : vector<1x128xf32> to vector<64x128xf32>
    %14 = arith.addf %12, %13 : vector<64x128xf32>
    %cst_11 = arith.constant 0.000000e+00 : f32
    %15 = vector.broadcast %cst_11 : f32 to vector<64x128xf32>
    %16 = arith.maximumf %14, %15 : vector<64x128xf32>
    %c0_12 = arith.constant 0 : index
    %c0_13 = arith.constant 0 : index
    %17 = vector.load %arg6[%c0_12, %c0_13] : memref<128x128xbf16, #tpu.memory_space<vmem>>, vector<128x128xbf16>
    %c0_14 = arith.constant 0 : index
    %c0_15 = arith.constant 0 : index
    %18 = vector.load %arg7[%c0_14, %c0_15] : memref<1x128xf32, #tpu.memory_space<vmem>>, vector<1x128xf32>
    %19 = arith.truncf %16 : vector<64x128xf32> to vector<64x128xbf16>
    %cst_16 = arith.constant dense<0.000000e+00> : vector<64x128xf32>
    %20 = tpu.matmul %19, %17, %cst_16 {dimension_numbers = #tpu.dot_dimension_numbers<[1], [0], [0], [1], [0, 0, 1, 1], [], []>} : vector<64x128xbf16>, vector<128x128xbf16>, vector<64x128xf32> -> vector<64x128xf32>
    %21 = vector.broadcast %18 : vector<1x128xf32> to vector<64x128xf32>
    %22 = arith.addf %20, %21 : vector<64x128xf32>
    %cst_17 = arith.constant 0.000000e+00 : f32
    %23 = vector.broadcast %cst_17 : f32 to vector<64x128xf32>
    %24 = arith.maximumf %22, %23 : vector<64x128xf32>
    %c0_18 = arith.constant 0 : index
    %c0_19 = arith.constant 0 : index
    %25 = vector.load %arg8[%c0_18, %c0_19] : memref<128x128xbf16, #tpu.memory_space<vmem>>, vector<128x128xbf16>
    %c0_20 = arith.constant 0 : index
    %c0_21 = arith.constant 0 : index
    %26 = vector.load %arg9[%c0_20, %c0_21] : memref<1x128xf32, #tpu.memory_space<vmem>>, vector<1x128xf32>
    %27 = arith.truncf %24 : vector<64x128xf32> to vector<64x128xbf16>
    %cst_22 = arith.constant dense<0.000000e+00> : vector<64x128xf32>
    %28 = tpu.matmul %27, %25, %cst_22 {dimension_numbers = #tpu.dot_dimension_numbers<[1], [0], [0], [1], [0, 0, 1, 1], [], []>} : vector<64x128xbf16>, vector<128x128xbf16>, vector<64x128xf32> -> vector<64x128xf32>
    %29 = vector.broadcast %26 : vector<1x128xf32> to vector<64x128xf32>
    %30 = arith.addf %28, %29 : vector<64x128xf32>
    %cst_23 = arith.constant 0.000000e+00 : f32
    %31 = vector.broadcast %cst_23 : f32 to vector<64x128xf32>
    %32 = arith.maximumf %30, %31 : vector<64x128xf32>
    %c0_24 = arith.constant 0 : index
    %c0_25 = arith.constant 0 : index
    %33 = vector.load %arg10[%c0_24, %c0_25] : memref<128x128xbf16, #tpu.memory_space<vmem>>, vector<128x128xbf16>
    %c0_26 = arith.constant 0 : index
    %c0_27 = arith.constant 0 : index
    %34 = vector.load %arg11[%c0_26, %c0_27] : memref<64x128xbf16, #tpu.memory_space<vmem>>, vector<64x128xbf16>
    %c0_28 = arith.constant 0 : index
    %c0_29 = arith.constant 0 : index
    %35 = vector.load %arg12[%c0_28, %c0_29] : memref<1x128xf32, #tpu.memory_space<vmem>>, vector<1x128xf32>
    %36 = arith.truncf %32 : vector<64x128xf32> to vector<64x128xbf16>
    %cst_30 = arith.constant dense<0.000000e+00> : vector<64x128xf32>
    %37 = tpu.matmul %36, %33, %cst_30 {dimension_numbers = #tpu.dot_dimension_numbers<[1], [0], [0], [1], [0, 0, 1, 1], [], []>} : vector<64x128xbf16>, vector<128x128xbf16>, vector<64x128xf32> -> vector<64x128xf32>
    %38 = arith.truncf %0 : vector<64x64xf32> to vector<64x64xbf16>
    %cst_31 = arith.constant dense<0.000000e+00> : vector<64x128xf32>
    %39 = tpu.matmul %38, %34, %cst_31 {dimension_numbers = #tpu.dot_dimension_numbers<[1], [0], [0], [1], [0, 0, 1, 1], [], []>} : vector<64x64xbf16>, vector<64x128xbf16>, vector<64x128xf32> -> vector<64x128xf32>
    %40 = arith.addf %37, %39 : vector<64x128xf32>
    %41 = vector.broadcast %35 : vector<1x128xf32> to vector<64x128xf32>
    %42 = arith.addf %40, %41 : vector<64x128xf32>
    %cst_32 = arith.constant 0.000000e+00 : f32
    %43 = vector.broadcast %cst_32 : f32 to vector<64x128xf32>
    %44 = arith.maximumf %42, %43 : vector<64x128xf32>
    %c0_33 = arith.constant 0 : index
    %c0_34 = arith.constant 0 : index
    %45 = vector.load %arg13[%c0_33, %c0_34] : memref<128x128xbf16, #tpu.memory_space<vmem>>, vector<128x128xbf16>
    %c0_35 = arith.constant 0 : index
    %c0_36 = arith.constant 0 : index
    %46 = vector.load %arg14[%c0_35, %c0_36] : memref<1x128xf32, #tpu.memory_space<vmem>>, vector<1x128xf32>
    %47 = arith.truncf %44 : vector<64x128xf32> to vector<64x128xbf16>
    %cst_37 = arith.constant dense<0.000000e+00> : vector<64x128xf32>
    %48 = tpu.matmul %47, %45, %cst_37 {dimension_numbers = #tpu.dot_dimension_numbers<[1], [0], [0], [1], [0, 0, 1, 1], [], []>} : vector<64x128xbf16>, vector<128x128xbf16>, vector<64x128xf32> -> vector<64x128xf32>
    %49 = vector.broadcast %46 : vector<1x128xf32> to vector<64x128xf32>
    %50 = arith.addf %48, %49 : vector<64x128xf32>
    %cst_38 = arith.constant 0.000000e+00 : f32
    %51 = vector.broadcast %cst_38 : f32 to vector<64x128xf32>
    %52 = arith.maximumf %50, %51 : vector<64x128xf32>
    %c0_39 = arith.constant 0 : index
    %c0_40 = arith.constant 0 : index
    %53 = vector.load %arg15[%c0_39, %c0_40] : memref<128x128xbf16, #tpu.memory_space<vmem>>, vector<128x128xbf16>
    %c0_41 = arith.constant 0 : index
    %c0_42 = arith.constant 0 : index
    %54 = vector.load %arg16[%c0_41, %c0_42] : memref<1x128xf32, #tpu.memory_space<vmem>>, vector<1x128xf32>
    %55 = arith.truncf %52 : vector<64x128xf32> to vector<64x128xbf16>
    %cst_43 = arith.constant dense<0.000000e+00> : vector<64x128xf32>
    %56 = tpu.matmul %55, %53, %cst_43 {dimension_numbers = #tpu.dot_dimension_numbers<[1], [0], [0], [1], [0, 0, 1, 1], [], []>} : vector<64x128xbf16>, vector<128x128xbf16>, vector<64x128xf32> -> vector<64x128xf32>
    %57 = vector.broadcast %54 : vector<1x128xf32> to vector<64x128xf32>
    %58 = arith.addf %56, %57 : vector<64x128xf32>
    %cst_44 = arith.constant 0.000000e+00 : f32
    %59 = vector.broadcast %cst_44 : f32 to vector<64x128xf32>
    %60 = arith.maximumf %58, %59 : vector<64x128xf32>
    %c0_45 = arith.constant 0 : index
    %c0_46 = arith.constant 0 : index
    %61 = vector.load %arg17[%c0_45, %c0_46] : memref<128x4xbf16, #tpu.memory_space<vmem>>, vector<128x4xbf16>
    %c0_47 = arith.constant 0 : index
    %c0_48 = arith.constant 0 : index
    %62 = vector.load %arg18[%c0_47, %c0_48] : memref<1x4xf32, #tpu.memory_space<vmem>>, vector<1x4xf32>
    %63 = arith.truncf %60 : vector<64x128xf32> to vector<64x128xbf16>
    %cst_49 = arith.constant dense<0.000000e+00> : vector<64x4xf32>
    %64 = tpu.matmul %63, %61, %cst_49 {dimension_numbers = #tpu.dot_dimension_numbers<[1], [0], [0], [1], [0, 0, 1, 1], [], []>} : vector<64x128xbf16>, vector<128x4xbf16>, vector<64x4xf32> -> vector<64x4xf32>
    %65 = vector.broadcast %62 : vector<1x4xf32> to vector<64x4xf32>
    %66 = arith.addf %64, %65 : vector<64x4xf32>
    %c0_50 = arith.constant 0 : index
    %c0_51 = arith.constant 0 : index
    %67 = vector.load %arg19[%c0_50, %c0_51] : memref<64x4xf32, #tpu.memory_space<vmem>>, vector<64x4xf32>
    tpu.vector_store %arg19[%c0_50, %c0_51], %66 {strides = array<i32>} : memref<64x4xf32, #tpu.memory_space<vmem>>, vector<64x4xf32>,
    return
  }
  func.func @transform_0(%arg0: i32) -> (i32, i32) {
    %c0_i32 = arith.constant 0 : i32
    %c0_i32_0 = arith.constant 0 : i32
    return %arg0, %c0_i32 : i32, i32
  }
  func.func @transform_1(%arg0: i32) -> (i32, i32) {
    %c0_i32 = arith.constant 0 : i32
    %c0_i32_0 = arith.constant 0 : i32
    %c0_i32_1 = arith.constant 0 : i32
    return %c0_i32, %c0_i32_0 : i32, i32
  }
  func.func @transform_2(%arg0: i32) -> (i32, i32) {
    %c0_i32 = arith.constant 0 : i32
    %c0_i32_0 = arith.constant 0 : i32
    %c0_i32_1 = arith.constant 0 : i32
    return %c0_i32, %c0_i32_0 : i32, i32
  }
  func.func @transform_3(%arg0: i32) -> (i32, i32) {
    %c0_i32 = arith.constant 0 : i32
    %c0_i32_0 = arith.constant 0 : i32
    %c0_i32_1 = arith.constant 0 : i32
    return %c0_i32, %c0_i32_0 : i32, i32
  }
  func.func @transform_4(%arg0: i32) -> (i32, i32) {
    %c0_i32 = arith.constant 0 : i32
    %c0_i32_0 = arith.constant 0 : i32
    %c0_i32_1 = arith.constant 0 : i32
    return %c0_i32, %c0_i32_0 : i32, i32
  }
  func.func @transform_5(%arg0: i32) -> (i32, i32) {
    %c0_i32 = arith.constant 0 : i32
    %c0_i32_0 = arith.constant 0 : i32
    %c0_i32_1 = arith.constant 0 : i32
    return %c0_i32, %c0_i32_0 : i32, i32
  }
  func.func @transform_6(%arg0: i32) -> (i32, i32) {
    %c0_i32 = arith.constant 0 : i32
    %c0_i32_0 = arith.constant 0 : i32
    %c0_i32_1 = arith.constant 0 : i32
    return %c0_i32, %c0_i32_0 : i32, i32
  }
  func.func @transform_7(%arg0: i32) -> (i32, i32) {
    %c0_i32 = arith.constant 0 : i32
    %c0_i32_0 = arith.constant 0 : i32
    %c0_i32_1 = arith.constant 0 : i32
    return %c0_i32, %c0_i32_0 : i32, i32
  }
  func.func @transform_8(%arg0: i32) -> (i32, i32) {
    %c0_i32 = arith.constant 0 : i32
    %c0_i32_0 = arith.constant 0 : i32
    %c0_i32_1 = arith.constant 0 : i32
    return %c0_i32, %c0_i32_0 : i32, i32
  }
  func.func @transform_9(%arg0: i32) -> (i32, i32) {
    %c0_i32 = arith.constant 0 : i32
    %c0_i32_0 = arith.constant 0 : i32
    %c0_i32_1 = arith.constant 0 : i32
    return %c0_i32, %c0_i32_0 : i32, i32
  }
  func.func @transform_10(%arg0: i32) -> (i32, i32) {
    %c0_i32 = arith.constant 0 : i32
    %c0_i32_0 = arith.constant 0 : i32
    %c0_i32_1 = arith.constant 0 : i32
    return %c0_i32, %c0_i32_0 : i32, i32
  }
  func.func @transform_11(%arg0: i32) -> (i32, i32) {
    %c0_i32 = arith.constant 0 : i32
    %c0_i32_0 = arith.constant 0 : i32
    %c0_i32_1 = arith.constant 0 : i32
    return %c0_i32, %c0_i32_0 : i32, i32
  }
  func.func @transform_12(%arg0: i32) -> (i32, i32) {
    %c0_i32 = arith.constant 0 : i32
    %c0_i32_0 = arith.constant 0 : i32
    %c0_i32_1 = arith.constant 0 : i32
    return %c0_i32, %c0_i32_0 : i32, i32
  }
  func.func @transform_13(%arg0: i32) -> (i32, i32) {
    %c0_i32 = arith.constant 0 : i32
    %c0_i32_0 = arith.constant 0 : i32
    %c0_i32_1 = arith.constant 0 : i32
    return %c0_i32, %c0_i32_0 : i32, i32
  }
  func.func @transform_14(%arg0: i32) -> (i32, i32) {
    %c0_i32 = arith.constant 0 : i32
    %c0_i32_0 = arith.constant 0 : i32
    %c0_i32_1 = arith.constant 0 : i32
    return %c0_i32, %c0_i32_0 : i32, i32
  }
  func.func @transform_15(%arg0: i32) -> (i32, i32) {
    %c0_i32 = arith.constant 0 : i32
    %c0_i32_0 = arith.constant 0 : i32
    %c0_i32_1 = arith.constant 0 : i32
    return %c0_i32, %c0_i32_0 : i32, i32
  }
  func.func @transform_16(%arg0: i32) -> (i32, i32) {
    %c0_i32 = arith.constant 0 : i32
    %c0_i32_0 = arith.constant 0 : i32
    %c0_i32_1 = arith.constant 0 : i32
    return %c0_i32, %c0_i32_0 : i32, i32
  }
  func.func @transform_17(%arg0: i32) -> (i32, i32) {
    %c0_i32 = arith.constant 0 : i32
    %c0_i32_0 = arith.constant 0 : i32
    %c0_i32_1 = arith.constant 0 : i32
    return %c0_i32, %c0_i32_0 : i32, i32
  }
  func.func @transform_18(%arg0: i32) -> (i32, i32) {
    %c0_i32 = arith.constant 0 : i32
    %c0_i32_0 = arith.constant 0 : i32
    return %arg0, %c0_i32 : i32, i32
  }
}

</mosaic_0001>

<llo_original>
// kernel: tpu_custom_call.1
$region0: #{tpu_custom_call.1}
  #allocation0 [shape = 'u32[]', space=smem, size = 0x4, offset = 0x4, fixed_abs, tag = 'smem constant byte address 0x4 - core index']
  #allocation1 [shape = 'u32[144,128]{1,0:T(1,128)}', space=vmem, size = 0x12000, scoped, tag = 'internal scratch']
  %s0 = inlined_call_operand.vmem [shape: f32[128,64], index: 0, kind: input, shape index: {}]
  %s1 = inlined_call_operand.hbm [shape: bf16[64,128], index: 1, kind: input, shape index: {}]
  %s2 = inlined_call_operand.hbm [shape: f32[1,128], index: 2, kind: input, shape index: {}]
  %s3 = inlined_call_operand.vmem [shape: bf16[128,128], index: 3, kind: input, shape index: {}]
  %s4 = inlined_call_operand.hbm [shape: f32[1,128], index: 4, kind: input, shape index: {}]
  %s5 = inlined_call_operand.vmem [shape: bf16[128,128], index: 5, kind: input, shape index: {}]
  %s6 = inlined_call_operand.hbm [shape: f32[1,128], index: 6, kind: input, shape index: {}]
  %s7 = inlined_call_operand.vmem [shape: bf16[128,128], index: 7, kind: input, shape index: {}]
  %s8 = inlined_call_operand.hbm [shape: f32[1,128], index: 8, kind: input, shape index: {}]
  %s9 = inlined_call_operand.hbm [shape: bf16[128,128], index: 9, kind: input, shape index: {}]
  %s10 = inlined_call_operand.vmem [shape: bf16[64,128], index: 10, kind: input, shape index: {}]
  %s11 = inlined_call_operand.vmem [shape: f32[1,128], index: 11, kind: input, shape index: {}]
  %s12 = inlined_call_operand.hbm [shape: bf16[128,128], index: 12, kind: input, shape index: {}]
  %s13 = inlined_call_operand.vmem [shape: f32[1,128], index: 13, kind: input, shape index: {}]
  %s14 = inlined_call_operand.hbm [shape: bf16[128,128], index: 14, kind: input, shape index: {}]
  %s15 = inlined_call_operand.vmem [shape: f32[1,128], index: 15, kind: input, shape index: {}]
  %s16 = inlined_call_operand.vmem [shape: bf16[128,4], index: 16, kind: input, shape index: {}]
  %s17 = inlined_call_operand.vmem [shape: f32[1,4], index: 17, kind: input, shape index: {}]
  %s18 = inlined_call_operand.vmem [shape: f32[128,4], index: 18, kind: output, shape index: {}]
  %s19 = sld [smem:[#allocation0]]
  $region137: #{tpu_custom_call.1} parent=0
    _
  %s21 = ssub.s32 1, %s19
  %s22 = scalar_select 0, %s21, %s19
  $region1: #{tpu_custom_call.1} parent=0
    #allocation2 [shape = 'u8[16384]{0}', space=vmem, size = 0x4000, scoped, tag = 'input window, operand 1, single buffered']
    #allocation3 [shape = 's32[2]{0}', space=sflag, size = 0x8, scoped, tag = 'scoped memory for tpu_custom_call.1']
    #allocation4 [shape = 'u8[512]{0}', space=vmem, size = 0x400, scoped, tag = 'input window, operand 2, single buffered']
    #allocation5 [shape = 's32[1]{0}', space=sflag, size = 0x4, scoped, tag = 'scoped memory for tpu_custom_call.1']
    #allocation6 [shape = 'u8[512]{0}', space=vmem, size = 0x400, scoped, tag = 'input window, operand 4, single buffered']
    #allocation7 [shape = 'u8[512]{0}', space=vmem, size = 0x400, scoped, tag = 'input window, operand 6, single buffered']
    #allocation8 [shape = 's32[1]{0}', space=sflag, size = 0x4, scoped, tag = 'scoped memory for tpu_custom_call.1']
    #allocation9 [shape = 'u8[512]{0}', space=vmem, size = 0x400, scoped, tag = 'input window, operand 8, single buffered']
    #allocation10 [shape = 'u8[32768]{0}', space=vmem, size = 0x8000, scoped, tag = 'input window, operand 9, single buffered']
    #allocation11 [shape = 's32[1]{0}', space=sflag, size = 0x4, scoped, tag = 'scoped memory for tpu_custom_call.1']
    #allocation12 [shape = 'u8[32768]{0}', space=vmem, size = 0x8000, scoped, tag = 'input window, operand 12, single buffered']
    #allocation13 [shape = 'u8[32768]{0}', space=vmem, size = 0x8000, scoped, tag = 'input window, operand 14, single buffered']
    #allocation14 [shape = 's32[1]{0}', space=sflag, size = 0x4, scoped, tag = 'scoped memory for tpu_custom_call.1']
    %23 = vsyncpa [#allocation3], 0
    %24 = vsyncpa [#allocation5], 0
    %25 = vsyncpa [#allocation8], 0
    %26 = vsyncpa [#allocation11], 0
    %27 = vsyncpa [#allocation14], 0
    loop: start=0, step=1, limit=4
    $region2: #{tpu_custom_call.1} parent=1 // loop_pre_header
      _
    $region3: #{tpu_custom_call.1} parent=1 // loop_header
      %s29 = sphi 0, %s33
      %p30 = scmp.ge.s32.totalorder %s29, 4
      %s39 = sphi 0, %s41
      %s42 = sphi 0, %s39
      %s43 = sphi 0, %s42
      %s59 = sphi 0, %s43
      %s63 = sphi 0, %s63
      %s65 = sphi 0, %s63
      %s66 = sphi 0, %s65
      %s80 = sphi 0, %s66
      %s84 = sphi 0, %s84
      %s86 = sphi 0, %s84
      %s87 = sphi 0, %s86
      %s101 = sphi 0, %s87
      %s105 = sphi 0, %s105
      %s107 = sphi 0, %s105
      %s108 = sphi 0, %s107
      %s122 = sphi 0, %s108
      %s126 = sphi 0, %s126
      %s128 = sphi 0, %s126
      %s129 = sphi 0, %s128
      %s143 = sphi 0, %s129
      %s147 = sphi 0, %s147
      %s149 = sphi 0, %s147
      %s150 = sphi 0, %s149
      %s164 = sphi 0, %s150
      %s168 = sphi 0, %s168
      %s170 = sphi 0, %s168
      %s171 = sphi 0, %s170
      %s185 = sphi 0, %s171
      %s189 = sphi 0, %s189
      %s191 = sphi 0, %s189
      %s192 = sphi 0, %s191
      %s206 = sphi 0, %s192
      %s210 = sphi 0, %s210
      %s212 = sphi 0, %s210
      %s213 = sphi 0, %s212
      %s227 = sphi 0, %s213
      %s231 = sphi 0, %s231
      %s233 = sphi 0, %s231
      %s234 = sphi 0, %s233
      %s248 = sphi 0, %s234
      %s252 = sphi 0, %s252
      %s254 = sphi 0, %s252
      %s255 = sphi 0, %s254
      %s269 = sphi 0, %s255
      %s273 = sphi 0, %s273
      %s275 = sphi 0, %s273
      %s276 = sphi 0, %s275
      %s290 = sphi 0, %s276
      %s294 = sphi 0, %s294
      %s296 = sphi 0, %s294
      %s297 = sphi 0, %s296
      %s311 = sphi 0, %s297
      %s315 = sphi 0, %s315
      %s317 = sphi 0, %s315
      %s318 = sphi 0, %s317
      %s332 = sphi 0, %s318
      %s336 = sphi 0, %s336
      %s338 = sphi 0, %s336
      %s339 = sphi 0, %s338
      %s353 = sphi 0, %s339
      %s357 = sphi 0, %s357
      %s359 = sphi 0, %s357
      %s360 = sphi 0, %s359
      %s374 = sphi 0, %s360
      %s378 = sphi 0, %s378
      %s380 = sphi 0, %s378
      %s381 = sphi 0, %s380
      %s395 = sphi 0, %s381
      %s399 = sphi 0, %s399
      %s401 = sphi 0, %s399
      %s402 = sphi 0, %s401
      %s416 = sphi 0, %s402
      %s422 = sphi 0, %s424
      %s425 = sphi 0, %s422
      %s426 = sphi 0, %s425
      %s442 = sphi 0, %s426
    $region4: #{tpu_custom_call.1} parent=1 // loop_header_branch
      %32 = sbr.rel (%p30) target = $region8
    $region5: #{tpu_custom_call.1} parent=1 // loop_body
      %s34 = ssub.s32 %s29, 1
      %s35 = ssub.s32 %s29, 2
      %s36 = sadd.s32 %s29, 1
      %s37 = ssub.s32 %s29, %s36
      %p38 = scmp.eq.s32.totalorder %s37, 0
      %s40 = sadd.s32 %s39, 1
      %s41 = scalar_select %p38, %s39, %s40
      %p44 = pneg %p38
      %p45 = scmp.eq.s32.totalorder %s29, 1
      %p46 = por %p44, %p45
      %p47 = scmp.ne.s32.totalorder %s39, %s42
      %p48 = scmp.eq.s32.totalorder %s29, 0
      %p49 = por %p47, %p48
      %p50 = scmp.ne.s32.totalorder %s39, %s42
      %p51 = scmp.eq.s32.totalorder %s34, 1
      %p52 = por %p50, %p51
      %p53 = scmp.ne.s32.totalorder %s42, %s43
      %p54 = scmp.eq.s32.totalorder %s34, 0
      %p55 = por %p53, %p54
      %p56 = scmp.ne.s32.totalorder %s42, %s43
      %p57 = scmp.eq.s32.totalorder %s35, 1
      %p58 = por %p56, %p57
      %p60 = scmp.ne.s32.totalorder %s43, %s59
      %p61 = scmp.eq.s32.totalorder %s35, 0
      %p62 = por %p60, %p61
      %s64 = sadd.s32 %s63, 1
      %p67 = scmp.eq.s32.totalorder %s29, 1
      %p68 = scmp.ne.s32.totalorder %s63, %s65
      %p69 = scmp.eq.s32.totalorder %s29, 0
      %p70 = por %p68, %p69
      %p71 = scmp.ne.s32.totalorder %s63, %s65
      %p72 = scmp.eq.s32.totalorder %s34, 1
      %p73 = por %p71, %p72
      %p74 = scmp.ne.s32.totalorder %s65, %s66
      %p75 = scmp.eq.s32.totalorder %s34, 0
      %p76 = por %p74, %p75
      %p77 = scmp.ne.s32.totalorder %s65, %s66
      %p78 = scmp.eq.s32.totalorder %s35, 1
      %p79 = por %p77, %p78
      %p81 = scmp.ne.s32.totalorder %s66, %s80
      %p82 = scmp.eq.s32.totalorder %s35, 0
      %p83 = por %p81, %p82
      %s85 = sadd.s32 %s84, 1
      %p88 = scmp.eq.s32.totalorder %s29, 1
      %p89 = scmp.ne.s32.totalorder %s84, %s86
      %p90 = scmp.eq.s32.totalorder %s29, 0
      %p91 = por %p89, %p90
      %p92 = scmp.ne.s32.totalorder %s84, %s86
      %p93 = scmp.eq.s32.totalorder %s34, 1
      %p94 = por %p92, %p93
      %p95 = scmp.ne.s32.totalorder %s86, %s87
      %p96 = scmp.eq.s32.totalorder %s34, 0
      %p97 = por %p95, %p96
      %p98 = scmp.ne.s32.totalorder %s86, %s87
      %p99 = scmp.eq.s32.totalorder %s35, 1
      %p100 = por %p98, %p99
      %p102 = scmp.ne.s32.totalorder %s87, %s101
      %p103 = scmp.eq.s32.totalorder %s35, 0
      %p104 = por %p102, %p103
      %s106 = sadd.s32 %s105, 1
      %p109 = scmp.eq.s32.totalorder %s29, 1
      %p110 = scmp.ne.s32.totalorder %s105, %s107
      %p111 = scmp.eq.s32.totalorder %s29, 0
      %p112 = por %p110, %p111
      %p113 = scmp.ne.s32.totalorder %s105, %s107
      %p114 = scmp.eq.s32.totalorder %s34, 1
      %p115 = por %p113, %p114
      %p116 = scmp.ne.s32.totalorder %s107, %s108
      %p117 = scmp.eq.s32.totalorder %s34, 0
      %p118 = por %p116, %p117
      %p119 = scmp.ne.s32.totalorder %s107, %s108
      %p120 = scmp.eq.s32.totalorder %s35, 1
      %p121 = por %p119, %p120
      %p123 = scmp.ne.s32.totalorder %s108, %s122
      %p124 = scmp.eq.s32.totalorder %s35, 0
      %p125 = por %p123, %p124
      %s127 = sadd.s32 %s126, 1
      %p130 = scmp.eq.s32.totalorder %s29, 1
      %p131 = scmp.ne.s32.totalorder %s126, %s128
      %p132 = scmp.eq.s32.totalorder %s29, 0
      %p133 = por %p131, %p132
      %p134 = scmp.ne.s32.totalorder %s126, %s128
      %p135 = scmp.eq.s32.totalorder %s34, 1
      %p136 = por %p134, %p135
      %p137 = scmp.ne.s32.totalorder %s128, %s129
      %p138 = scmp.eq.s32.totalorder %s34, 0
      %p139 = por %p137, %p138
      %p140 = scmp.ne.s32.totalorder %s128, %s129
      %p141 = scmp.eq.s32.totalorder %s35, 1
      %p142 = por %p140, %p141
      %p144 = scmp.ne.s32.totalorder %s129, %s143
      %p145 = scmp.eq.s32.totalorder %s35, 0
      %p146 = por %p144, %p145
      %s148 = sadd.s32 %s147, 1
      %p151 = scmp.eq.s32.totalorder %s29, 1
      %p152 = scmp.ne.s32.totalorder %s147, %s149
      %p153 = scmp.eq.s32.totalorder %s29, 0
      %p154 = por %p152, %p153
      %p155 = scmp.ne.s32.totalorder %s147, %s149
      %p156 = scmp.eq.s32.totalorder %s34, 1
      %p157 = por %p155, %p156
      %p158 = scmp.ne.s32.totalorder %s149, %s150
      %p159 = scmp.eq.s32.totalorder %s34, 0
      %p160 = por %p158, %p159
      %p161 = scmp.ne.s32.totalorder %s149, %s150
      %p162 = scmp.eq.s32.totalorder %s35, 1
      %p163 = por %p161, %p162
      %p165 = scmp.ne.s32.totalorder %s150, %s164
      %p166 = scmp.eq.s32.totalorder %s35, 0
      %p167 = por %p165, %p166
      %s169 = sadd.s32 %s168, 1
      %p172 = scmp.eq.s32.totalorder %s29, 1
      %p173 = scmp.ne.s32.totalorder %s168, %s170
      %p174 = scmp.eq.s32.totalorder %s29, 0
      %p175 = por %p173, %p174
      %p176 = scmp.ne.s32.totalorder %s168, %s170
      %p177 = scmp.eq.s32.totalorder %s34, 1
      %p178 = por %p176, %p177
      %p179 = scmp.ne.s32.totalorder %s170, %s171
      %p180 = scmp.eq.s32.totalorder %s34, 0
      %p181 = por %p179, %p180
      %p182 = scmp.ne.s32.totalorder %s170, %s171
      %p183 = scmp.eq.s32.totalorder %s35, 1
      %p184 = por %p182, %p183
      %p186 = scmp.ne.s32.totalorder %s171, %s185
      %p187 = scmp.eq.s32.totalorder %s35, 0
      %p188 = por %p186, %p187
      %s190 = sadd.s32 %s189, 1
      %p193 = scmp.eq.s32.totalorder %s29, 1
      %p194 = scmp.ne.s32.totalorder %s189, %s191
      %p195 = scmp.eq.s32.totalorder %s29, 0
      %p196 = por %p194, %p195
      %p197 = scmp.ne.s32.totalorder %s189, %s191
      %p198 = scmp.eq.s32.totalorder %s34, 1
      %p199 = por %p197, %p198
      %p200 = scmp.ne.s32.totalorder %s191, %s192
      %p201 = scmp.eq.s32.totalorder %s34, 0
      %p202 = por %p200, %p201
      %p203 = scmp.ne.s32.totalorder %s191, %s192
      %p204 = scmp.eq.s32.totalorder %s35, 1
      %p205 = por %p203, %p204
      %p207 = scmp.ne.s32.totalorder %s192, %s206
      %p208 = scmp.eq.s32.totalorder %s35, 0
      %p209 = por %p207, %p208
      %s211 = sadd.s32 %s210, 1
      %p214 = scmp.eq.s32.totalorder %s29, 1
      %p215 = scmp.ne.s32.totalorder %s210, %s212
      %p216 = scmp.eq.s32.totalorder %s29, 0
      %p217 = por %p215, %p216
      %p218 = scmp.ne.s32.totalorder %s210, %s212
      %p219 = scmp.eq.s32.totalorder %s34, 1
      %p220 = por %p218, %p219
      %p221 = scmp.ne.s32.totalorder %s212, %s213
      %p222 = scmp.eq.s32.totalorder %s34, 0
      %p223 = por %p221, %p222
      %p224 = scmp.ne.s32.totalorder %s212, %s213
      %p225 = scmp.eq.s32.totalorder %s35, 1
      %p226 = por %p224, %p225
      %p228 = scmp.ne.s32.totalorder %s213, %s227
      %p229 = scmp.eq.s32.totalorder %s35, 0
      %p230 = por %p228, %p229
      %s232 = sadd.s32 %s231, 1
      %p235 = scmp.eq.s32.totalorder %s29, 1
      %p236 = scmp.ne.s32.totalorder %s231, %s233
      %p237 = scmp.eq.s32.totalorder %s29, 0
      %p238 = por %p236, %p237
      %p239 = scmp.ne.s32.totalorder %s231, %s233
      %p240 = scmp.eq.s32.totalorder %s34, 1
      %p241 = por %p239, %p240
      %p242 = scmp.ne.s32.totalorder %s233, %s234
      %p243 = scmp.eq.s32.totalorder %s34, 0
      %p244 = por %p242, %p243
      %p245 = scmp.ne.s32.totalorder %s233, %s234
      %p246 = scmp.eq.s32.totalorder %s35, 1
      %p247 = por %p245, %p246
      %p249 = scmp.ne.s32.totalorder %s234, %s248
      %p250 = scmp.eq.s32.totalorder %s35, 0
      %p251 = por %p249, %p250
      %s253 = sadd.s32 %s252, 1
      %p256 = scmp.eq.s32.totalorder %s29, 1
      %p257 = scmp.ne.s32.totalorder %s252, %s254
      %p258 = scmp.eq.s32.totalorder %s29, 0
      %p259 = por %p257, %p258
      %p260 = scmp.ne.s32.totalorder %s252, %s254
      %p261 = scmp.eq.s32.totalorder %s34, 1
      %p262 = por %p260, %p261
      %p263 = scmp.ne.s32.totalorder %s254, %s255
      %p264 = scmp.eq.s32.totalorder %s34, 0
      %p265 = por %p263, %p264
      %p266 = scmp.ne.s32.totalorder %s254, %s255
      %p267 = scmp.eq.s32.totalorder %s35, 1
      %p268 = por %p266, %p267
      %p270 = scmp.ne.s32.totalorder %s255, %s269
      %p271 = scmp.eq.s32.totalorder %s35, 0
      %p272 = por %p270, %p271
      %s274 = sadd.s32 %s273, 1
      %p277 = scmp.eq.s32.totalorder %s29, 1
      %p278 = scmp.ne.s32.totalorder %s273, %s275
      %p279 = scmp.eq.s32.totalorder %s29, 0
      %p280 = por %p278, %p279
      %p281 = scmp.ne.s32.totalorder %s273, %s275
      %p282 = scmp.eq.s32.totalorder %s34, 1
      %p283 = por %p281, %p282
      %p284 = scmp.ne.s32.totalorder %s275, %s276
      %p285 = scmp.eq.s32.totalorder %s34, 0
      %p286 = por %p284, %p285
      %p287 = scmp.ne.s32.totalorder %s275, %s276
      %p288 = scmp.eq.s32.totalorder %s35, 1
      %p289 = por %p287, %p288
      %p291 = scmp.ne.s32.totalorder %s276, %s290
      %p292 = scmp.eq.s32.totalorder %s35, 0
      %p293 = por %p291, %p292
      %s295 = sadd.s32 %s294, 1
      %p298 = scmp.eq.s32.totalorder %s29, 1
      %p299 = scmp.ne.s32.totalorder %s294, %s296
      %p300 = scmp.eq.s32.totalorder %s29, 0
      %p301 = por %p299, %p300
      %p302 = scmp.ne.s32.totalorder %s294, %s296
      %p303 = scmp.eq.s32.totalorder %s34, 1
      %p304 = por %p302, %p303
      %p305 = scmp.ne.s32.totalorder %s296, %s297
      %p306 = scmp.eq.s32.totalorder %s34, 0
      %p307 = por %p305, %p306
      %p308 = scmp.ne.s32.totalorder %s296, %s297
      %p309 = scmp.eq.s32.totalorder %s35, 1
      %p310 = por %p308, %p309
      %p312 = scmp.ne.s32.totalorder %s297, %s311
      %p313 = scmp.eq.s32.totalorder %s35, 0
      %p314 = por %p312, %p313
      %s316 = sadd.s32 %s315, 1
      %p319 = scmp.eq.s32.totalorder %s29, 1
      %p320 = scmp.ne.s32.totalorder %s315, %s317
      %p321 = scmp.eq.s32.totalorder %s29, 0
      %p322 = por %p320, %p321
      %p323 = scmp.ne.s32.totalorder %s315, %s317
      %p324 = scmp.eq.s32.totalorder %s34, 1
      %p325 = por %p323, %p324
      %p326 = scmp.ne.s32.totalorder %s317, %s318
      %p327 = scmp.eq.s32.totalorder %s34, 0
      %p328 = por %p326, %p327
      %p329 = scmp.ne.s32.totalorder %s317, %s318
      %p330 = scmp.eq.s32.totalorder %s35, 1
      %p331 = por %p329, %p330
      %p333 = scmp.ne.s32.totalorder %s318, %s332
      %p334 = scmp.eq.s32.totalorder %s35, 0
      %p335 = por %p333, %p334
      %s337 = sadd.s32 %s336, 1
      %p340 = scmp.eq.s32.totalorder %s29, 1
      %p341 = scmp.ne.s32.totalorder %s336, %s338
      %p342 = scmp.eq.s32.totalorder %s29, 0
      %p343 = por %p341, %p342
      %p344 = scmp.ne.s32.totalorder %s336, %s338
      %p345 = scmp.eq.s32.totalorder %s34, 1
      %p346 = por %p344, %p345
      %p347 = scmp.ne.s32.totalorder %s338, %s339
      %p348 = scmp.eq.s32.totalorder %s34, 0
      %p349 = por %p347, %p348
      %p350 = scmp.ne.s32.totalorder %s338, %s339
      %p351 = scmp.eq.s32.totalorder %s35, 1
      %p352 = por %p350, %p351
      %p354 = scmp.ne.s32.totalorder %s339, %s353
      %p355 = scmp.eq.s32.totalorder %s35, 0
      %p356 = por %p354, %p355
      %s358 = sadd.s32 %s357, 1
      %p361 = scmp.eq.s32.totalorder %s29, 1
      %p362 = scmp.ne.s32.totalorder %s357, %s359
      %p363 = scmp.eq.s32.totalorder %s29, 0
      %p364 = por %p362, %p363
      %p365 = scmp.ne.s32.totalorder %s357, %s359
      %p366 = scmp.eq.s32.totalorder %s34, 1
      %p367 = por %p365, %p366
      %p368 = scmp.ne.s32.totalorder %s359, %s360
      %p369 = scmp.eq.s32.totalorder %s34, 0
      %p370 = por %p368, %p369
      %p371 = scmp.ne.s32.totalorder %s359, %s360
      %p372 = scmp.eq.s32.totalorder %s35, 1
      %p373 = por %p371, %p372
      %p375 = scmp.ne.s32.totalorder %s360, %s374
      %p376 = scmp.eq.s32.totalorder %s35, 0
      %p377 = por %p375, %p376
      %s379 = sadd.s32 %s378, 1
      %p382 = scmp.eq.s32.totalorder %s29, 1
      %p383 = scmp.ne.s32.totalorder %s378, %s380
      %p384 = scmp.eq.s32.totalorder %s29, 0
      %p385 = por %p383, %p384
      %p386 = scmp.ne.s32.totalorder %s378, %s380
      %p387 = scmp.eq.s32.totalorder %s34, 1
      %p388 = por %p386, %p387
      %p389 = scmp.ne.s32.totalorder %s380, %s381
      %p390 = scmp.eq.s32.totalorder %s34, 0
      %p391 = por %p389, %p390
      %p392 = scmp.ne.s32.totalorder %s380, %s381
      %p393 = scmp.eq.s32.totalorder %s35, 1
      %p394 = por %p392, %p393
      %p396 = scmp.ne.s32.totalorder %s381, %s395
      %p397 = scmp.eq.s32.totalorder %s35, 0
      %p398 = por %p396, %p397
      %s400 = sadd.s32 %s399, 1
      %p403 = scmp.eq.s32.totalorder %s29, 1
      %p404 = scmp.ne.s32.totalorder %s399, %s401
      %p405 = scmp.eq.s32.totalorder %s29, 0
      %p406 = por %p404, %p405
      %p407 = scmp.ne.s32.totalorder %s399, %s401
      %p408 = scmp.eq.s32.totalorder %s34, 1
      %p409 = por %p407, %p408
      %p410 = scmp.ne.s32.totalorder %s401, %s402
      %p411 = scmp.eq.s32.totalorder %s34, 0
      %p412 = por %p410, %p411
      %p413 = scmp.ne.s32.totalorder %s401, %s402
      %p414 = scmp.eq.s32.totalorder %s35, 1
      %p415 = por %p413, %p414
      %p417 = scmp.ne.s32.totalorder %s402, %s416
      %p418 = scmp.eq.s32.totalorder %s35, 0
      %p419 = por %p417, %p418
      %s420 = ssub.s32 %s29, %s36
      %p421 = scmp.eq.s32.totalorder %s420, 0
      %s423 = sadd.s32 %s422, 1
      %s424 = scalar_select %p421, %s422, %s423
      %p427 = pneg %p421
      %p428 = scmp.eq.s32.totalorder %s29, 1
      %p429 = por %p427, %p428
      %p430 = scmp.ne.s32.totalorder %s422, %s425
      %p431 = scmp.eq.s32.totalorder %s29, 0
      %p432 = por %p430, %p431
      %p433 = scmp.ne.s32.totalorder %s422, %s425
      %p434 = scmp.eq.s32.totalorder %s34, 1
      %p435 = por %p433, %p434
      %p436 = scmp.ne.s32.totalorder %s425, %s426
      %p437 = scmp.eq.s32.totalorder %s34, 0
      %p438 = por %p436, %p437
      %p439 = scmp.ne.s32.totalorder %s425, %s426
      %p440 = scmp.eq.s32.totalorder %s35, 1
      %p441 = por %p439, %p440
      %p443 = scmp.ne.s32.totalorder %s426, %s442
      %p444 = scmp.eq.s32.totalorder %s35, 0
      %p445 = por %p443, %p444
      %p446 = scmp.le.s32.totalorder 1, %s29
      %p447 = scmp.lt.s32.totalorder %s29, 3
      %p448 = pnand %p446, %p447
      %p449 = pneg %p448
      // Predicated region
      $region9: #{tpu_custom_call.1} parent=5 // pred_check
        _
      $region10: #{tpu_custom_call.1} parent=5 // pred_check_branch
        %451 = sbr.rel (%p448) target = $region12
      $region11: #{tpu_custom_call.1} parent=5 // pred_region
        %s452 = ssub.s32 %s29, 1
        // Predicated region
        $region13: #{tpu_custom_call.1} parent=11 // pred_check
          %p453 = pneg %p76
        $region14: #{tpu_custom_call.1} parent=11 // pred_check_branch
          %455 = sbr.rel (%p453) target = $region16
        $region15: #{tpu_custom_call.1} parent=11 // pred_region
          %s457 = ssub.s32 512, 512
          %458 = vsyncadd [#allocation3], %s457
          %s459 = sshll.u32 [#allocation2], 4
          %s460 = int_to_ptr.vmem [resolvable:$true] %s459
          %465 = dma.hbm_to_vmem [thread:$0]  %s1, 512, %s460, [#allocation3], 64, 64, 4
        $region16: #{tpu_custom_call.1} parent=11 // pred_fallthru
          _
        // Predicated region
        $region17: #{tpu_custom_call.1} parent=11 // pred_check
          %p466 = pneg %p97
        $region18: #{tpu_custom_call.1} parent=11 // pred_check_branch
          %468 = sbr.rel (%p466) target = $region20
        $region19: #{tpu_custom_call.1} parent=11 // pred_region
          %s470 = ssub.s32 16, 16
          %471 = vsyncadd [#allocation5], %s470
          %s473 = sshll.u32 [#allocation4], 4
          %s474 = int_to_ptr.vmem [resolvable:$true] %s473
          %476 = dma.hbm_to_vmem [thread:$0]  %s2, 16, %s474, [#allocation5]
        $region20: #{tpu_custom_call.1} parent=11 // pred_fallthru
          _
        // Predicated region
        $region21: #{tpu_custom_call.1} parent=11 // pred_check
          %p477 = pneg %p118
        $region22: #{tpu_custom_call.1} parent=11 // pred_check_branch
          %479 = sbr.rel (%p477) target = $region24
        $region23: #{tpu_custom_call.1} parent=11 // pred_region
          _
        $region24: #{tpu_custom_call.1} parent=11 // pred_fallthru
          _
        // Predicated region
        $region25: #{tpu_custom_call.1} parent=11 // pred_check
          %p480 = pneg %p139
        $region26: #{tpu_custom_call.1} parent=11 // pred_check_branch
          %482 = sbr.rel (%p480) target = $region28
        $region27: #{tpu_custom_call.1} parent=11 // pred_region
          %s484 = ssub.s32 16, 16
          %485 = vsyncadd [#allocation5], %s484
          %s487 = sshll.u32 [#allocation6], 4
          %s488 = int_to_ptr.vmem [resolvable:$true] %s487
          %490 = dma.hbm_to_vmem [thread:$0]  %s4, 16, %s488, [#allocation5]
        $region28: #{tpu_custom_call.1} parent=11 // pred_fallthru
          _
        // Predicated region
        $region29: #{tpu_custom_call.1} parent=11 // pred_check
          %p491 = pneg %p160
        $region30: #{tpu_custom_call.1} parent=11 // pred_check_branch
          %493 = sbr.rel (%p491) target = $region32
        $region31: #{tpu_custom_call.1} parent=11 // pred_region
          _
        $region32: #{tpu_custom_call.1} parent=11 // pred_fallthru
          _
        // Predicated region
        $region33: #{tpu_custom_call.1} parent=11 // pred_check
          %p494 = pneg %p181
        $region34: #{tpu_custom_call.1} parent=11 // pred_check_branch
          %496 = sbr.rel (%p494) target = $region36
        $region35: #{tpu_custom_call.1} parent=11 // pred_region
          %s498 = ssub.s32 16, 16
          %499 = vsyncadd [#allocation8], %s498
          %s501 = sshll.u32 [#allocation7], 4
          %s502 = int_to_ptr.vmem [resolvable:$true] %s501
          %504 = dma.hbm_to_vmem [thread:$0]  %s6, 16, %s502, [#allocation8]
        $region36: #{tpu_custom_call.1} parent=11 // pred_fallthru
          _
        // Predicated region
        $region37: #{tpu_custom_call.1} parent=11 // pred_check
          %p505 = pneg %p202
        $region38: #{tpu_custom_call.1} parent=11 // pred_check_branch
          %507 = sbr.rel (%p505) target = $region40
        $region39: #{tpu_custom_call.1} parent=11 // pred_region
          _
        $region40: #{tpu_custom_call.1} parent=11 // pred_fallthru
          _
        // Predicated region
        $region41: #{tpu_custom_call.1} parent=11 // pred_check
          %p508 = pneg %p223
        $region42: #{tpu_custom_call.1} parent=11 // pred_check_branch
          %510 = sbr.rel (%p508) target = $region44
        $region43: #{tpu_custom_call.1} parent=11 // pred_region
          %s512 = ssub.s32 16, 16
          %513 = vsyncadd [#allocation8], %s512
          %s515 = sshll.u32 [#allocation9], 4
          %s516 = int_to_ptr.vmem [resolvable:$true] %s515
          %518 = dma.hbm_to_vmem [thread:$0]  %s8, 16, %s516, [#allocation8]
        $region44: #{tpu_custom_call.1} parent=11 // pred_fallthru
          _
        // Predicated region
        $region45: #{tpu_custom_call.1} parent=11 // pred_check
          %p519 = pneg %p244
        $region46: #{tpu_custom_call.1} parent=11 // pred_check_branch
          %521 = sbr.rel (%p519) target = $region48
        $region47: #{tpu_custom_call.1} parent=11 // pred_region
          %s523 = ssub.s32 1024, 1024
          %524 = vsyncadd [#allocation11], %s523
          %s525 = sshll.u32 [#allocation10], 4
          %s526 = int_to_ptr.vmem [resolvable:$true] %s525
          %531 = dma.hbm_to_vmem [thread:$0]  %s9, 1024, %s526, [#allocation11], 64, 64, 4
        $region48: #{tpu_custom_call.1} parent=11 // pred_fallthru
          _
        // Predicated region
        $region49: #{tpu_custom_call.1} parent=11 // pred_check
          %p532 = pneg %p265
        $region50: #{tpu_custom_call.1} parent=11 // pred_check_branch
          %534 = sbr.rel (%p532) target = $region52
        $region51: #{tpu_custom_call.1} parent=11 // pred_region
          _
        $region52: #{tpu_custom_call.1} parent=11 // pred_fallthru
          _
        // Predicated region
        $region53: #{tpu_custom_call.1} parent=11 // pred_check
          %p535 = pneg %p286
        $region54: #{tpu_custom_call.1} parent=11 // pred_check_branch
          %537 = sbr.rel (%p535) target = $region56
        $region55: #{tpu_custom_call.1} parent=11 // pred_region
          _
        $region56: #{tpu_custom_call.1} parent=11 // pred_fallthru
          _
        // Predicated region
        $region57: #{tpu_custom_call.1} parent=11 // pred_check
          %p538 = pneg %p307
        $region58: #{tpu_custom_call.1} parent=11 // pred_check_branch
          %540 = sbr.rel (%p538) target = $region60
        $region59: #{tpu_custom_call.1} parent=11 // pred_region
          %s542 = ssub.s32 1024, 1024
          %543 = vsyncadd [#allocation11], %s542
          %s544 = sshll.u32 [#allocation12], 4
          %s545 = int_to_ptr.vmem [resolvable:$true] %s544
          %550 = dma.hbm_to_vmem [thread:$0]  %s12, 1024, %s545, [#allocation11], 64, 64, 4
        $region60: #{tpu_custom_call.1} parent=11 // pred_fallthru
          _
        // Predicated region
        $region61: #{tpu_custom_call.1} parent=11 // pred_check
          %p551 = pneg %p328
        $region62: #{tpu_custom_call.1} parent=11 // pred_check_branch
          %553 = sbr.rel (%p551) target = $region64
        $region63: #{tpu_custom_call.1} parent=11 // pred_region
          _
        $region64: #{tpu_custom_call.1} parent=11 // pred_fallthru
          _
        // Predicated region
        $region65: #{tpu_custom_call.1} parent=11 // pred_check
          %p554 = pneg %p349
        $region66: #{tpu_custom_call.1} parent=11 // pred_check_branch
          %556 = sbr.rel (%p554) target = $region68
        $region67: #{tpu_custom_call.1} parent=11 // pred_region
          %s558 = ssub.s32 1024, 1024
          %559 = vsyncadd [#allocation14], %s558
          %s560 = sshll.u32 [#allocation13], 4
          %s561 = int_to_ptr.vmem [resolvable:$true] %s560
          %566 = dma.hbm_to_vmem [thread:$0]  %s14, 1024, %s561, [#allocation14], 64, 64, 4
        $region68: #{tpu_custom_call.1} parent=11 // pred_fallthru
          _
        // Predicated region
        $region69: #{tpu_custom_call.1} parent=11 // pred_check
          %p567 = pneg %p370
        $region70: #{tpu_custom_call.1} parent=11 // pred_check_branch
          %569 = sbr.rel (%p567) target = $region72
        $region71: #{tpu_custom_call.1} parent=11 // pred_region
          _
        $region72: #{tpu_custom_call.1} parent=11 // pred_fallthru
          _
        // Predicated region
        $region73: #{tpu_custom_call.1} parent=11 // pred_check
          %p570 = pneg %p391
        $region74: #{tpu_custom_call.1} parent=11 // pred_check_branch
          %572 = sbr.rel (%p570) target = $region76
        $region75: #{tpu_custom_call.1} parent=11 // pred_region
          _
        $region76: #{tpu_custom_call.1} parent=11 // pred_fallthru
          _
        // Predicated region
        $region77: #{tpu_custom_call.1} parent=11 // pred_check
          %p573 = pneg %p412
        $region78: #{tpu_custom_call.1} parent=11 // pred_check_branch
          %575 = sbr.rel (%p573) target = $region80
        $region79: #{tpu_custom_call.1} parent=11 // pred_region
          _
        $region80: #{tpu_custom_call.1} parent=11 // pred_fallthru
          _
      $region12: #{tpu_custom_call.1} parent=5 // pred_fallthru
        _
      %p576 = scmp.lt.s32.totalorder %s29, 2
      // Predicated region
      $region81: #{tpu_custom_call.1} parent=5 // pred_check
        %p577 = pneg %p576
      $region82: #{tpu_custom_call.1} parent=5 // pred_check_branch
        %579 = sbr.rel (%p577) target = $region84
      $region83: #{tpu_custom_call.1} parent=5 // pred_region
        // Predicated region
        $region85: #{tpu_custom_call.1} parent=83 // pred_check
          %p580 = pneg %p49
        $region86: #{tpu_custom_call.1} parent=83 // pred_check_branch
          %582 = sbr.rel (%p580) target = $region88
        $region87: #{tpu_custom_call.1} parent=83 // pred_region
          %s583 = smul.u32 8, %s29
          %p584 = scmp.lt.s32.totalorder %s583, 15
          %s585 = scalar_select %p584, %s583, 15
          %s586 = smul.addr %s585, 8
          %s587 = scalar_lea.vmem %s0, %s586
          %s588 = smul.u32 8, %s29
        $region88: #{tpu_custom_call.1} parent=83 // pred_fallthru
          _
      $region84: #{tpu_custom_call.1} parent=5 // pred_fallthru
        _
      %p589 = scmp.le.s32.totalorder 1, %s29
      %p590 = scmp.lt.s32.totalorder %s29, 3
      %p591 = pnand %p589, %p590
      %p592 = pneg %p591
      // Predicated region
      $region89: #{tpu_custom_call.1} parent=5 // pred_check
        _
      $region90: #{tpu_custom_call.1} parent=5 // pred_check_branch
        %594 = sbr.rel (%p591) target = $region92
      $region91: #{tpu_custom_call.1} parent=5 // pred_region
        %s595 = ssub.s32 %s29, 1
        // Predicated region
        $region93: #{tpu_custom_call.1} parent=91 // pred_check
          %p596 = pneg %p76
        $region94: #{tpu_custom_call.1} parent=91 // pred_check_branch
          %598 = sbr.rel (%p596) target = $region96
        $region95: #{tpu_custom_call.1} parent=91 // pred_region
          %599 = dma.done [#allocation3], 512
        $region96: #{tpu_custom_call.1} parent=91 // pred_fallthru
          _
        // Predicated region
        $region97: #{tpu_custom_call.1} parent=91 // pred_check
          %p600 = pneg %p97
        $region98: #{tpu_custom_call.1} parent=91 // pred_check_branch
          %602 = sbr.rel (%p600) target = $region100
        $region99: #{tpu_custom_call.1} parent=91 // pred_region
          %603 = dma.done [#allocation5], 16
        $region100: #{tpu_custom_call.1} parent=91 // pred_fallthru
          _
        // Predicated region
        $region101: #{tpu_custom_call.1} parent=91 // pred_check
          %p604 = pneg %p139
        $region102: #{tpu_custom_call.1} parent=91 // pred_check_branch
          %606 = sbr.rel (%p604) target = $region104
        $region103: #{tpu_custom_call.1} parent=91 // pred_region
          %607 = dma.done [#allocation5], 16
        $region104: #{tpu_custom_call.1} parent=91 // pred_fallthru
          _
        // Predicated region
        $region105: #{tpu_custom_call.1} parent=91 // pred_check
          %p608 = pneg %p181
        $region106: #{tpu_custom_call.1} parent=91 // pred_check_branch
          %610 = sbr.rel (%p608) target = $region108
        $region107: #{tpu_custom_call.1} parent=91 // pred_region
          %611 = dma.done [#allocation8], 16
        $region108: #{tpu_custom_call.1} parent=91 // pred_fallthru
          _
        // Predicated region
        $region109: #{tpu_custom_call.1} parent=91 // pred_check
          %p612 = pneg %p223
        $region110: #{tpu_custom_call.1} parent=91 // pred_check_branch
          %614 = sbr.rel (%p612) target = $region112
        $region111: #{tpu_custom_call.1} parent=91 // pred_region
          %615 = dma.done [#allocation8], 16
        $region112: #{tpu_custom_call.1} parent=91 // pred_fallthru
          _
        // Predicated region
        $region113: #{tpu_custom_call.1} parent=91 // pred_check
          %p616 = pneg %p244
        $region114: #{tpu_custom_call.1} parent=91 // pred_check_branch
          %618 = sbr.rel (%p616) target = $region116
        $region115: #{tpu_custom_call.1} parent=91 // pred_region
          %619 = dma.done [#allocation11], 1024
        $region116: #{tpu_custom_call.1} parent=91 // pred_fallthru
          _
        // Predicated region
        $region117: #{tpu_custom_call.1} parent=91 // pred_check
          %p620 = pneg %p307
        $region118: #{tpu_custom_call.1} parent=91 // pred_check_branch
          %622 = sbr.rel (%p620) target = $region120
        $region119: #{tpu_custom_call.1} parent=91 // pred_region
          %623 = dma.done [#allocation11], 1024
        $region120: #{tpu_custom_call.1} parent=91 // pred_fallthru
          _
        // Predicated region
        $region121: #{tpu_custom_call.1} parent=91 // pred_check
          %p624 = pneg %p349
        $region122: #{tpu_custom_call.1} parent=91 // pred_check_branch
          %626 = sbr.rel (%p624) target = $region124
        $region123: #{tpu_custom_call.1} parent=91 // pred_region
          %627 = dma.done [#allocation14], 1024
        $region124: #{tpu_custom_call.1} parent=91 // pred_fallthru
          _
        %s628 = smul.u32 8, %s34
        %p629 = scmp.lt.s32.totalorder %s628, 15
        %s630 = scalar_select %p629, %s628, 15
        %s631 = smul.addr %s630, 8
        %s632 = scalar_lea.vmem %s0, %s631
        %p633 = pneg %p55
        %p634 = pneg %p52
        %p635 = pneg %p76
        %p636 = pneg %p73
        %p637 = pneg %p97
        %p638 = pneg %p94
        %p639 = pneg %p118
        %p640 = pneg %p115
        %p641 = pneg %p139
        %p642 = pneg %p136
        %p643 = pneg %p160
        %p644 = pneg %p157
        %p645 = pneg %p181
        %p646 = pneg %p178
        %p647 = pneg %p202
        %p648 = pneg %p199
        %p649 = pneg %p223
        %p650 = pneg %p220
        %p651 = pneg %p244
        %p652 = pneg %p241
        %p653 = pneg %p265
        %p654 = pneg %p262
        %p655 = pneg %p286
        %p656 = pneg %p283
        %p657 = pneg %p307
        %p658 = pneg %p304
        %p659 = pneg %p328
        %p660 = pneg %p325
        %p661 = pneg %p349
        %p662 = pneg %p346
        %p663 = pneg %p370
        %p664 = pneg %p367
        %p665 = pneg %p391
        %p666 = pneg %p388
        %p667 = pneg %p412
        %p668 = pneg %p409
        %p669 = pneg %p438
        %p670 = pneg %p435
        %s671 = smul.u32 8, %s34
        %p672 = scmp.lt.s32.totalorder %s671, 15
        %s673 = scalar_select %p672, %s671, 15
        %s674 = smul.addr %s673, 8
        %s675 = scalar_lea.vmem %s18, %s674
        %s676 = smul.u32 8, %s34
        %p677 = scmp.lt.s32.totalorder %s676, 15
        %s678 = scalar_select %p677, %s676, 15
        %s679 = smul.addr %s678, 8
        %s680 = scalar_lea.vmem %s0, %s679
        %s681 = smul.u32 8, %s34
        %s682 = smul.u32 8, %s34
        %p683 = scmp.lt.s32.totalorder %s682, 15
        %s684 = scalar_select %p683, %s682, 15
        %s685 = smul.addr %s684, 8
        %s686 = scalar_lea.vmem %s18, %s685
        %s687 = smul.u32 8, %s34
        %v689 = vld [vmem:[%s680] sm:$0xff]
        %v690 = vld [vmem:[%s680 + $0x8] sm:$0xff]
        %v691 = vld [vmem:[%s680 + $0x10] sm:$0xff]
        %v692 = vld [vmem:[%s680 + $0x18] sm:$0xff]
        %v693 = vld [vmem:[%s680 + $0x20] sm:$0xff]
        %v694 = vld [vmem:[%s680 + $0x28] sm:$0xff]
        %v695 = vld [vmem:[%s680 + $0x30] sm:$0xff]
        %v696 = vld [vmem:[%s680 + $0x38] sm:$0xff]
        %v697 = vld [vmem:[#allocation2] sm:$0xf]
        %v698 = vld [vmem:[#allocation2 + $0x4] sm:$0xf]
        %v699 = vld [vmem:[#allocation2 + $0x8] sm:$0xf]
        %v700 = vld [vmem:[#allocation2 + $0xc] sm:$0xf]
        %v701 = vld [vmem:[#allocation2 + $0x10] sm:$0xf]
        %v702 = vld [vmem:[#allocation2 + $0x14] sm:$0xf]
        %v703 = vld [vmem:[#allocation2 + $0x18] sm:$0xf]
        %v704 = vld [vmem:[#allocation2 + $0x1c] sm:$0xf]
        %v705 = vld [vmem:[#allocation4] sm:$0x1]
        %v706 = vpack.c.bf16 %v690, %v689
        %v707 = vpack.c.bf16 %v692, %v691
        %v708 = vpack.c.bf16 %v694, %v693
        %v709 = vpack.c.bf16 %v696, %v695
        %v711 = vlaneseq
        %v712 = vshrl.u32 %v711, 7
        %v713 = vsub.s32 0, %v712
        %v714 = vrot.slane %v705, %v713
        %v724 = vunpack.c.l.b16 %v697
        %v725 = vunpack.c.l.b16 %v698
        %v726 = vunpack.c.l.b16 %v699
        %v727 = vunpack.c.l.b16 %v700
        %v728 = vunpack.c.l.b16 %v701
        %v729 = vunpack.c.l.b16 %v702
        %v730 = vunpack.c.l.b16 %v703
        %v731 = vunpack.c.l.b16 %v704
        %v732 = vpack.c.b16 %v725, %v724
        %v733 = vpack.c.b16 %v727, %v726
        %v734 = vpack.c.b16 %v729, %v728
        %v735 = vpack.c.b16 %v731, %v730
        %vm740 = vcmask 523264
        %v742 = vsel %vm740, %v706, 0
        %v745 = vsel %vm740, %v707, 0
        %v748 = vsel %vm740, %v708, 0
        %v751 = vsel %vm740, %v709, 0
        %753 = vmatprep.subr.bf16.mxu0 0
        %754 = vmatpush1.bf16.msra.mxu0 %v732
        %755 = vmatprep.subr.bf16.mxu0 0
        %756 = vmatpush1.bf16.msra.mxu0 %v733
        %757 = vmatprep.subr.bf16.mxu0 0
        %758 = vmatpush1.bf16.msra.mxu0 %v734
        %759 = vmatprep.subr.bf16.mxu0 0
        %760 = vmatpush1.bf16.msra.mxu0 %v735
        %761 = vmatprep.subr.bf16.mxu0 0
        %762 = vmatpush1.bf16.msra.mxu0 0
        %763 = vmatprep.subr.bf16.mxu0 0
        %764 = vmatpush1.bf16.msra.mxu0 0
        %765 = vmatprep.subr.bf16.mxu0 0
        %766 = vmatpush1.bf16.msra.mxu0 0
        %767 = vmatprep.subr.bf16.mxu0 0
        %768 = vmatpush1.bf16.msra.mxu0 0
        %769 = vmatprep.subr.bf16.mxu0 0
        %770 = vmatpush1.bf16.msra.mxu0 0
        %771 = vmatprep.subr.bf16.mxu0 0
        %772 = vmatpush1.bf16.msra.mxu0 0
        %773 = vmatprep.subr.bf16.mxu0 0
        %774 = vmatpush1.bf16.msra.mxu0 0
        %775 = vmatprep.subr.bf16.mxu0 0
        %776 = vmatpush1.bf16.msra.mxu0 0
        %777 = vmatprep.subr.bf16.mxu0 0
        %778 = vmatpush1.bf16.msra.mxu0 0
        %779 = vmatprep.subr.bf16.mxu0 0
        %780 = vmatpush1.bf16.msra.mxu0 0
        %781 = vmatprep.subr.bf16.mxu0 0
        %782 = vmatpush1.bf16.msra.mxu0 0
        %783 = vmatprep.subr.bf16.mxu0 0
        %784 = vmatpush1.bf16.msra.mxu0 0
        %785 = vmatprep.mubr.bf16.mxu0 0
        %786 = vmatmul.mubr.bf16.gmra.mrb[0].mxu0 %v742
        %v787 = vpop.f32.mrb[0].mxu0
        %v788 = vadd.f32 %v714, %v787
        %v789 = vpop.f32.mrb[0].mxu0
        %v790 = vpop.f32.mrb[0].mxu0
        %v791 = vadd.f32 %v714, %v790
        %v792 = vpop.f32.mrb[0].mxu0
        %793 = vmatprep.mubr.bf16.mxu0 0
        %794 = vmatmul.mubr.bf16.gmra.mrb[0].mxu0 %v745
        %v795 = vpop.f32.mrb[0].mxu0
        %v796 = vadd.f32 %v714, %v795
        %v797 = vpop.f32.mrb[0].mxu0
        %v798 = vpop.f32.mrb[0].mxu0
        %v799 = vadd.f32 %v714, %v798
        %v800 = vpop.f32.mrb[0].mxu0
        %801 = vmatprep.mubr.bf16.mxu0 0
        %802 = vmatmul.mubr.bf16.gmra.mrb[0].mxu0 %v748
        %v803 = vpop.f32.mrb[0].mxu0
        %v804 = vadd.f32 %v714, %v803
        %v805 = vpop.f32.mrb[0].mxu0
        %v806 = vpop.f32.mrb[0].mxu0
        %v807 = vadd.f32 %v714, %v806
        %v808 = vpop.f32.mrb[0].mxu0
        %809 = vmatprep.mubr.bf16.mxu0 0
        %810 = vmatmul.mubr.bf16.gmra.mrb[0].mxu0 %v751
        %v811 = vpop.f32.mrb[0].mxu0
        %v812 = vadd.f32 %v714, %v811
        %v813 = vpop.f32.mrb[0].mxu0
        %v814 = vpop.f32.mrb[0].mxu0
        %v815 = vadd.f32 %v714, %v814
        %v816 = vpop.f32.mrb[0].mxu0
        %817 = vdwg.mxu0
        %v818 = vmax.f32 %v788, 0.0
        %v819 = vmax.f32 %v791, 0.0
        %v820 = vmax.f32 %v796, 0.0
        %v821 = vmax.f32 %v799, 0.0
        %v822 = vmax.f32 %v804, 0.0
        %v823 = vmax.f32 %v807, 0.0
        %v824 = vmax.f32 %v812, 0.0
        %v825 = vmax.f32 %v815, 0.0
        %v826 = vld [vmem:[%s3] sm:$0xf]
        %v827 = vld [vmem:[%s3 + $0x4] sm:$0xf]
        %v828 = vld [vmem:[%s3 + $0x8] sm:$0xf]
        %v829 = vld [vmem:[%s3 + $0xc] sm:$0xf]
        %v830 = vld [vmem:[%s3 + $0x10] sm:$0xf]
        %v831 = vld [vmem:[%s3 + $0x14] sm:$0xf]
        %v832 = vld [vmem:[%s3 + $0x18] sm:$0xf]
        %v833 = vld [vmem:[%s3 + $0x1c] sm:$0xf]
        %v834 = vld [vmem:[%s3 + $0x20] sm:$0xf]
        %v835 = vld [vmem:[%s3 + $0x24] sm:$0xf]
        %v836 = vld [vmem:[%s3 + $0x28] sm:$0xf]
        %v837 = vld [vmem:[%s3 + $0x2c] sm:$0xf]
        %v838 = vld [vmem:[%s3 + $0x30] sm:$0xf]
        %v839 = vld [vmem:[%s3 + $0x34] sm:$0xf]
        %v840 = vld [vmem:[%s3 + $0x38] sm:$0xf]
        %v841 = vld [vmem:[%s3 + $0x3c] sm:$0xf]
        %v842 = vld [vmem:[#allocation6] sm:$0x1]
        %v843 = vpack.c.bf16 %v819, %v818
        %v844 = vpack.c.bf16 %v821, %v820
        %v845 = vpack.c.bf16 %v823, %v822
        %v846 = vpack.c.bf16 %v825, %v824
        %v848 = vlaneseq
        %v849 = vshrl.u32 %v848, 7
        %v850 = vsub.s32 0, %v849
        %v851 = vrot.slane %v842, %v850
        %v869 = vunpack.c.l.b16 %v826
        %v870 = vunpack.c.l.b16 %v827
        %v871 = vunpack.c.l.b16 %v828
        %v872 = vunpack.c.l.b16 %v829
        %v873 = vunpack.c.l.b16 %v830
        %v874 = vunpack.c.l.b16 %v831
        %v875 = vunpack.c.l.b16 %v832
        %v876 = vunpack.c.l.b16 %v833
        %v877 = vunpack.c.l.b16 %v834
        %v878 = vunpack.c.l.b16 %v835
        %v879 = vunpack.c.l.b16 %v836
        %v880 = vunpack.c.l.b16 %v837
        %v881 = vunpack.c.l.b16 %v838
        %v882 = vunpack.c.l.b16 %v839
        %v883 = vunpack.c.l.b16 %v840
        %v884 = vunpack.c.l.b16 %v841
        %v885 = vpack.c.b16 %v870, %v869
        %v886 = vpack.c.b16 %v872, %v871
        %v887 = vpack.c.b16 %v874, %v873
        %v888 = vpack.c.b16 %v876, %v875
        %v889 = vpack.c.b16 %v878, %v877
        %v890 = vpack.c.b16 %v880, %v879
        %v891 = vpack.c.b16 %v882, %v881
        %v892 = vpack.c.b16 %v884, %v883
        %901 = vmatprep.subr.bf16.mxu0 0
        %902 = vmatpush1.bf16.msra.mxu0 %v885
        %903 = vmatprep.subr.bf16.mxu0 0
        %904 = vmatpush1.bf16.msra.mxu0 %v886
        %905 = vmatprep.subr.bf16.mxu0 0
        %906 = vmatpush1.bf16.msra.mxu0 %v887
        %907 = vmatprep.subr.bf16.mxu0 0
        %908 = vmatpush1.bf16.msra.mxu0 %v888
        %909 = vmatprep.subr.bf16.mxu0 0
        %910 = vmatpush1.bf16.msra.mxu0 %v889
        %911 = vmatprep.subr.bf16.mxu0 0
        %912 = vmatpush1.bf16.msra.mxu0 %v890
        %913 = vmatprep.subr.bf16.mxu0 0
        %914 = vmatpush1.bf16.msra.mxu0 %v891
        %915 = vmatprep.subr.bf16.mxu0 0
        %916 = vmatpush1.bf16.msra.mxu0 %v892
        %917 = vmatprep.subr.bf16.mxu0 0
        %918 = vmatpush1.bf16.msra.mxu0 0
        %919 = vmatprep.subr.bf16.mxu0 0
        %920 = vmatpush1.bf16.msra.mxu0 0
        %921 = vmatprep.subr.bf16.mxu0 0
        %922 = vmatpush1.bf16.msra.mxu0 0
        %923 = vmatprep.subr.bf16.mxu0 0
        %924 = vmatpush1.bf16.msra.mxu0 0
        %925 = vmatprep.subr.bf16.mxu0 0
        %926 = vmatpush1.bf16.msra.mxu0 0
        %927 = vmatprep.subr.bf16.mxu0 0
        %928 = vmatpush1.bf16.msra.mxu0 0
        %929 = vmatprep.subr.bf16.mxu0 0
        %930 = vmatpush1.bf16.msra.mxu0 0
        %931 = vmatprep.subr.bf16.mxu0 0
        %932 = vmatpush1.bf16.msra.mxu0 0
        %933 = vmatprep.mubr.bf16.mxu0 0
        %934 = vmatmul.mubr.bf16.gmra.mrb[0].mxu0 %v843
        %v935 = vpop.f32.mrb[0].mxu0
        %v936 = vadd.f32 %v851, %v935
        %v937 = vpop.f32.mrb[0].mxu0
        %v938 = vpop.f32.mrb[0].mxu0
        %v939 = vadd.f32 %v851, %v938
        %v940 = vpop.f32.mrb[0].mxu0
        %941 = vmatprep.mubr.bf16.mxu0 0
        %942 = vmatmul.mubr.bf16.gmra.mrb[0].mxu0 %v844
        %v943 = vpop.f32.mrb[0].mxu0
        %v944 = vadd.f32 %v851, %v943
        %v945 = vpop.f32.mrb[0].mxu0
        %v946 = vpop.f32.mrb[0].mxu0
        %v947 = vadd.f32 %v851, %v946
        %v948 = vpop.f32.mrb[0].mxu0
        %949 = vmatprep.mubr.bf16.mxu0 0
        %950 = vmatmul.mubr.bf16.gmra.mrb[0].mxu0 %v845
        %v951 = vpop.f32.mrb[0].mxu0
        %v952 = vadd.f32 %v851, %v951
        %v953 = vpop.f32.mrb[0].mxu0
        %v954 = vpop.f32.mrb[0].mxu0
        %v955 = vadd.f32 %v851, %v954
        %v956 = vpop.f32.mrb[0].mxu0
        %957 = vmatprep.mubr.bf16.mxu0 0
        %958 = vmatmul.mubr.bf16.gmra.mrb[0].mxu0 %v846
        %v959 = vpop.f32.mrb[0].mxu0
        %v960 = vadd.f32 %v851, %v959
        %v961 = vpop.f32.mrb[0].mxu0
        %v962 = vpop.f32.mrb[0].mxu0
        %v963 = vadd.f32 %v851, %v962
        %v964 = vpop.f32.mrb[0].mxu0
        %965 = vdwg.mxu0
        %v966 = vmax.f32 %v936, 0.0
        %v967 = vmax.f32 %v939, 0.0
        %v968 = vmax.f32 %v944, 0.0
        %v969 = vmax.f32 %v947, 0.0
        %v970 = vmax.f32 %v952, 0.0
        %v971 = vmax.f32 %v955, 0.0
        %v972 = vmax.f32 %v960, 0.0
        %v973 = vmax.f32 %v963, 0.0
        %v974 = vld [vmem:[%s5] sm:$0xf]
        %v975 = vld [vmem:[%s5 + $0x4] sm:$0xf]
        %v976 = vld [vmem:[%s5 + $0x8] sm:$0xf]
        %v977 = vld [vmem:[%s5 + $0xc] sm:$0xf]
        %v978 = vld [vmem:[%s5 + $0x10] sm:$0xf]
        %v979 = vld [vmem:[%s5 + $0x14] sm:$0xf]
        %v980 = vld [vmem:[%s5 + $0x18] sm:$0xf]
        %v981 = vld [vmem:[%s5 + $0x1c] sm:$0xf]
        %v982 = vld [vmem:[%s5 + $0x20] sm:$0xf]
        %v983 = vld [vmem:[%s5 + $0x24] sm:$0xf]
        %v984 = vld [vmem:[%s5 + $0x28] sm:$0xf]
        %v985 = vld [vmem:[%s5 + $0x2c] sm:$0xf]
        %v986 = vld [vmem:[%s5 + $0x30] sm:$0xf]
        %v987 = vld [vmem:[%s5 + $0x34] sm:$0xf]
        %v988 = vld [vmem:[%s5 + $0x38] sm:$0xf]
        %v989 = vld [vmem:[%s5 + $0x3c] sm:$0xf]
        %v990 = vld [vmem:[#allocation7] sm:$0x1]
        %v991 = vpack.c.bf16 %v967, %v966
        %v992 = vpack.c.bf16 %v969, %v968
        %v993 = vpack.c.bf16 %v971, %v970
        %v994 = vpack.c.bf16 %v973, %v972
        %v996 = vlaneseq
        %v997 = vshrl.u32 %v996, 7
        %v998 = vsub.s32 0, %v997
        %v999 = vrot.slane %v990, %v998
        %v1017 = vunpack.c.l.b16 %v974
        %v1018 = vunpack.c.l.b16 %v975
        %v1019 = vunpack.c.l.b16 %v976
        %v1020 = vunpack.c.l.b16 %v977
        %v1021 = vunpack.c.l.b16 %v978
        %v1022 = vunpack.c.l.b16 %v979
        %v1023 = vunpack.c.l.b16 %v980
        %v1024 = vunpack.c.l.b16 %v981
        %v1025 = vunpack.c.l.b16 %v982
        %v1026 = vunpack.c.l.b16 %v983
        %v1027 = vunpack.c.l.b16 %v984
        %v1028 = vunpack.c.l.b16 %v985
        %v1029 = vunpack.c.l.b16 %v986
        %v1030 = vunpack.c.l.b16 %v987
        %v1031 = vunpack.c.l.b16 %v988
        %v1032 = vunpack.c.l.b16 %v989
        %v1033 = vpack.c.b16 %v1018, %v1017
        %v1034 = vpack.c.b16 %v1020, %v1019
        %v1035 = vpack.c.b16 %v1022, %v1021
        %v1036 = vpack.c.b16 %v1024, %v1023
        %v1037 = vpack.c.b16 %v1026, %v1025
        %v1038 = vpack.c.b16 %v1028, %v1027
        %v1039 = vpack.c.b16 %v1030, %v1029
        %v1040 = vpack.c.b16 %v1032, %v1031
        %1049 = vmatprep.subr.bf16.mxu0 0
        %1050 = vmatpush1.bf16.msra.mxu0 %v1033
        %1051 = vmatprep.subr.bf16.mxu0 0
        %1052 = vmatpush1.bf16.msra.mxu0 %v1034
        %1053 = vmatprep.subr.bf16.mxu0 0
        %1054 = vmatpush1.bf16.msra.mxu0 %v1035
        %1055 = vmatprep.subr.bf16.mxu0 0
        %1056 = vmatpush1.bf16.msra.mxu0 %v1036
        %1057 = vmatprep.subr.bf16.mxu0 0
        %1058 = vmatpush1.bf16.msra.mxu0 %v1037
        %1059 = vmatprep.subr.bf16.mxu0 0
        %1060 = vmatpush1.bf16.msra.mxu0 %v1038
        %1061 = vmatprep.subr.bf16.mxu0 0
        %1062 = vmatpush1.bf16.msra.mxu0 %v1039
        %1063 = vmatprep.subr.bf16.mxu0 0
        %1064 = vmatpush1.bf16.msra.mxu0 %v1040
        %1065 = vmatprep.subr.bf16.mxu0 0
        %1066 = vmatpush1.bf16.msra.mxu0 0
        %1067 = vmatprep.subr.bf16.mxu0 0
        %1068 = vmatpush1.bf16.msra.mxu0 0
        %1069 = vmatprep.subr.bf16.mxu0 0
        %1070 = vmatpush1.bf16.msra.mxu0 0
        %1071 = vmatprep.subr.bf16.mxu0 0
        %1072 = vmatpush1.bf16.msra.mxu0 0
        %1073 = vmatprep.subr.bf16.mxu0 0
        %1074 = vmatpush1.bf16.msra.mxu0 0
        %1075 = vmatprep.subr.bf16.mxu0 0
        %1076 = vmatpush1.bf16.msra.mxu0 0
        %1077 = vmatprep.subr.bf16.mxu0 0
        %1078 = vmatpush1.bf16.msra.mxu0 0
        %1079 = vmatprep.subr.bf16.mxu0 0
        %1080 = vmatpush1.bf16.msra.mxu0 0
        %1081 = vmatprep.mubr.bf16.mxu0 0
        %1082 = vmatmul.mubr.bf16.gmra.mrb[0].mxu0 %v991
        %v1083 = vpop.f32.mrb[0].mxu0
        %v1084 = vadd.f32 %v999, %v1083
        %v1085 = vpop.f32.mrb[0].mxu0
        %v1086 = vpop.f32.mrb[0].mxu0
        %v1087 = vadd.f32 %v999, %v1086
        %v1088 = vpop.f32.mrb[0].mxu0
        %1089 = vmatprep.mubr.bf16.mxu0 0
        %1090 = vmatmul.mubr.bf16.gmra.mrb[0].mxu0 %v992
        %v1091 = vpop.f32.mrb[0].mxu0
        %v1092 = vadd.f32 %v999, %v1091
        %v1093 = vpop.f32.mrb[0].mxu0
        %v1094 = vpop.f32.mrb[0].mxu0
        %v1095 = vadd.f32 %v999, %v1094
        %v1096 = vpop.f32.mrb[0].mxu0
        %1097 = vmatprep.mubr.bf16.mxu0 0
        %1098 = vmatmul.mubr.bf16.gmra.mrb[0].mxu0 %v993
        %v1099 = vpop.f32.mrb[0].mxu0
        %v1100 = vadd.f32 %v999, %v1099
        %v1101 = vpop.f32.mrb[0].mxu0
        %v1102 = vpop.f32.mrb[0].mxu0
        %v1103 = vadd.f32 %v999, %v1102
        %v1104 = vpop.f32.mrb[0].mxu0
        %1105 = vmatprep.mubr.bf16.mxu0 0
        %1106 = vmatmul.mubr.bf16.gmra.mrb[0].mxu0 %v994
        %v1107 = vpop.f32.mrb[0].mxu0
        %v1108 = vadd.f32 %v999, %v1107
        %v1109 = vpop.f32.mrb[0].mxu0
        %v1110 = vpop.f32.mrb[0].mxu0
        %v1111 = vadd.f32 %v999, %v1110
        %v1112 = vpop.f32.mrb[0].mxu0
        %1113 = vdwg.mxu0
        %v1114 = vmax.f32 %v1084, 0.0
        %v1115 = vmax.f32 %v1087, 0.0
        %v1116 = vmax.f32 %v1092, 0.0
        %v1117 = vmax.f32 %v1095, 0.0
        %v1118 = vmax.f32 %v1100, 0.0
        %v1119 = vmax.f32 %v1103, 0.0
        %v1120 = vmax.f32 %v1108, 0.0
        %v1121 = vmax.f32 %v1111, 0.0
        %v1122 = vld [vmem:[%s7] sm:$0xf]
        %v1123 = vld [vmem:[%s7 + $0x4] sm:$0xf]
        %v1124 = vld [vmem:[%s7 + $0x8] sm:$0xf]
        %v1125 = vld [vmem:[%s7 + $0xc] sm:$0xf]
        %v1126 = vld [vmem:[%s7 + $0x10] sm:$0xf]
        %v1127 = vld [vmem:[%s7 + $0x14] sm:$0xf]
        %v1128 = vld [vmem:[%s7 + $0x18] sm:$0xf]
        %v1129 = vld [vmem:[%s7 + $0x1c] sm:$0xf]
        %v1130 = vld [vmem:[%s7 + $0x20] sm:$0xf]
        %v1131 = vld [vmem:[%s7 + $0x24] sm:$0xf]
        %v1132 = vld [vmem:[%s7 + $0x28] sm:$0xf]
        %v1133 = vld [vmem:[%s7 + $0x2c] sm:$0xf]
        %v1134 = vld [vmem:[%s7 + $0x30] sm:$0xf]
        %v1135 = vld [vmem:[%s7 + $0x34] sm:$0xf]
        %v1136 = vld [vmem:[%s7 + $0x38] sm:$0xf]
        %v1137 = vld [vmem:[%s7 + $0x3c] sm:$0xf]
        %v1138 = vld [vmem:[#allocation9] sm:$0x1]
        %v1139 = vpack.c.bf16 %v1115, %v1114
        %v1140 = vpack.c.bf16 %v1117, %v1116
        %v1141 = vpack.c.bf16 %v1119, %v1118
        %v1142 = vpack.c.bf16 %v1121, %v1120
        %v1144 = vlaneseq
        %v1145 = vshrl.u32 %v1144, 7
        %v1146 = vsub.s32 0, %v1145
        %v1147 = vrot.slane %v1138, %v1146
        %v1165 = vunpack.c.l.b16 %v1122
        %v1166 = vunpack.c.l.b16 %v1123
        %v1167 = vunpack.c.l.b16 %v1124
        %v1168 = vunpack.c.l.b16 %v1125
        %v1169 = vunpack.c.l.b16 %v1126
        %v1170 = vunpack.c.l.b16 %v1127
        %v1171 = vunpack.c.l.b16 %v1128
        %v1172 = vunpack.c.l.b16 %v1129
        %v1173 = vunpack.c.l.b16 %v1130
        %v1174 = vunpack.c.l.b16 %v1131
        %v1175 = vunpack.c.l.b16 %v1132
        %v1176 = vunpack.c.l.b16 %v1133
        %v1177 = vunpack.c.l.b16 %v1134
        %v1178 = vunpack.c.l.b16 %v1135
        %v1179 = vunpack.c.l.b16 %v1136
        %v1180 = vunpack.c.l.b16 %v1137
        %v1181 = vpack.c.b16 %v1166, %v1165
        %v1182 = vpack.c.b16 %v1168, %v1167
        %v1183 = vpack.c.b16 %v1170, %v1169
        %v1184 = vpack.c.b16 %v1172, %v1171
        %v1185 = vpack.c.b16 %v1174, %v1173
        %v1186 = vpack.c.b16 %v1176, %v1175
        %v1187 = vpack.c.b16 %v1178, %v1177
        %v1188 = vpack.c.b16 %v1180, %v1179
        %1197 = vmatprep.subr.bf16.mxu0 0
        %1198 = vmatpush1.bf16.msra.mxu0 %v1181
        %1199 = vmatprep.subr.bf16.mxu0 0
        %1200 = vmatpush1.bf16.msra.mxu0 %v1182
        %1201 = vmatprep.subr.bf16.mxu0 0
        %1202 = vmatpush1.bf16.msra.mxu0 %v1183
        %1203 = vmatprep.subr.bf16.mxu0 0
        %1204 = vmatpush1.bf16.msra.mxu0 %v1184
        %1205 = vmatprep.subr.bf16.mxu0 0
        %1206 = vmatpush1.bf16.msra.mxu0 %v1185
        %1207 = vmatprep.subr.bf16.mxu0 0
        %1208 = vmatpush1.bf16.msra.mxu0 %v1186
        %1209 = vmatprep.subr.bf16.mxu0 0
        %1210 = vmatpush1.bf16.msra.mxu0 %v1187
        %1211 = vmatprep.subr.bf16.mxu0 0
        %1212 = vmatpush1.bf16.msra.mxu0 %v1188
        %1213 = vmatprep.subr.bf16.mxu0 0
        %1214 = vmatpush1.bf16.msra.mxu0 0
        %1215 = vmatprep.subr.bf16.mxu0 0
        %1216 = vmatpush1.bf16.msra.mxu0 0
        %1217 = vmatprep.subr.bf16.mxu0 0
        %1218 = vmatpush1.bf16.msra.mxu0 0
        %1219 = vmatprep.subr.bf16.mxu0 0
        %1220 = vmatpush1.bf16.msra.mxu0 0
        %1221 = vmatprep.subr.bf16.mxu0 0
        %1222 = vmatpush1.bf16.msra.mxu0 0
        %1223 = vmatprep.subr.bf16.mxu0 0
        %1224 = vmatpush1.bf16.msra.mxu0 0
        %1225 = vmatprep.subr.bf16.mxu0 0
        %1226 = vmatpush1.bf16.msra.mxu0 0
        %1227 = vmatprep.subr.bf16.mxu0 0
        %1228 = vmatpush1.bf16.msra.mxu0 0
        %1229 = vmatprep.mubr.bf16.mxu0 0
        %1230 = vmatmul.mubr.bf16.gmra.mrb[0].mxu0 %v1139
        %v1231 = vpop.f32.mrb[0].mxu0
        %v1232 = vadd.f32 %v1147, %v1231
        %v1233 = vpop.f32.mrb[0].mxu0
        %v1234 = vpop.f32.mrb[0].mxu0
        %v1235 = vadd.f32 %v1147, %v1234
        %v1236 = vpop.f32.mrb[0].mxu0
        %1237 = vmatprep.mubr.bf16.mxu0 0
        %1238 = vmatmul.mubr.bf16.gmra.mrb[0].mxu0 %v1140
        %v1239 = vpop.f32.mrb[0].mxu0
        %v1240 = vadd.f32 %v1147, %v1239
        %v1241 = vpop.f32.mrb[0].mxu0
        %v1242 = vpop.f32.mrb[0].mxu0
        %v1243 = vadd.f32 %v1147, %v1242
        %v1244 = vpop.f32.mrb[0].mxu0
        %1245 = vmatprep.mubr.bf16.mxu0 0
        %1246 = vmatmul.mubr.bf16.gmra.mrb[0].mxu0 %v1141
        %v1247 = vpop.f32.mrb[0].mxu0
        %v1248 = vadd.f32 %v1147, %v1247
        %v1249 = vpop.f32.mrb[0].mxu0
        %v1250 = vpop.f32.mrb[0].mxu0
        %v1251 = vadd.f32 %v1147, %v1250
        %v1252 = vpop.f32.mrb[0].mxu0
        %1253 = vmatprep.mubr.bf16.mxu0 0
        %1254 = vmatmul.mubr.bf16.gmra.mrb[0].mxu0 %v1142
        %v1255 = vpop.f32.mrb[0].mxu0
        %v1256 = vadd.f32 %v1147, %v1255
        %v1257 = vpop.f32.mrb[0].mxu0
        %v1258 = vpop.f32.mrb[0].mxu0
        %v1259 = vadd.f32 %v1147, %v1258
        %v1260 = vpop.f32.mrb[0].mxu0
        %1261 = vdwg.mxu0
        %v1262 = vmax.f32 %v1232, 0.0
        %v1263 = vmax.f32 %v1235, 0.0
        %v1264 = vmax.f32 %v1240, 0.0
        %v1265 = vmax.f32 %v1243, 0.0
        %v1266 = vmax.f32 %v1248, 0.0
        %v1267 = vmax.f32 %v1251, 0.0
        %v1268 = vmax.f32 %v1256, 0.0
        %v1269 = vmax.f32 %v1259, 0.0
        %v1270 = vld [vmem:[#allocation10] sm:$0xf]
        %v1271 = vld [vmem:[#allocation10 + $0x4] sm:$0xf]
        %v1272 = vld [vmem:[#allocation10 + $0x8] sm:$0xf]
        %v1273 = vld [vmem:[#allocation10 + $0xc] sm:$0xf]
        %v1274 = vld [vmem:[#allocation10 + $0x10] sm:$0xf]
        %v1275 = vld [vmem:[#allocation10 + $0x14] sm:$0xf]
        %v1276 = vld [vmem:[#allocation10 + $0x18] sm:$0xf]
        %v1277 = vld [vmem:[#allocation10 + $0x1c] sm:$0xf]
        %v1278 = vld [vmem:[#allocation10 + $0x20] sm:$0xf]
        %v1279 = vld [vmem:[#allocation10 + $0x24] sm:$0xf]
        %v1280 = vld [vmem:[#allocation10 + $0x28] sm:$0xf]
        %v1281 = vld [vmem:[#allocation10 + $0x2c] sm:$0xf]
        %v1282 = vld [vmem:[#allocation10 + $0x30] sm:$0xf]
        %v1283 = vld [vmem:[#allocation10 + $0x34] sm:$0xf]
        %v1284 = vld [vmem:[#allocation10 + $0x38] sm:$0xf]
        %v1285 = vld [vmem:[#allocation10 + $0x3c] sm:$0xf]
        %v1286 = vld [vmem:[%s10] sm:$0xf]
        %v1287 = vld [vmem:[%s10 + $0x4] sm:$0xf]
        %v1288 = vld [vmem:[%s10 + $0x8] sm:$0xf]
        %v1289 = vld [vmem:[%s10 + $0xc] sm:$0xf]
        %v1290 = vld [vmem:[%s10 + $0x10] sm:$0xf]
        %v1291 = vld [vmem:[%s10 + $0x14] sm:$0xf]
        %v1292 = vld [vmem:[%s10 + $0x18] sm:$0xf]
        %v1293 = vld [vmem:[%s10 + $0x1c] sm:$0xf]
        %v1294 = vld [vmem:[%s11] sm:$0x1]
        %v1295 = vpack.c.bf16 %v1263, %v1262
        %v1296 = vpack.c.bf16 %v1265, %v1264
        %v1297 = vpack.c.bf16 %v1267, %v1266
        %v1298 = vpack.c.bf16 %v1269, %v1268
        %v1307 = vunpack.c.l.b16 %v1286
        %v1308 = vunpack.c.l.b16 %v1287
        %v1309 = vunpack.c.l.b16 %v1288
        %v1310 = vunpack.c.l.b16 %v1289
        %v1311 = vunpack.c.l.b16 %v1290
        %v1312 = vunpack.c.l.b16 %v1291
        %v1313 = vunpack.c.l.b16 %v1292
        %v1314 = vunpack.c.l.b16 %v1293
        %v1315 = vpack.c.b16 %v1308, %v1307
        %v1316 = vpack.c.b16 %v1310, %v1309
        %v1317 = vpack.c.b16 %v1312, %v1311
        %v1318 = vpack.c.b16 %v1314, %v1313
        %1323 = vmatprep.subr.bf16.mxu0 0
        %1324 = vmatpush1.bf16.msra.mxu0 %v1315
        %1325 = vmatprep.subr.bf16.mxu0 0
        %1326 = vmatpush1.bf16.msra.mxu0 %v1316
        %1327 = vmatprep.subr.bf16.mxu0 0
        %1328 = vmatpush1.bf16.msra.mxu0 %v1317
        %1329 = vmatprep.subr.bf16.mxu0 0
        %1330 = vmatpush1.bf16.msra.mxu0 %v1318
        %1331 = vmatprep.subr.bf16.mxu0 0
        %1332 = vmatpush1.bf16.msra.mxu0 0
        %1333 = vmatprep.subr.bf16.mxu0 0
        %1334 = vmatpush1.bf16.msra.mxu0 0
        %1335 = vmatprep.subr.bf16.mxu0 0
        %1336 = vmatpush1.bf16.msra.mxu0 0
        %1337 = vmatprep.subr.bf16.mxu0 0
        %1338 = vmatpush1.bf16.msra.mxu0 0
        %1339 = vmatprep.subr.bf16.mxu0 0
        %1340 = vmatpush1.bf16.msra.mxu0 0
        %1341 = vmatprep.subr.bf16.mxu0 0
        %1342 = vmatpush1.bf16.msra.mxu0 0
        %1343 = vmatprep.subr.bf16.mxu0 0
        %1344 = vmatpush1.bf16.msra.mxu0 0
        %1345 = vmatprep.subr.bf16.mxu0 0
        %1346 = vmatpush1.bf16.msra.mxu0 0
        %1347 = vmatprep.subr.bf16.mxu0 0
        %1348 = vmatpush1.bf16.msra.mxu0 0
        %1349 = vmatprep.subr.bf16.mxu0 0
        %1350 = vmatpush1.bf16.msra.mxu0 0
        %1351 = vmatprep.subr.bf16.mxu0 0
        %1352 = vmatpush1.bf16.msra.mxu0 0
        %1353 = vmatprep.subr.bf16.mxu0 0
        %1354 = vmatpush1.bf16.msra.mxu0 0
        %1355 = vmatprep.mubr.bf16.mxu0 0
        %1356 = vmatmul.mubr.bf16.gmra.mrb[0].mxu0 %v742
        %v1357 = vpop.f32.mrb[0].mxu0
        %v1358 = vadd.f32 0.0, %v1357
        %v1359 = vpop.f32.mrb[0].mxu0
        %v1360 = vpop.f32.mrb[0].mxu0
        %v1361 = vadd.f32 0.0, %v1360
        %v1362 = vpop.f32.mrb[0].mxu0
        %1363 = vmatprep.mubr.bf16.mxu0 0
        %1364 = vmatmul.mubr.bf16.gmra.mrb[0].mxu0 %v745
        %v1365 = vpop.f32.mrb[0].mxu0
        %v1366 = vadd.f32 0.0, %v1365
        %v1367 = vpop.f32.mrb[0].mxu0
        %v1368 = vpop.f32.mrb[0].mxu0
        %v1369 = vadd.f32 0.0, %v1368
        %v1370 = vpop.f32.mrb[0].mxu0
        %1371 = vmatprep.mubr.bf16.mxu0 0
        %1372 = vmatmul.mubr.bf16.gmra.mrb[0].mxu0 %v748
        %v1373 = vpop.f32.mrb[0].mxu0
        %v1374 = vadd.f32 0.0, %v1373
        %v1375 = vpop.f32.mrb[0].mxu0
        %v1376 = vpop.f32.mrb[0].mxu0
        %v1377 = vadd.f32 0.0, %v1376
        %v1378 = vpop.f32.mrb[0].mxu0
        %1379 = vmatprep.mubr.bf16.mxu0 0
        %1380 = vmatmul.mubr.bf16.gmra.mrb[0].mxu0 %v751
        %v1381 = vpop.f32.mrb[0].mxu0
        %v1382 = vadd.f32 0.0, %v1381
        %v1383 = vpop.f32.mrb[0].mxu0
        %v1384 = vpop.f32.mrb[0].mxu0
        %v1385 = vadd.f32 0.0, %v1384
        %v1386 = vpop.f32.mrb[0].mxu0
        %1387 = vdwg.mxu0
        %v1404 = vunpack.c.l.b16 %v1270
        %v1405 = vunpack.c.l.b16 %v1271
        %v1406 = vunpack.c.l.b16 %v1272
        %v1407 = vunpack.c.l.b16 %v1273
        %v1408 = vunpack.c.l.b16 %v1274
        %v1409 = vunpack.c.l.b16 %v1275
        %v1410 = vunpack.c.l.b16 %v1276
        %v1411 = vunpack.c.l.b16 %v1277
        %v1412 = vunpack.c.l.b16 %v1278
        %v1413 = vunpack.c.l.b16 %v1279
        %v1414 = vunpack.c.l.b16 %v1280
        %v1415 = vunpack.c.l.b16 %v1281
        %v1416 = vunpack.c.l.b16 %v1282
        %v1417 = vunpack.c.l.b16 %v1283
        %v1418 = vunpack.c.l.b16 %v1284
        %v1419 = vunpack.c.l.b16 %v1285
        %v1420 = vpack.c.b16 %v1405, %v1404
        %v1421 = vpack.c.b16 %v1407, %v1406
        %v1422 = vpack.c.b16 %v1409, %v1408
        %v1423 = vpack.c.b16 %v1411, %v1410
        %v1424 = vpack.c.b16 %v1413, %v1412
        %v1425 = vpack.c.b16 %v1415, %v1414
        %v1426 = vpack.c.b16 %v1417, %v1416
        %v1427 = vpack.c.b16 %v1419, %v1418
        %1436 = vmatprep.subr.bf16.mxu0 0
        %1437 = vmatpush1.bf16.msra.mxu0 %v1420
        %1438 = vmatprep.subr.bf16.mxu0 0
        %1439 = vmatpush1.bf16.msra.mxu0 %v1421
        %1440 = vmatprep.subr.bf16.mxu0 0
        %1441 = vmatpush1.bf16.msra.mxu0 %v1422
        %1442 = vmatprep.subr.bf16.mxu0 0
        %1443 = vmatpush1.bf16.msra.mxu0 %v1423
        %1444 = vmatprep.subr.bf16.mxu0 0
        %1445 = vmatpush1.bf16.msra.mxu0 %v1424
        %1446 = vmatprep.subr.bf16.mxu0 0
        %1447 = vmatpush1.bf16.msra.mxu0 %v1425
        %1448 = vmatprep.subr.bf16.mxu0 0
        %1449 = vmatpush1.bf16.msra.mxu0 %v1426
        %1450 = vmatprep.subr.bf16.mxu0 0
        %1451 = vmatpush1.bf16.msra.mxu0 %v1427
        %1452 = vmatprep.subr.bf16.mxu0 0
        %1453 = vmatpush1.bf16.msra.mxu0 0
        %1454 = vmatprep.subr.bf16.mxu0 0
        %1455 = vmatpush1.bf16.msra.mxu0 0
        %1456 = vmatprep.subr.bf16.mxu0 0
        %1457 = vmatpush1.bf16.msra.mxu0 0
        %1458 = vmatprep.subr.bf16.mxu0 0
        %1459 = vmatpush1.bf16.msra.mxu0 0
        %1460 = vmatprep.subr.bf16.mxu0 0
        %1461 = vmatpush1.bf16.msra.mxu0 0
        %1462 = vmatprep.subr.bf16.mxu0 0
        %1463 = vmatpush1.bf16.msra.mxu0 0
        %1464 = vmatprep.subr.bf16.mxu0 0
        %1465 = vmatpush1.bf16.msra.mxu0 0
        %1466 = vmatprep.subr.bf16.mxu0 0
        %1467 = vmatpush1.bf16.msra.mxu0 0
        %1468 = vmatprep.mubr.bf16.mxu0 0
        %1469 = vmatmul.mubr.bf16.gmra.mrb[0].mxu0 %v1295
        %v1470 = vpop.f32.mrb[0].mxu0
        %v1471 = vadd.f32 %v1358, %v1470
        %v1472 = vpop.f32.mrb[0].mxu0
        %v1473 = vpop.f32.mrb[0].mxu0
        %v1474 = vadd.f32 %v1361, %v1473
        %v1475 = vpop.f32.mrb[0].mxu0
        %1476 = vmatprep.mubr.bf16.mxu0 0
        %1477 = vmatmul.mubr.bf16.gmra.mrb[0].mxu0 %v1296
        %v1478 = vpop.f32.mrb[0].mxu0
        %v1479 = vadd.f32 %v1366, %v1478
        %v1480 = vpop.f32.mrb[0].mxu0
        %v1481 = vpop.f32.mrb[0].mxu0
        %v1482 = vadd.f32 %v1369, %v1481
        %v1483 = vpop.f32.mrb[0].mxu0
        %1484 = vmatprep.mubr.bf16.mxu0 0
        %1485 = vmatmul.mubr.bf16.gmra.mrb[0].mxu0 %v1297
        %v1486 = vpop.f32.mrb[0].mxu0
        %v1487 = vadd.f32 %v1374, %v1486
        %v1488 = vpop.f32.mrb[0].mxu0
        %v1489 = vpop.f32.mrb[0].mxu0
        %v1490 = vadd.f32 %v1377, %v1489
        %v1491 = vpop.f32.mrb[0].mxu0
        %1492 = vmatprep.mubr.bf16.mxu0 0
        %1493 = vmatmul.mubr.bf16.gmra.mrb[0].mxu0 %v1298
        %v1494 = vpop.f32.mrb[0].mxu0
        %v1495 = vadd.f32 %v1382, %v1494
        %v1496 = vpop.f32.mrb[0].mxu0
        %v1497 = vpop.f32.mrb[0].mxu0
        %v1498 = vadd.f32 %v1385, %v1497
        %v1499 = vpop.f32.mrb[0].mxu0
        %1500 = vdwg.mxu0
        %v1502 = vlaneseq
        %v1503 = vshrl.u32 %v1502, 7
        %v1504 = vsub.s32 0, %v1503
        %v1505 = vrot.slane %v1294, %v1504
        %v1507 = vadd.f32 %v1471, %v1505
        %v1508 = vadd.f32 %v1474, %v1505
        %v1509 = vadd.f32 %v1479, %v1505
        %v1510 = vadd.f32 %v1482, %v1505
        %v1511 = vadd.f32 %v1487, %v1505
        %v1512 = vadd.f32 %v1490, %v1505
        %v1513 = vadd.f32 %v1495, %v1505
        %v1514 = vadd.f32 %v1498, %v1505
        %v1515 = vmax.f32 %v1507, 0.0
        %v1516 = vmax.f32 %v1508, 0.0
        %v1517 = vmax.f32 %v1509, 0.0
        %v1518 = vmax.f32 %v1510, 0.0
        %v1519 = vmax.f32 %v1511, 0.0
        %v1520 = vmax.f32 %v1512, 0.0
        %v1521 = vmax.f32 %v1513, 0.0
        %v1522 = vmax.f32 %v1514, 0.0
        %v1523 = vld [vmem:[#allocation12] sm:$0xf]
        %v1524 = vld [vmem:[#allocation12 + $0x4] sm:$0xf]
        %v1525 = vld [vmem:[#allocation12 + $0x8] sm:$0xf]
        %v1526 = vld [vmem:[#allocation12 + $0xc] sm:$0xf]
        %v1527 = vld [vmem:[#allocation12 + $0x10] sm:$0xf]
        %v1528 = vld [vmem:[#allocation12 + $0x14] sm:$0xf]
        %v1529 = vld [vmem:[#allocation12 + $0x18] sm:$0xf]
        %v1530 = vld [vmem:[#allocation12 + $0x1c] sm:$0xf]
        %v1531 = vld [vmem:[#allocation12 + $0x20] sm:$0xf]
        %v1532 = vld [vmem:[#allocation12 + $0x24] sm:$0xf]
        %v1533 = vld [vmem:[#allocation12 + $0x28] sm:$0xf]
        %v1534 = vld [vmem:[#allocation12 + $0x2c] sm:$0xf]
        %v1535 = vld [vmem:[#allocation12 + $0x30] sm:$0xf]
        %v1536 = vld [vmem:[#allocation12 + $0x34] sm:$0xf]
        %v1537 = vld [vmem:[#allocation12 + $0x38] sm:$0xf]
        %v1538 = vld [vmem:[#allocation12 + $0x3c] sm:$0xf]
        %v1539 = vld [vmem:[%s13] sm:$0x1]
        %v1540 = vpack.c.bf16 %v1516, %v1515
        %v1541 = vpack.c.bf16 %v1518, %v1517
        %v1542 = vpack.c.bf16 %v1520, %v1519
        %v1543 = vpack.c.bf16 %v1522, %v1521
        %v1545 = vlaneseq
        %v1546 = vshrl.u32 %v1545, 7
        %v1547 = vsub.s32 0, %v1546
        %v1548 = vrot.slane %v1539, %v1547
        %v1566 = vunpack.c.l.b16 %v1523
        %v1567 = vunpack.c.l.b16 %v1524
        %v1568 = vunpack.c.l.b16 %v1525
        %v1569 = vunpack.c.l.b16 %v1526
        %v1570 = vunpack.c.l.b16 %v1527
        %v1571 = vunpack.c.l.b16 %v1528
        %v1572 = vunpack.c.l.b16 %v1529
        %v1573 = vunpack.c.l.b16 %v1530
        %v1574 = vunpack.c.l.b16 %v1531
        %v1575 = vunpack.c.l.b16 %v1532
        %v1576 = vunpack.c.l.b16 %v1533
        %v1577 = vunpack.c.l.b16 %v1534
        %v1578 = vunpack.c.l.b16 %v1535
        %v1579 = vunpack.c.l.b16 %v1536
        %v1580 = vunpack.c.l.b16 %v1537
        %v1581 = vunpack.c.l.b16 %v1538
        %v1582 = vpack.c.b16 %v1567, %v1566
        %v1583 = vpack.c.b16 %v1569, %v1568
        %v1584 = vpack.c.b16 %v1571, %v1570
        %v1585 = vpack.c.b16 %v1573, %v1572
        %v1586 = vpack.c.b16 %v1575, %v1574
        %v1587 = vpack.c.b16 %v1577, %v1576
        %v1588 = vpack.c.b16 %v1579, %v1578
        %v1589 = vpack.c.b16 %v1581, %v1580
        %1598 = vmatprep.subr.bf16.mxu0 0
        %1599 = vmatpush1.bf16.msra.mxu0 %v1582
        %1600 = vmatprep.subr.bf16.mxu0 0
        %1601 = vmatpush1.bf16.msra.mxu0 %v1583
        %1602 = vmatprep.subr.bf16.mxu0 0
        %1603 = vmatpush1.bf16.msra.mxu0 %v1584
        %1604 = vmatprep.subr.bf16.mxu0 0
        %1605 = vmatpush1.bf16.msra.mxu0 %v1585
        %1606 = vmatprep.subr.bf16.mxu0 0
        %1607 = vmatpush1.bf16.msra.mxu0 %v1586
        %1608 = vmatprep.subr.bf16.mxu0 0
        %1609 = vmatpush1.bf16.msra.mxu0 %v1587
        %1610 = vmatprep.subr.bf16.mxu0 0
        %1611 = vmatpush1.bf16.msra.mxu0 %v1588
        %1612 = vmatprep.subr.bf16.mxu0 0
        %1613 = vmatpush1.bf16.msra.mxu0 %v1589
        %1614 = vmatprep.subr.bf16.mxu0 0
        %1615 = vmatpush1.bf16.msra.mxu0 0
        %1616 = vmatprep.subr.bf16.mxu0 0
        %1617 = vmatpush1.bf16.msra.mxu0 0
        %1618 = vmatprep.subr.bf16.mxu0 0
        %1619 = vmatpush1.bf16.msra.mxu0 0
        %1620 = vmatprep.subr.bf16.mxu0 0
        %1621 = vmatpush1.bf16.msra.mxu0 0
        %1622 = vmatprep.subr.bf16.mxu0 0
        %1623 = vmatpush1.bf16.msra.mxu0 0
        %1624 = vmatprep.subr.bf16.mxu0 0
        %1625 = vmatpush1.bf16.msra.mxu0 0
        %1626 = vmatprep.subr.bf16.mxu0 0
        %1627 = vmatpush1.bf16.msra.mxu0 0
        %1628 = vmatprep.subr.bf16.mxu0 0
        %1629 = vmatpush1.bf16.msra.mxu0 0
        %1630 = vmatprep.mubr.bf16.mxu0 0
        %1631 = vmatmul.mubr.bf16.gmra.mrb[0].mxu0 %v1540
        %v1632 = vpop.f32.mrb[0].mxu0
        %v1633 = vadd.f32 %v1548, %v1632
        %v1634 = vpop.f32.mrb[0].mxu0
        %v1635 = vpop.f32.mrb[0].mxu0
        %v1636 = vadd.f32 %v1548, %v1635
        %v1637 = vpop.f32.mrb[0].mxu0
        %1638 = vmatprep.mubr.bf16.mxu0 0
        %1639 = vmatmul.mubr.bf16.gmra.mrb[0].mxu0 %v1541
        %v1640 = vpop.f32.mrb[0].mxu0
        %v1641 = vadd.f32 %v1548, %v1640
        %v1642 = vpop.f32.mrb[0].mxu0
        %v1643 = vpop.f32.mrb[0].mxu0
        %v1644 = vadd.f32 %v1548, %v1643
        %v1645 = vpop.f32.mrb[0].mxu0
        %1646 = vmatprep.mubr.bf16.mxu0 0
        %1647 = vmatmul.mubr.bf16.gmra.mrb[0].mxu0 %v1542
        %v1648 = vpop.f32.mrb[0].mxu0
        %v1649 = vadd.f32 %v1548, %v1648
        %v1650 = vpop.f32.mrb[0].mxu0
        %v1651 = vpop.f32.mrb[0].mxu0
        %v1652 = vadd.f32 %v1548, %v1651
        %v1653 = vpop.f32.mrb[0].mxu0
        %1654 = vmatprep.mubr.bf16.mxu0 0
        %1655 = vmatmul.mubr.bf16.gmra.mrb[0].mxu0 %v1543
        %v1656 = vpop.f32.mrb[0].mxu0
        %v1657 = vadd.f32 %v1548, %v1656
        %v1658 = vpop.f32.mrb[0].mxu0
        %v1659 = vpop.f32.mrb[0].mxu0
        %v1660 = vadd.f32 %v1548, %v1659
        %v1661 = vpop.f32.mrb[0].mxu0
        %1662 = vdwg.mxu0
        %v1663 = vmax.f32 %v1633, 0.0
        %v1664 = vmax.f32 %v1636, 0.0
        %v1665 = vmax.f32 %v1641, 0.0
        %v1666 = vmax.f32 %v1644, 0.0
        %v1667 = vmax.f32 %v1649, 0.0
        %v1668 = vmax.f32 %v1652, 0.0
        %v1669 = vmax.f32 %v1657, 0.0
        %v1670 = vmax.f32 %v1660, 0.0
        %v1671 = vld [vmem:[#allocation13] sm:$0xf]
        %v1672 = vld [vmem:[#allocation13 + $0x4] sm:$0xf]
        %v1673 = vld [vmem:[#allocation13 + $0x8] sm:$0xf]
        %v1674 = vld [vmem:[#allocation13 + $0xc] sm:$0xf]
        %v1675 = vld [vmem:[#allocation13 + $0x10] sm:$0xf]
        %v1676 = vld [vmem:[#allocation13 + $0x14] sm:$0xf]
        %v1677 = vld [vmem:[#allocation13 + $0x18] sm:$0xf]
        %v1678 = vld [vmem:[#allocation13 + $0x1c] sm:$0xf]
        %v1679 = vld [vmem:[#allocation13 + $0x20] sm:$0xf]
        %v1680 = vld [vmem:[#allocation13 + $0x24] sm:$0xf]
        %v1681 = vld [vmem:[#allocation13 + $0x28] sm:$0xf]
        %v1682 = vld [vmem:[#allocation13 + $0x2c] sm:$0xf]
        %v1683 = vld [vmem:[#allocation13 + $0x30] sm:$0xf]
        %v1684 = vld [vmem:[#allocation13 + $0x34] sm:$0xf]
        %v1685 = vld [vmem:[#allocation13 + $0x38] sm:$0xf]
        %v1686 = vld [vmem:[#allocation13 + $0x3c] sm:$0xf]
        %v1687 = vld [vmem:[%s15] sm:$0x1]
        %v1688 = vpack.c.bf16 %v1664, %v1663
        %v1689 = vpack.c.bf16 %v1666, %v1665
        %v1690 = vpack.c.bf16 %v1668, %v1667
        %v1691 = vpack.c.bf16 %v1670, %v1669
        %v1693 = vlaneseq
        %v1694 = vshrl.u32 %v1693, 7
        %v1695 = vsub.s32 0, %v1694
        %v1696 = vrot.slane %v1687, %v1695
        %v1714 = vunpack.c.l.b16 %v1671
        %v1715 = vunpack.c.l.b16 %v1672
        %v1716 = vunpack.c.l.b16 %v1673
        %v1717 = vunpack.c.l.b16 %v1674
        %v1718 = vunpack.c.l.b16 %v1675
        %v1719 = vunpack.c.l.b16 %v1676
        %v1720 = vunpack.c.l.b16 %v1677
        %v1721 = vunpack.c.l.b16 %v1678
        %v1722 = vunpack.c.l.b16 %v1679
        %v1723 = vunpack.c.l.b16 %v1680
        %v1724 = vunpack.c.l.b16 %v1681
        %v1725 = vunpack.c.l.b16 %v1682
        %v1726 = vunpack.c.l.b16 %v1683
        %v1727 = vunpack.c.l.b16 %v1684
        %v1728 = vunpack.c.l.b16 %v1685
        %v1729 = vunpack.c.l.b16 %v1686
        %v1730 = vpack.c.b16 %v1715, %v1714
        %v1731 = vpack.c.b16 %v1717, %v1716
        %v1732 = vpack.c.b16 %v1719, %v1718
        %v1733 = vpack.c.b16 %v1721, %v1720
        %v1734 = vpack.c.b16 %v1723, %v1722
        %v1735 = vpack.c.b16 %v1725, %v1724
        %v1736 = vpack.c.b16 %v1727, %v1726
        %v1737 = vpack.c.b16 %v1729, %v1728
        %1746 = vmatprep.subr.bf16.mxu0 0
        %1747 = vmatpush1.bf16.msra.mxu0 %v1730
        %1748 = vmatprep.subr.bf16.mxu0 0
        %1749 = vmatpush1.bf16.msra.mxu0 %v1731
        %1750 = vmatprep.subr.bf16.mxu0 0
        %1751 = vmatpush1.bf16.msra.mxu0 %v1732
        %1752 = vmatprep.subr.bf16.mxu0 0
        %1753 = vmatpush1.bf16.msra.mxu0 %v1733
        %1754 = vmatprep.subr.bf16.mxu0 0
        %1755 = vmatpush1.bf16.msra.mxu0 %v1734
        %1756 = vmatprep.subr.bf16.mxu0 0
        %1757 = vmatpush1.bf16.msra.mxu0 %v1735
        %1758 = vmatprep.subr.bf16.mxu0 0
        %1759 = vmatpush1.bf16.msra.mxu0 %v1736
        %1760 = vmatprep.subr.bf16.mxu0 0
        %1761 = vmatpush1.bf16.msra.mxu0 %v1737
        %1762 = vmatprep.subr.bf16.mxu0 0
        %1763 = vmatpush1.bf16.msra.mxu0 0
        %1764 = vmatprep.subr.bf16.mxu0 0
        %1765 = vmatpush1.bf16.msra.mxu0 0
        %1766 = vmatprep.subr.bf16.mxu0 0
        %1767 = vmatpush1.bf16.msra.mxu0 0
        %1768 = vmatprep.subr.bf16.mxu0 0
        %1769 = vmatpush1.bf16.msra.mxu0 0
        %1770 = vmatprep.subr.bf16.mxu0 0
        %1771 = vmatpush1.bf16.msra.mxu0 0
        %1772 = vmatprep.subr.bf16.mxu0 0
        %1773 = vmatpush1.bf16.msra.mxu0 0
        %1774 = vmatprep.subr.bf16.mxu0 0
        %1775 = vmatpush1.bf16.msra.mxu0 0
        %1776 = vmatprep.subr.bf16.mxu0 0
        %1777 = vmatpush1.bf16.msra.mxu0 0
        %1778 = vmatprep.mubr.bf16.mxu0 0
        %1779 = vmatmul.mubr.bf16.gmra.mrb[0].mxu0 %v1688
        %v1780 = vpop.f32.mrb[0].mxu0
        %v1781 = vadd.f32 %v1696, %v1780
        %v1782 = vpop.f32.mrb[0].mxu0
        %v1783 = vpop.f32.mrb[0].mxu0
        %v1784 = vadd.f32 %v1696, %v1783
        %v1785 = vpop.f32.mrb[0].mxu0
        %1786 = vmatprep.mubr.bf16.mxu0 0
        %1787 = vmatmul.mubr.bf16.gmra.mrb[0].mxu0 %v1689
        %v1788 = vpop.f32.mrb[0].mxu0
        %v1789 = vadd.f32 %v1696, %v1788
        %v1790 = vpop.f32.mrb[0].mxu0
        %v1791 = vpop.f32.mrb[0].mxu0
        %v1792 = vadd.f32 %v1696, %v1791
        %v1793 = vpop.f32.mrb[0].mxu0
        %1794 = vmatprep.mubr.bf16.mxu0 0
        %1795 = vmatmul.mubr.bf16.gmra.mrb[0].mxu0 %v1690
        %v1796 = vpop.f32.mrb[0].mxu0
        %v1797 = vadd.f32 %v1696, %v1796
        %v1798 = vpop.f32.mrb[0].mxu0
        %v1799 = vpop.f32.mrb[0].mxu0
        %v1800 = vadd.f32 %v1696, %v1799
        %v1801 = vpop.f32.mrb[0].mxu0
        %1802 = vmatprep.mubr.bf16.mxu0 0
        %1803 = vmatmul.mubr.bf16.gmra.mrb[0].mxu0 %v1691
        %v1804 = vpop.f32.mrb[0].mxu0
        %v1805 = vadd.f32 %v1696, %v1804
        %v1806 = vpop.f32.mrb[0].mxu0
        %v1807 = vpop.f32.mrb[0].mxu0
        %v1808 = vadd.f32 %v1696, %v1807
        %v1809 = vpop.f32.mrb[0].mxu0
        %1810 = vdwg.mxu0
        %v1811 = vmax.f32 %v1781, 0.0
        %v1812 = vmax.f32 %v1784, 0.0
        %v1813 = vmax.f32 %v1789, 0.0
        %v1814 = vmax.f32 %v1792, 0.0
        %v1815 = vmax.f32 %v1797, 0.0
        %v1816 = vmax.f32 %v1800, 0.0
        %v1817 = vmax.f32 %v1805, 0.0
        %v1818 = vmax.f32 %v1808, 0.0
        %v1819 = vld [vmem:[%s16] sm:$0xf]
        %v1820 = vld [vmem:[%s16 + $0x4] sm:$0xf]
        %v1821 = vld [vmem:[%s16 + $0x8] sm:$0xf]
        %v1822 = vld [vmem:[%s16 + $0xc] sm:$0xf]
        %v1823 = vld [vmem:[%s16 + $0x10] sm:$0xf]
        %v1824 = vld [vmem:[%s16 + $0x14] sm:$0xf]
        %v1825 = vld [vmem:[%s16 + $0x18] sm:$0xf]
        %v1826 = vld [vmem:[%s16 + $0x1c] sm:$0xf]
        %v1827 = vld [vmem:[%s16 + $0x20] sm:$0xf]
        %v1828 = vld [vmem:[%s16 + $0x24] sm:$0xf]
        %v1829 = vld [vmem:[%s16 + $0x28] sm:$0xf]
        %v1830 = vld [vmem:[%s16 + $0x2c] sm:$0xf]
        %v1831 = vld [vmem:[%s16 + $0x30] sm:$0xf]
        %v1832 = vld [vmem:[%s16 + $0x34] sm:$0xf]
        %v1833 = vld [vmem:[%s16 + $0x38] sm:$0xf]
        %v1834 = vld [vmem:[%s16 + $0x3c] sm:$0xf]
        %v1835 = vld [vmem:[%s17] sm:$0x1]
        %v1836 = vpack.c.bf16 %v1812, %v1811
        %v1837 = vpack.c.bf16 %v1814, %v1813
        %v1838 = vpack.c.bf16 %v1816, %v1815
        %v1839 = vpack.c.bf16 %v1818, %v1817
        %v1841 = vlaneseq
        %v1842 = vshrl.u32 %v1841, 7
        %v1843 = vsub.s32 0, %v1842
        %v1844 = vrot.slane %v1835, %v1843
        %v1862 = vunpack.c.l.b16 %v1819
        %v1863 = vunpack.c.l.b16 %v1820
        %v1864 = vunpack.c.l.b16 %v1821
        %v1865 = vunpack.c.l.b16 %v1822
        %v1866 = vunpack.c.l.b16 %v1823
        %v1867 = vunpack.c.l.b16 %v1824
        %v1868 = vunpack.c.l.b16 %v1825
        %v1869 = vunpack.c.l.b16 %v1826
        %v1870 = vunpack.c.l.b16 %v1827
        %v1871 = vunpack.c.l.b16 %v1828
        %v1872 = vunpack.c.l.b16 %v1829
        %v1873 = vunpack.c.l.b16 %v1830
        %v1874 = vunpack.c.l.b16 %v1831
        %v1875 = vunpack.c.l.b16 %v1832
        %v1876 = vunpack.c.l.b16 %v1833
        %v1877 = vunpack.c.l.b16 %v1834
        %v1878 = vpack.c.b16 %v1863, %v1862
        %v1879 = vpack.c.b16 %v1865, %v1864
        %v1880 = vpack.c.b16 %v1867, %v1866
        %v1881 = vpack.c.b16 %v1869, %v1868
        %v1882 = vpack.c.b16 %v1871, %v1870
        %v1883 = vpack.c.b16 %v1873, %v1872
        %v1884 = vpack.c.b16 %v1875, %v1874
        %v1885 = vpack.c.b16 %v1877, %v1876
        %1894 = vmatprep.subr.bf16.mxu0 0
        %1895 = vmatpush1.bf16.msra.mxu0 %v1878
        %1896 = vmatprep.subr.bf16.mxu0 0
        %1897 = vmatpush1.bf16.msra.mxu0 %v1879
        %1898 = vmatprep.subr.bf16.mxu0 0
        %1899 = vmatpush1.bf16.msra.mxu0 %v1880
        %1900 = vmatprep.subr.bf16.mxu0 0
        %1901 = vmatpush1.bf16.msra.mxu0 %v1881
        %1902 = vmatprep.subr.bf16.mxu0 0
        %1903 = vmatpush1.bf16.msra.mxu0 %v1882
        %1904 = vmatprep.subr.bf16.mxu0 0
        %1905 = vmatpush1.bf16.msra.mxu0 %v1883
        %1906 = vmatprep.subr.bf16.mxu0 0
        %1907 = vmatpush1.bf16.msra.mxu0 %v1884
        %1908 = vmatprep.subr.bf16.mxu0 0
        %1909 = vmatpush1.bf16.msra.mxu0 %v1885
        %1910 = vmatprep.subr.bf16.mxu0 0
        %1911 = vmatpush1.bf16.msra.mxu0 0
        %1912 = vmatprep.subr.bf16.mxu0 0
        %1913 = vmatpush1.bf16.msra.mxu0 0
        %1914 = vmatprep.subr.bf16.mxu0 0
        %1915 = vmatpush1.bf16.msra.mxu0 0
        %1916 = vmatprep.subr.bf16.mxu0 0
        %1917 = vmatpush1.bf16.msra.mxu0 0
        %1918 = vmatprep.subr.bf16.mxu0 0
        %1919 = vmatpush1.bf16.msra.mxu0 0
        %1920 = vmatprep.subr.bf16.mxu0 0
        %1921 = vmatpush1.bf16.msra.mxu0 0
        %1922 = vmatprep.subr.bf16.mxu0 0
        %1923 = vmatpush1.bf16.msra.mxu0 0
        %1924 = vmatprep.subr.bf16.mxu0 0
        %1925 = vmatpush1.bf16.msra.mxu0 0
        %1926 = vmatprep.mubr.bf16.mxu0 0
        %1927 = vmatmul.mubr.bf16.gmra.mrb[0].mxu0 %v1836
        %v1928 = vpop.f32.mrb[0].mxu0
        %v1929 = vadd.f32 %v1844, %v1928
        %v1930 = vpop.f32.mrb[0].mxu0
        %v1931 = vpop.f32.mrb[0].mxu0
        %v1932 = vadd.f32 %v1844, %v1931
        %v1933 = vpop.f32.mrb[0].mxu0
        %1934 = vmatprep.mubr.bf16.mxu0 0
        %1935 = vmatmul.mubr.bf16.gmra.mrb[0].mxu0 %v1837
        %v1936 = vpop.f32.mrb[0].mxu0
        %v1937 = vadd.f32 %v1844, %v1936
        %v1938 = vpop.f32.mrb[0].mxu0
        %v1939 = vpop.f32.mrb[0].mxu0
        %v1940 = vadd.f32 %v1844, %v1939
        %v1941 = vpop.f32.mrb[0].mxu0
        %1942 = vmatprep.mubr.bf16.mxu0 0
        %1943 = vmatmul.mubr.bf16.gmra.mrb[0].mxu0 %v1838
        %v1944 = vpop.f32.mrb[0].mxu0
        %v1945 = vadd.f32 %v1844, %v1944
        %v1946 = vpop.f32.mrb[0].mxu0
        %v1947 = vpop.f32.mrb[0].mxu0
        %v1948 = vadd.f32 %v1844, %v1947
        %v1949 = vpop.f32.mrb[0].mxu0
        %1950 = vmatprep.mubr.bf16.mxu0 0
        %1951 = vmatmul.mubr.bf16.gmra.mrb[0].mxu0 %v1839
        %v1952 = vpop.f32.mrb[0].mxu0
        %v1953 = vadd.f32 %v1844, %v1952
        %v1954 = vpop.f32.mrb[0].mxu0
        %v1955 = vpop.f32.mrb[0].mxu0
        %v1956 = vadd.f32 %v1844, %v1955
        %v1957 = vpop.f32.mrb[0].mxu0
        %1958 = vdwg.mxu0
        %vm1959 = vcmask 31744
        %1960 = vst.msk [vmem:[%s686] sm:$0xff] %vm1959, %v1929
        %1961 = vst.msk [vmem:[%s686 + $0x8] sm:$0xff] %vm1959, %v1932
        %1962 = vst.msk [vmem:[%s686 + $0x10] sm:$0xff] %vm1959, %v1937
        %1963 = vst.msk [vmem:[%s686 + $0x18] sm:$0xff] %vm1959, %v1940
        %1964 = vst.msk [vmem:[%s686 + $0x20] sm:$0xff] %vm1959, %v1945
        %1965 = vst.msk [vmem:[%s686 + $0x28] sm:$0xff] %vm1959, %v1948
        %1966 = vst.msk [vmem:[%s686 + $0x30] sm:$0xff] %vm1959, %v1953
        %1967 = vst.msk [vmem:[%s686 + $0x38] sm:$0xff] %vm1959, %v1956
        %s1968 = smul.u32 8, %s34
        %p1969 = scmp.lt.s32.totalorder %s1968, 15
        %s1970 = scalar_select %p1969, %s1968, 15
        %s1971 = smul.addr %s1970, 8
        %s1972 = scalar_lea.vmem %s18, %s1971
        // Predicated region
        $region125: #{tpu_custom_call.1} parent=91 // pred_check
          %p1973 = pneg %p435
        $region126: #{tpu_custom_call.1} parent=91 // pred_check_branch
          %1975 = sbr.rel (%p1973) target = $region128
        $region127: #{tpu_custom_call.1} parent=91 // pred_region
          %s1976 = smul.u32 8, %s34
        $region128: #{tpu_custom_call.1} parent=91 // pred_fallthru
          _
      $region92: #{tpu_custom_call.1} parent=5 // pred_fallthru
        _
      %p1977 = scmp.le.s32.totalorder 2, %s29
      // Predicated region
      $region129: #{tpu_custom_call.1} parent=5 // pred_check
        %p1978 = pneg %p1977
      $region130: #{tpu_custom_call.1} parent=5 // pred_check_branch
        %1980 = sbr.rel (%p1978) target = $region132
      $region131: #{tpu_custom_call.1} parent=5 // pred_region
        %s1981 = ssub.s32 %s29, 2
        // Predicated region
        $region133: #{tpu_custom_call.1} parent=131 // pred_check
          %p1982 = pneg %p441
        $region134: #{tpu_custom_call.1} parent=131 // pred_check_branch
          %1984 = sbr.rel (%p1982) target = $region136
        $region135: #{tpu_custom_call.1} parent=131 // pred_region
          %s1985 = smul.u32 8, %s35
          %p1986 = scmp.lt.s32.totalorder %s1985, 15
          %s1987 = scalar_select %p1986, %s1985, 15
          %s1988 = smul.addr %s1987, 8
          %s1989 = scalar_lea.vmem %s18, %s1988
        $region136: #{tpu_custom_call.1} parent=131 // pred_fallthru
          _
      $region132: #{tpu_custom_call.1} parent=5 // pred_fallthru
        _
    $region6: #{tpu_custom_call.1} parent=1 // loop_footer
      %s33 = sadd.s32 1, %s29
    $region7: #{tpu_custom_call.1} parent=1 // loop_footer_branch
      %28 = sbr.rel target = $region3
    $region8: #{tpu_custom_call.1} parent=1 // loop_exit
      _
    %1990 = vsyncpa [#allocation3], 1
    %s1991 = scalar_lea.sflag [#allocation3], 1
    %1992 = vsyncpa %s1991, 1
    %1993 = vsyncpa [#allocation5], 1
    %1994 = vsyncpa [#allocation8], 1
    %1995 = vsyncpa [#allocation11], 1
    %1996 = vsyncpa [#allocation14], 1

// kernel: tpu_custom_call.1
$region0: #{tpu_custom_call.1}
  #allocation0 [shape = 'u32[]', space=smem, size = 0x4, offset = 0x4, fixed_abs, tag = 'smem constant byte address 0x4 - core index']
  #allocation1 [shape = 'u32[144,128]{1,0:T(1,128)}', space=vmem, size = 0x12000, scoped, tag = 'internal scratch']
  %s0 = inlined_call_operand.vmem [shape: f32[128,64], index: 0, kind: input, shape index: {}]
  %s1 = inlined_call_operand.hbm [shape: bf16[64,128], index: 1, kind: input, shape index: {}]
  %s2 = inlined_call_operand.hbm [shape: f32[1,128], index: 2, kind: input, shape index: {}]
  %s3 = inlined_call_operand.vmem [shape: bf16[128,128], index: 3, kind: input, shape index: {}]
  %s4 = inlined_call_operand.hbm [shape: f32[1,128], index: 4, kind: input, shape index: {}]
  %s5 = inlined_call_operand.vmem [shape: bf16[128,128], index: 5, kind: input, shape index: {}]
  %s6 = inlined_call_operand.hbm [shape: f32[1,128], index: 6, kind: input, shape index: {}]
  %s7 = inlined_call_operand.vmem [shape: bf16[128,128], index: 7, kind: input, shape index: {}]
  %s8 = inlined_call_operand.hbm [shape: f32[1,128], index: 8, kind: input, shape index: {}]
  %s9 = inlined_call_operand.hbm [shape: bf16[128,128], index: 9, kind: input, shape index: {}]
  %s10 = inlined_call_operand.vmem [shape: bf16[64,128], index: 10, kind: input, shape index: {}]
  %s11 = inlined_call_operand.vmem [shape: f32[1,128], index: 11, kind: input, shape index: {}]
  %s12 = inlined_call_operand.hbm [shape: bf16[128,128], index: 12, kind: input, shape index: {}]
  %s13 = inlined_call_operand.vmem [shape: f32[1,128], index: 13, kind: input, shape index: {}]
  %s14 = inlined_call_operand.hbm [shape: bf16[128,128], index: 14, kind: input, shape index: {}]
  %s15 = inlined_call_operand.vmem [shape: f32[1,128], index: 15, kind: input, shape index: {}]
  %s16 = inlined_call_operand.vmem [shape: bf16[128,4], index: 16, kind: input, shape index: {}]
  %s17 = inlined_call_operand.vmem [shape: f32[1,4], index: 17, kind: input, shape index: {}]
  %s18 = inlined_call_operand.vmem [shape: f32[128,4], index: 18, kind: output, shape index: {}]
  %s19 = sld [smem:[#allocation0]]
  $region137: #{tpu_custom_call.1} parent=0
    _
  %s21 = ssub.s32 1, %s19
  %s22 = scalar_select 0, %s21, %s19
  $region1: #{tpu_custom_call.1} parent=0
    #allocation2 [shape = 'u8[16384]{0}', space=vmem, size = 0x4000, scoped, tag = 'input window, operand 1, single buffered']
    #allocation3 [shape = 's32[2]{0}', space=sflag, size = 0x8, scoped, tag = 'scoped memory for tpu_custom_call.1']
    #allocation4 [shape = 'u8[512]{0}', space=vmem, size = 0x400, scoped, tag = 'input window, operand 2, single buffered']
    #allocation5 [shape = 's32[1]{0}', space=sflag, size = 0x4, scoped, tag = 'scoped memory for tpu_custom_call.1']
    #allocation6 [shape = 'u8[512]{0}', space=vmem, size = 0x400, scoped, tag = 'input window, operand 4, single buffered']
    #allocation7 [shape = 'u8[512]{0}', space=vmem, size = 0x400, scoped, tag = 'input window, operand 6, single buffered']
    #allocation8 [shape = 's32[1]{0}', space=sflag, size = 0x4, scoped, tag = 'scoped memory for tpu_custom_call.1']
    #allocation9 [shape = 'u8[512]{0}', space=vmem, size = 0x400, scoped, tag = 'input window, operand 8, single buffered']
    #allocation10 [shape = 'u8[32768]{0}', space=vmem, size = 0x8000, scoped, tag = 'input window, operand 9, single buffered']
    #allocation11 [shape = 's32[1]{0}', space=sflag, size = 0x4, scoped, tag = 'scoped memory for tpu_custom_call.1']
    #allocation12 [shape = 'u8[32768]{0}', space=vmem, size = 0x8000, scoped, tag = 'input window, operand 12, single buffered']
    #allocation13 [shape = 'u8[32768]{0}', space=vmem, size = 0x8000, scoped, tag = 'input window, operand 14, single buffered']
    #allocation14 [shape = 's32[1]{0}', space=sflag, size = 0x4, scoped, tag = 'scoped memory for tpu_custom_call.1']
    %23 = vsyncpa [#allocation3], 0
    %24 = vsyncpa [#allocation5], 0
    %25 = vsyncpa [#allocation8], 0
    %26 = vsyncpa [#allocation11], 0
    %27 = vsyncpa [#allocation14], 0
    loop: start=0, step=1, limit=4
    $region2: #{tpu_custom_call.1} parent=1 // loop_pre_header
      _
    $region3: #{tpu_custom_call.1} parent=1 // loop_header
      %s29 = sphi 0, %s33
      %p30 = scmp.ge.s32.totalorder %s29, 4
      %s39 = sphi 0, %s41
      %s42 = sphi 0, %s39
      %s43 = sphi 0, %s42
      %s59 = sphi 0, %s43
      %s63 = sphi 0, %s63
      %s65 = sphi 0, %s63
      %s66 = sphi 0, %s65
      %s80 = sphi 0, %s66
      %s84 = sphi 0, %s84
      %s86 = sphi 0, %s84
      %s87 = sphi 0, %s86
      %s101 = sphi 0, %s87
      %s105 = sphi 0, %s105
      %s107 = sphi 0, %s105
      %s108 = sphi 0, %s107
      %s122 = sphi 0, %s108
      %s126 = sphi 0, %s126
      %s128 = sphi 0, %s126
      %s129 = sphi 0, %s128
      %s143 = sphi 0, %s129
      %s147 = sphi 0, %s147
      %s149 = sphi 0, %s147
      %s150 = sphi 0, %s149
      %s164 = sphi 0, %s150
      %s168 = sphi 0, %s168
      %s170 = sphi 0, %s168
      %s171 = sphi 0, %s170
      %s185 = sphi 0, %s171
      %s189 = sphi 0, %s189
      %s191 = sphi 0, %s189
      %s192 = sphi 0, %s191
      %s206 = sphi 0, %s192
      %s210 = sphi 0, %s210
      %s212 = sphi 0, %s210
      %s213 = sphi 0, %s212
      %s227 = sphi 0, %s213
      %s231 = sphi 0, %s231
      %s233 = sphi 0, %s231
      %s234 = sphi 0, %s233
      %s248 = sphi 0, %s234
      %s252 = sphi 0, %s252
      %s254 = sphi 0, %s252
      %s255 = sphi 0, %s254
      %s269 = sphi 0, %s255
      %s273 = sphi 0, %s273
      %s275 = sphi 0, %s273
      %s276 = sphi 0, %s275
      %s290 = sphi 0, %s276
      %s294 = sphi 0, %s294
      %s296 = sphi 0, %s294
      %s297 = sphi 0, %s296
      %s311 = sphi 0, %s297
      %s315 = sphi 0, %s315
      %s317 = sphi 0, %s315
      %s318 = sphi 0, %s317
      %s332 = sphi 0, %s318
      %s336 = sphi 0, %s336
      %s338 = sphi 0, %s336
      %s339 = sphi 0, %s338
      %s353 = sphi 0, %s339
      %s357 = sphi 0, %s357
      %s359 = sphi 0, %s357
      %s360 = sphi 0, %s359
      %s374 = sphi 0, %s360
      %s378 = sphi 0, %s378
      %s380 = sphi 0, %s378
      %s381 = sphi 0, %s380
      %s395 = sphi 0, %s381
      %s399 = sphi 0, %s399
      %s401 = sphi 0, %s399
      %s402 = sphi 0, %s401
      %s416 = sphi 0, %s402
      %s422 = sphi 0, %s424
      %s425 = sphi 0, %s422
      %s426 = sphi 0, %s425
      %s442 = sphi 0, %s426
    $region4: #{tpu_custom_call.1} parent=1 // loop_header_branch
      %32 = sbr.rel (%p30) target = $region8
    $region5: #{tpu_custom_call.1} parent=1 // loop_body
      %s34 = ssub.s32 %s29, 1
      %s35 = ssub.s32 %s29, 2
      %s36 = sadd.s32 %s29, 1
      %s37 = ssub.s32 %s29, %s36
      %p38 = scmp.eq.s32.totalorder %s37, 0
      %s40 = sadd.s32 %s39, 1
      %s41 = scalar_select %p38, %s39, %s40
      %p44 = pneg %p38
      %p45 = scmp.eq.s32.totalorder %s29, 1
      %p46 = por %p44, %p45
      %p47 = scmp.ne.s32.totalorder %s39, %s42
      %p48 = scmp.eq.s32.totalorder %s29, 0
      %p49 = por %p47, %p48
      %p50 = scmp.ne.s32.totalorder %s39, %s42
      %p51 = scmp.eq.s32.totalorder %s34, 1
      %p52 = por %p50, %p51
      %p53 = scmp.ne.s32.totalorder %s42, %s43
      %p54 = scmp.eq.s32.totalorder %s34, 0
      %p55 = por %p53, %p54
      %p56 = scmp.ne.s32.totalorder %s42, %s43
      %p57 = scmp.eq.s32.totalorder %s35, 1
      %p58 = por %p56, %p57
      %p60 = scmp.ne.s32.totalorder %s43, %s59
      %p61 = scmp.eq.s32.totalorder %s35, 0
      %p62 = por %p60, %p61
      %s64 = sadd.s32 %s63, 1
      %p67 = scmp.eq.s32.totalorder %s29, 1
      %p68 = scmp.ne.s32.totalorder %s63, %s65
      %p69 = scmp.eq.s32.totalorder %s29, 0
      %p70 = por %p68, %p69
      %p71 = scmp.ne.s32.totalorder %s63, %s65
      %p72 = scmp.eq.s32.totalorder %s34, 1
      %p73 = por %p71, %p72
      %p74 = scmp.ne.s32.totalorder %s65, %s66
      %p75 = scmp.eq.s32.totalorder %s34, 0
      %p76 = por %p74, %p75
      %p77 = scmp.ne.s32.totalorder %s65, %s66
      %p78 = scmp.eq.s32.totalorder %s35, 1
      %p79 = por %p77, %p78
      %p81 = scmp.ne.s32.totalorder %s66, %s80
      %p82 = scmp.eq.s32.totalorder %s35, 0
      %p83 = por %p81, %p82
      %s85 = sadd.s32 %s84, 1
      %p88 = scmp.eq.s32.totalorder %s29, 1
      %p89 = scmp.ne.s32.totalorder %s84, %s86
      %p90 = scmp.eq.s32.totalorder %s29, 0
      %p91 = por %p89, %p90
      %p92 = scmp.ne.s32.totalorder %s84, %s86
      %p93 = scmp.eq.s32.totalorder %s34, 1
      %p94 = por %p92, %p93
      %p95 = scmp.ne.s32.totalorder %s86, %s87
      %p96 = scmp.eq.s32.totalorder %s34, 0
      %p97 = por %p95, %p96
      %p98 = scmp.ne.s32.totalorder %s86, %s87
      %p99 = scmp.eq.s32.totalorder %s35, 1
      %p100 = por %p98, %p99
      %p102 = scmp.ne.s32.totalorder %s87, %s101
      %p103 = scmp.eq.s32.totalorder %s35, 0
      %p104 = por %p102, %p103
      %s106 = sadd.s32 %s105, 1
      %p109 = scmp.eq.s32.totalorder %s29, 1
      %p110 = scmp.ne.s32.totalorder %s105, %s107
      %p111 = scmp.eq.s32.totalorder %s29, 0
      %p112 = por %p110, %p111
      %p113 = scmp.ne.s32.totalorder %s105, %s107
      %p114 = scmp.eq.s32.totalorder %s34, 1
      %p115 = por %p113, %p114
      %p116 = scmp.ne.s32.totalorder %s107, %s108
      %p117 = scmp.eq.s32.totalorder %s34, 0
      %p118 = por %p116, %p117
      %p119 = scmp.ne.s32.totalorder %s107, %s108
      %p120 = scmp.eq.s32.totalorder %s35, 1
      %p121 = por %p119, %p120
      %p123 = scmp.ne.s32.totalorder %s108, %s122
      %p124 = scmp.eq.s32.totalorder %s35, 0
      %p125 = por %p123, %p124
      %s127 = sadd.s32 %s126, 1
      %p130 = scmp.eq.s32.totalorder %s29, 1
      %p131 = scmp.ne.s32.totalorder %s126, %s128
      %p132 = scmp.eq.s32.totalorder %s29, 0
      %p133 = por %p131, %p132
      %p134 = scmp.ne.s32.totalorder %s126, %s128
      %p135 = scmp.eq.s32.totalorder %s34, 1
      %p136 = por %p134, %p135
      %p137 = scmp.ne.s32.totalorder %s128, %s129
      %p138 = scmp.eq.s32.totalorder %s34, 0
      %p139 = por %p137, %p138
      %p140 = scmp.ne.s32.totalorder %s128, %s129
      %p141 = scmp.eq.s32.totalorder %s35, 1
      %p142 = por %p140, %p141
      %p144 = scmp.ne.s32.totalorder %s129, %s143
      %p145 = scmp.eq.s32.totalorder %s35, 0
      %p146 = por %p144, %p145
      %s148 = sadd.s32 %s147, 1
      %p151 = scmp.eq.s32.totalorder %s29, 1
      %p152 = scmp.ne.s32.totalorder %s147, %s149
      %p153 = scmp.eq.s32.totalorder %s29, 0
      %p154 = por %p152, %p153
      %p155 = scmp.ne.s32.totalorder %s147, %s149
      %p156 = scmp.eq.s32.totalorder %s34, 1
      %p157 = por %p155, %p156
      %p158 = scmp.ne.s32.totalorder %s149, %s150
      %p159 = scmp.eq.s32.totalorder %s34, 0
      %p160 = por %p158, %p159
      %p161 = scmp.ne.s32.totalorder %s149, %s150
      %p162 = scmp.eq.s32.totalorder %s35, 1
      %p163 = por %p161, %p162
      %p165 = scmp.ne.s32.totalorder %s150, %s164
      %p166 = scmp.eq.s32.totalorder %s35, 0
      %p167 = por %p165, %p166
      %s169 = sadd.s32 %s168, 1
      %p172 = scmp.eq.s32.totalorder %s29, 1
      %p173 = scmp.ne.s32.totalorder %s168, %s170
      %p174 = scmp.eq.s32.totalorder %s29, 0
      %p175 = por %p173, %p174
      %p176 = scmp.ne.s32.totalorder %s168, %s170
      %p177 = scmp.eq.s32.totalorder %s34, 1
      %p178 = por %p176, %p177
      %p179 = scmp.ne.s32.totalorder %s170, %s171
      %p180 = scmp.eq.s32.totalorder %s34, 0
      %p181 = por %p179, %p180
      %p182 = scmp.ne.s32.totalorder %s170, %s171
      %p183 = scmp.eq.s32.totalorder %s35, 1
      %p184 = por %p182, %p183
      %p186 = scmp.ne.s32.totalorder %s171, %s185
      %p187 = scmp.eq.s32.totalorder %s35, 0
      %p188 = por %p186, %p187
      %s190 = sadd.s32 %s189, 1
      %p193 = scmp.eq.s32.totalorder %s29, 1
      %p194 = scmp.ne.s32.totalorder %s189, %s191
      %p195 = scmp.eq.s32.totalorder %s29, 0
      %p196 = por %p194, %p195
      %p197 = scmp.ne.s32.totalorder %s189, %s191
      %p198 = scmp.eq.s32.totalorder %s34, 1
      %p199 = por %p197, %p198
      %p200 = scmp.ne.s32.totalorder %s191, %s192
      %p201 = scmp.eq.s32.totalorder %s34, 0
      %p202 = por %p200, %p201
      %p203 = scmp.ne.s32.totalorder %s191, %s192
      %p204 = scmp.eq.s32.totalorder %s35, 1
      %p205 = por %p203, %p204
      %p207 = scmp.ne.s32.totalorder %s192, %s206
      %p208 = scmp.eq.s32.totalorder %s35, 0
      %p209 = por %p207, %p208
      %s211 = sadd.s32 %s210, 1
      %p214 = scmp.eq.s32.totalorder %s29, 1
      %p215 = scmp.ne.s32.totalorder %s210, %s212
      %p216 = scmp.eq.s32.totalorder %s29, 0
      %p217 = por %p215, %p216
      %p218 = scmp.ne.s32.totalorder %s210, %s212
      %p219 = scmp.eq.s32.totalorder %s34, 1
      %p220 = por %p218, %p219
      %p221 = scmp.ne.s32.totalorder %s212, %s213
      %p222 = scmp.eq.s32.totalorder %s34, 0
      %p223 = por %p221, %p222
      %p224 = scmp.ne.s32.totalorder %s212, %s213
      %p225 = scmp.eq.s32.totalorder %s35, 1
      %p226 = por %p224, %p225
      %p228 = scmp.ne.s32.totalorder %s213, %s227
      %p229 = scmp.eq.s32.totalorder %s35, 0
      %p230 = por %p228, %p229
      %s232 = sadd.s32 %s231, 1
      %p235 = scmp.eq.s32.totalorder %s29, 1
      %p236 = scmp.ne.s32.totalorder %s231, %s233
      %p237 = scmp.eq.s32.totalorder %s29, 0
      %p238 = por %p236, %p237
      %p239 = scmp.ne.s32.totalorder %s231, %s233
      %p240 = scmp.eq.s32.totalorder %s34, 1
      %p241 = por %p239, %p240
      %p242 = scmp.ne.s32.totalorder %s233, %s234
      %p243 = scmp.eq.s32.totalorder %s34, 0
      %p244 = por %p242, %p243
      %p245 = scmp.ne.s32.totalorder %s233, %s234
      %p246 = scmp.eq.s32.totalorder %s35, 1
      %p247 = por %p245, %p246
      %p249 = scmp.ne.s32.totalorder %s234, %s248
      %p250 = scmp.eq.s32.totalorder %s35, 0
      %p251 = por %p249, %p250
      %s253 = sadd.s32 %s252, 1
      %p256 = scmp.eq.s32.totalorder %s29, 1
      %p257 = scmp.ne.s32.totalorder %s252, %s254
      %p258 = scmp.eq.s32.totalorder %s29, 0
      %p259 = por %p257, %p258
      %p260 = scmp.ne.s32.totalorder %s252, %s254
      %p261 = scmp.eq.s32.totalorder %s34, 1
      %p262 = por %p260, %p261
      %p263 = scmp.ne.s32.totalorder %s254, %s255
      %p264 = scmp.eq.s32.totalorder %s34, 0
      %p265 = por %p263, %p264
      %p266 = scmp.ne.s32.totalorder %s254, %s255
      %p267 = scmp.eq.s32.totalorder %s35, 1
      %p268 = por %p266, %p267
      %p270 = scmp.ne.s32.totalorder %s255, %s269
      %p271 = scmp.eq.s32.totalorder %s35, 0
      %p272 = por %p270, %p271
      %s274 = sadd.s32 %s273, 1
      %p277 = scmp.eq.s32.totalorder %s29, 1
      %p278 = scmp.ne.s32.totalorder %s273, %s275
      %p279 = scmp.eq.s32.totalorder %s29, 0
      %p280 = por %p278, %p279
      %p281 = scmp.ne.s32.totalorder %s273, %s275
      %p282 = scmp.eq.s32.totalorder %s34, 1
      %p283 = por %p281, %p282
      %p284 = scmp.ne.s32.totalorder %s275, %s276
      %p285 = scmp.eq.s32.totalorder %s34, 0
      %p286 = por %p284, %p285
      %p287 = scmp.ne.s32.totalorder %s275, %s276
      %p288 = scmp.eq.s32.totalorder %s35, 1
      %p289 = por %p287, %p288
      %p291 = scmp.ne.s32.totalorder %s276, %s290
      %p292 = scmp.eq.s32.totalorder %s35, 0
      %p293 = por %p291, %p292
      %s295 = sadd.s32 %s294, 1
      %p298 = scmp.eq.s32.totalorder %s29, 1
      %p299 = scmp.ne.s32.totalorder %s294, %s296
      %p300 = scmp.eq.s32.totalorder %s29, 0
      %p301 = por %p299, %p300
      %p302 = scmp.ne.s32.totalorder %s294, %s296
      %p303 = scmp.eq.s32.totalorder %s34, 1
      %p304 = por %p302, %p303
      %p305 = scmp.ne.s32.totalorder %s296, %s297
      %p306 = scmp.eq.s32.totalorder %s34, 0
      %p307 = por %p305, %p306
      %p308 = scmp.ne.s32.totalorder %s296, %s297
      %p309 = scmp.eq.s32.totalorder %s35, 1
      %p310 = por %p308, %p309
      %p312 = scmp.ne.s32.totalorder %s297, %s311
      %p313 = scmp.eq.s32.totalorder %s35, 0
      %p314 = por %p312, %p313
      %s316 = sadd.s32 %s315, 1
      %p319 = scmp.eq.s32.totalorder %s29, 1
      %p320 = scmp.ne.s32.totalorder %s315, %s317
      %p321 = scmp.eq.s32.totalorder %s29, 0
      %p322 = por %p320, %p321
      %p323 = scmp.ne.s32.totalorder %s315, %s317
      %p324 = scmp.eq.s32.totalorder %s34, 1
      %p325 = por %p323, %p324
      %p326 = scmp.ne.s32.totalorder %s317, %s318
      %p327 = scmp.eq.s32.totalorder %s34, 0
      %p328 = por %p326, %p327
      %p329 = scmp.ne.s32.totalorder %s317, %s318
      %p330 = scmp.eq.s32.totalorder %s35, 1
      %p331 = por %p329, %p330
      %p333 = scmp.ne.s32.totalorder %s318, %s332
      %p334 = scmp.eq.s32.totalorder %s35, 0
      %p335 = por %p333, %p334
      %s337 = sadd.s32 %s336, 1
      %p340 = scmp.eq.s32.totalorder %s29, 1
      %p341 = scmp.ne.s32.totalorder %s336, %s338
      %p342 = scmp.eq.s32.totalorder %s29, 0
      %p343 = por %p341, %p342
      %p344 = scmp.ne.s32.totalorder %s336, %s338
      %p345 = scmp.eq.s32.totalorder %s34, 1
      %p346 = por %p344, %p345
      %p347 = scmp.ne.s32.totalorder %s338, %s339
      %p348 = scmp.eq.s32.totalorder %s34, 0
      %p349 = por %p347, %p348
      %p350 = scmp.ne.s32.totalorder %s338, %s339
      %p351 = scmp.eq.s32.totalorder %s35, 1
      %p352 = por %p350, %p351
      %p354 = scmp.ne.s32.totalorder %s339, %s353
      %p355 = scmp.eq.s32.totalorder %s35, 0
      %p356 = por %p354, %p355
      %s358 = sadd.s32 %s357, 1
      %p361 = scmp.eq.s32.totalorder %s29, 1
      %p362 = scmp.ne.s32.totalorder %s357, %s359
      %p363 = scmp.eq.s32.totalorder %s29, 0
      %p364 = por %p362, %p363
      %p365 = scmp.ne.s32.totalorder %s357, %s359
      %p366 = scmp.eq.s32.totalorder %s34, 1
      %p367 = por %p365, %p366
      %p368 = scmp.ne.s32.totalorder %s359, %s360
      %p369 = scmp.eq.s32.totalorder %s34, 0
      %p370 = por %p368, %p369
      %p371 = scmp.ne.s32.totalorder %s359, %s360
      %p372 = scmp.eq.s32.totalorder %s35, 1
      %p373 = por %p371, %p372
      %p375 = scmp.ne.s32.totalorder %s360, %s374
      %p376 = scmp.eq.s32.totalorder %s35, 0
      %p377 = por %p375, %p376
      %s379 = sadd.s32 %s378, 1
      %p382 = scmp.eq.s32.totalorder %s29, 1
      %p383 = scmp.ne.s32.totalorder %s378, %s380
      %p384 = scmp.eq.s32.totalorder %s29, 0
      %p385 = por %p383, %p384
      %p386 = scmp.ne.s32.totalorder %s378, %s380
      %p387 = scmp.eq.s32.totalorder %s34, 1
      %p388 = por %p386, %p387
      %p389 = scmp.ne.s32.totalorder %s380, %s381
      %p390 = scmp.eq.s32.totalorder %s34, 0
      %p391 = por %p389, %p390
      %p392 = scmp.ne.s32.totalorder %s380, %s381
      %p393 = scmp.eq.s32.totalorder %s35, 1
      %p394 = por %p392, %p393
      %p396 = scmp.ne.s32.totalorder %s381, %s395
      %p397 = scmp.eq.s32.totalorder %s35, 0
      %p398 = por %p396, %p397
      %s400 = sadd.s32 %s399, 1
      %p403 = scmp.eq.s32.totalorder %s29, 1
      %p404 = scmp.ne.s32.totalorder %s399, %s401
      %p405 = scmp.eq.s32.totalorder %s29, 0
      %p406 = por %p404, %p405
      %p407 = scmp.ne.s32.totalorder %s399, %s401
      %p408 = scmp.eq.s32.totalorder %s34, 1
      %p409 = por %p407, %p408
      %p410 = scmp.ne.s32.totalorder %s401, %s402
      %p411 = scmp.eq.s32.totalorder %s34, 0
      %p412 = por %p410, %p411
      %p413 = scmp.ne.s32.totalorder %s401, %s402
      %p414 = scmp.eq.s32.totalorder %s35, 1
      %p415 = por %p413, %p414
      %p417 = scmp.ne.s32.totalorder %s402, %s416
      %p418 = scmp.eq.s32.totalorder %s35, 0
      %p419 = por %p417, %p418
      %s420 = ssub.s32 %s29, %s36
      %p421 = scmp.eq.s32.totalorder %s420, 0
      %s423 = sadd.s32 %s422, 1
      %s424 = scalar_select %p421, %s422, %s423
      %p427 = pneg %p421
      %p428 = scmp.eq.s32.totalorder %s29, 1
      %p429 = por %p427, %p428
      %p430 = scmp.ne.s32.totalorder %s422, %s425
      %p431 = scmp.eq.s32.totalorder %s29, 0
      %p432 = por %p430, %p431
      %p433 = scmp.ne.s32.totalorder %s422, %s425
      %p434 = scmp.eq.s32.totalorder %s34, 1
      %p435 = por %p433, %p434
      %p436 = scmp.ne.s32.totalorder %s425, %s426
      %p437 = scmp.eq.s32.totalorder %s34, 0
      %p438 = por %p436, %p437
      %p439 = scmp.ne.s32.totalorder %s425, %s426
      %p440 = scmp.eq.s32.totalorder %s35, 1
      %p441 = por %p439, %p440
      %p443 = scmp.ne.s32.totalorder %s426, %s442
      %p444 = scmp.eq.s32.totalorder %s35, 0
      %p445 = por %p443, %p444
      %p446 = scmp.le.s32.totalorder 1, %s29
      %p447 = scmp.lt.s32.totalorder %s29, 3
      %p448 = pnand %p446, %p447
      %p449 = pneg %p448
      // Predicated region
      $region9: #{tpu_custom_call.1} parent=5 // pred_check
        _
      $region10: #{tpu_custom_call.1} parent=5 // pred_check_branch
        %451 = sbr.rel (%p448) target = $region12
      $region11: #{tpu_custom_call.1} parent=5 // pred_region
        %s452 = ssub.s32 %s29, 1
        // Predicated region
        $region13: #{tpu_custom_call.1} parent=11 // pred_check
          %p453 = pneg %p76
        $region14: #{tpu_custom_call.1} parent=11 // pred_check_branch
          %455 = sbr.rel (%p453) target = $region16
        $region15: #{tpu_custom_call.1} parent=11 // pred_region
          %s457 = ssub.s32 512, 512
          %458 = vsyncadd [#allocation3], %s457
          %s459 = sshll.u32 [#allocation2], 4
          %s460 = int_to_ptr.vmem [resolvable:$true] %s459
          %465 = dma.hbm_to_vmem [thread:$0]  %s1, 512, %s460, [#allocation3], 64, 64, 4
        $region16: #{tpu_custom_call.1} parent=11 // pred_fallthru
          _
        // Predicated region
        $region17: #{tpu_custom_call.1} parent=11 // pred_check
          %p466 = pneg %p97
        $region18: #{tpu_custom_call.1} parent=11 // pred_check_branch
          %468 = sbr.rel (%p466) target = $region20
        $region19: #{tpu_custom_call.1} parent=11 // pred_region
          %s470 = ssub.s32 16, 16
          %471 = vsyncadd [#allocation5], %s470
          %s473 = sshll.u32 [#allocation4], 4
          %s474 = int_to_ptr.vmem [resolvable:$true] %s473
          %476 = dma.hbm_to_vmem [thread:$0]  %s2, 16, %s474, [#allocation5]
        $region20: #{tpu_custom_call.1} parent=11 // pred_fallthru
          _
        // Predicated region
        $region21: #{tpu_custom_call.1} parent=11 // pred_check
          %p477 = pneg %p118
        $region22: #{tpu_custom_call.1} parent=11 // pred_check_branch
          %479 = sbr.rel (%p477) target = $region24
        $region23: #{tpu_custom_call.1} parent=11 // pred_region
          _
        $region24: #{tpu_custom_call.1} parent=11 // pred_fallthru
          _
        // Predicated region
        $region25: #{tpu_custom_call.1} parent=11 // pred_check
          %p480 = pneg %p139
        $region26: #{tpu_custom_call.1} parent=11 // pred_check_branch
          %482 = sbr.rel (%p480) target = $region28
        $region27: #{tpu_custom_call.1} parent=11 // pred_region
          %s484 = ssub.s32 16, 16
          %485 = vsyncadd [#allocation5], %s484
          %s487 = sshll.u32 [#allocation6], 4
          %s488 = int_to_ptr.vmem [resolvable:$true] %s487
          %490 = dma.hbm_to_vmem [thread:$0]  %s4, 16, %s488, [#allocation5]
        $region28: #{tpu_custom_call.1} parent=11 // pred_fallthru
          _
        // Predicated region
        $region29: #{tpu_custom_call.1} parent=11 // pred_check
          %p491 = pneg %p160
        $region30: #{tpu_custom_call.1} parent=11 // pred_check_branch
          %493 = sbr.rel (%p491) target = $region32
        $region31: #{tpu_custom_call.1} parent=11 // pred_region
          _
        $region32: #{tpu_custom_call.1} parent=11 // pred_fallthru
          _
        // Predicated region
        $region33: #{tpu_custom_call.1} parent=11 // pred_check
          %p494 = pneg %p181
        $region34: #{tpu_custom_call.1} parent=11 // pred_check_branch
          %496 = sbr.rel (%p494) target = $region36
        $region35: #{tpu_custom_call.1} parent=11 // pred_region
          %s498 = ssub.s32 16, 16
          %499 = vsyncadd [#allocation8], %s498
          %s501 = sshll.u32 [#allocation7], 4
          %s502 = int_to_ptr.vmem [resolvable:$true] %s501
          %504 = dma.hbm_to_vmem [thread:$0]  %s6, 16, %s502, [#allocation8]
        $region36: #{tpu_custom_call.1} parent=11 // pred_fallthru
          _
        // Predicated region
        $region37: #{tpu_custom_call.1} parent=11 // pred_check
          %p505 = pneg %p202
        $region38: #{tpu_custom_call.1} parent=11 // pred_check_branch
          %507 = sbr.rel (%p505) target = $region40
        $region39: #{tpu_custom_call.1} parent=11 // pred_region
          _
        $region40: #{tpu_custom_call.1} parent=11 // pred_fallthru
          _
        // Predicated region
        $region41: #{tpu_custom_call.1} parent=11 // pred_check
          %p508 = pneg %p223
        $region42: #{tpu_custom_call.1} parent=11 // pred_check_branch
          %510 = sbr.rel (%p508) target = $region44
        $region43: #{tpu_custom_call.1} parent=11 // pred_region
          %s512 = ssub.s32 16, 16
          %513 = vsyncadd [#allocation8], %s512
          %s515 = sshll.u32 [#allocation9], 4
          %s516 = int_to_ptr.vmem [resolvable:$true] %s515
          %518 = dma.hbm_to_vmem [thread:$0]  %s8, 16, %s516, [#allocation8]
        $region44: #{tpu_custom_call.1} parent=11 // pred_fallthru
          _
        // Predicated region
        $region45: #{tpu_custom_call.1} parent=11 // pred_check
          %p519 = pneg %p244
        $region46: #{tpu_custom_call.1} parent=11 // pred_check_branch
          %521 = sbr.rel (%p519) target = $region48
        $region47: #{tpu_custom_call.1} parent=11 // pred_region
          %s523 = ssub.s32 1024, 1024
          %524 = vsyncadd [#allocation11], %s523
          %s525 = sshll.u32 [#allocation10], 4
          %s526 = int_to_ptr.vmem [resolvable:$true] %s525
          %531 = dma.hbm_to_vmem [thread:$0]  %s9, 1024, %s526, [#allocation11], 64, 64, 4
        $region48: #{tpu_custom_call.1} parent=11 // pred_fallthru
          _
        // Predicated region
        $region49: #{tpu_custom_call.1} parent=11 // pred_check
          %p532 = pneg %p265
        $region50: #{tpu_custom_call.1} parent=11 // pred_check_branch
          %534 = sbr.rel (%p532) target = $region52
        $region51: #{tpu_custom_call.1} parent=11 // pred_region
          _
        $region52: #{tpu_custom_call.1} parent=11 // pred_fallthru
          _
        // Predicated region
        $region53: #{tpu_custom_call.1} parent=11 // pred_check
          %p535 = pneg %p286
        $region54: #{tpu_custom_call.1} parent=11 // pred_check_branch
          %537 = sbr.rel (%p535) target = $region56
        $region55: #{tpu_custom_call.1} parent=11 // pred_region
          _
        $region56: #{tpu_custom_call.1} parent=11 // pred_fallthru
          _
        // Predicated region
        $region57: #{tpu_custom_call.1} parent=11 // pred_check
          %p538 = pneg %p307
        $region58: #{tpu_custom_call.1} parent=11 // pred_check_branch
          %540 = sbr.rel (%p538) target = $region60
        $region59: #{tpu_custom_call.1} parent=11 // pred_region
          %s542 = ssub.s32 1024, 1024
          %543 = vsyncadd [#allocation11], %s542
          %s544 = sshll.u32 [#allocation12], 4
          %s545 = int_to_ptr.vmem [resolvable:$true] %s544
          %550 = dma.hbm_to_vmem [thread:$0]  %s12, 1024, %s545, [#allocation11], 64, 64, 4
        $region60: #{tpu_custom_call.1} parent=11 // pred_fallthru
          _
        // Predicated region
        $region61: #{tpu_custom_call.1} parent=11 // pred_check
          %p551 = pneg %p328
        $region62: #{tpu_custom_call.1} parent=11 // pred_check_branch
          %553 = sbr.rel (%p551) target = $region64
        $region63: #{tpu_custom_call.1} parent=11 // pred_region
          _
        $region64: #{tpu_custom_call.1} parent=11 // pred_fallthru
          _
        // Predicated region
        $region65: #{tpu_custom_call.1} parent=11 // pred_check
          %p554 = pneg %p349
        $region66: #{tpu_custom_call.1} parent=11 // pred_check_branch
          %556 = sbr.rel (%p554) target = $region68
        $region67: #{tpu_custom_call.1} parent=11 // pred_region
          %s558 = ssub.s32 1024, 1024
          %559 = vsyncadd [#allocation14], %s558
          %s560 = sshll.u32 [#allocation13], 4
          %s561 = int_to_ptr.vmem [resolvable:$true] %s560
          %566 = dma.hbm_to_vmem [thread:$0]  %s14, 1024, %s561, [#allocation14], 64, 64, 4
        $region68: #{tpu_custom_call.1} parent=11 // pred_fallthru
          _
        // Predicated region
        $region69: #{tpu_custom_call.1} parent=11 // pred_check
          %p567 = pneg %p370
        $region70: #{tpu_custom_call.1} parent=11 // pred_check_branch
          %569 = sbr.rel (%p567) target = $region72
        $region71: #{tpu_custom_call.1} parent=11 // pred_region
          _
        $region72: #{tpu_custom_call.1} parent=11 // pred_fallthru
          _
        // Predicated region
        $region73: #{tpu_custom_call.1} parent=11 // pred_check
          %p570 = pneg %p391
        $region74: #{tpu_custom_call.1} parent=11 // pred_check_branch
          %572 = sbr.rel (%p570) target = $region76
        $region75: #{tpu_custom_call.1} parent=11 // pred_region
          _
        $region76: #{tpu_custom_call.1} parent=11 // pred_fallthru
          _
        // Predicated region
        $region77: #{tpu_custom_call.1} parent=11 // pred_check
          %p573 = pneg %p412
        $region78: #{tpu_custom_call.1} parent=11 // pred_check_branch
          %575 = sbr.rel (%p573) target = $region80
        $region79: #{tpu_custom_call.1} parent=11 // pred_region
          _
        $region80: #{tpu_custom_call.1} parent=11 // pred_fallthru
          _
      $region12: #{tpu_custom_call.1} parent=5 // pred_fallthru
        _
      %p576 = scmp.lt.s32.totalorder %s29, 2
      // Predicated region
      $region81: #{tpu_custom_call.1} parent=5 // pred_check
        %p577 = pneg %p576
      $region82: #{tpu_custom_call.1} parent=5 // pred_check_branch
        %579 = sbr.rel (%p577) target = $region84
      $region83: #{tpu_custom_call.1} parent=5 // pred_region
        // Predicated region
        $region85: #{tpu_custom_call.1} parent=83 // pred_check
          %p580 = pneg %p49
        $region86: #{tpu_custom_call.1} parent=83 // pred_check_branch
          %582 = sbr.rel (%p580) target = $region88
        $region87: #{tpu_custom_call.1} parent=83 // pred_region
          %s583 = smul.u32 8, %s29
          %p584 = scmp.lt.s32.totalorder %s583, 15
          %s585 = scalar_select %p584, %s583, 15
          %s586 = smul.addr %s585, 8
          %s587 = scalar_lea.vmem %s0, %s586
          %s588 = smul.u32 8, %s29
        $region88: #{tpu_custom_call.1} parent=83 // pred_fallthru
          _
      $region84: #{tpu_custom_call.1} parent=5 // pred_fallthru
        _
      %p589 = scmp.le.s32.totalorder 1, %s29
      %p590 = scmp.lt.s32.totalorder %s29, 3
      %p591 = pnand %p589, %p590
      %p592 = pneg %p591
      // Predicated region
      $region89: #{tpu_custom_call.1} parent=5 // pred_check
        _
      $region90: #{tpu_custom_call.1} parent=5 // pred_check_branch
        %594 = sbr.rel (%p591) target = $region92
      $region91: #{tpu_custom_call.1} parent=5 // pred_region
        %s595 = ssub.s32 %s29, 1
        // Predicated region
        $region93: #{tpu_custom_call.1} parent=91 // pred_check
          %p596 = pneg %p76
        $region94: #{tpu_custom_call.1} parent=91 // pred_check_branch
          %598 = sbr.rel (%p596) target = $region96
        $region95: #{tpu_custom_call.1} parent=91 // pred_region
          %599 = dma.done [#allocation3], 512
        $region96: #{tpu_custom_call.1} parent=91 // pred_fallthru
          _
        // Predicated region
        $region97: #{tpu_custom_call.1} parent=91 // pred_check
          %p600 = pneg %p97
        $region98: #{tpu_custom_call.1} parent=91 // pred_check_branch
          %602 = sbr.rel (%p600) target = $region100
        $region99: #{tpu_custom_call.1} parent=91 // pred_region
          %603 = dma.done [#allocation5], 16
        $region100: #{tpu_custom_call.1} parent=91 // pred_fallthru
          _
        // Predicated region
        $region101: #{tpu_custom_call.1} parent=91 // pred_check
          %p604 = pneg %p139
        $region102: #{tpu_custom_call.1} parent=91 // pred_check_branch
          %606 = sbr.rel (%p604) target = $region104
        $region103: #{tpu_custom_call.1} parent=91 // pred_region
          %607 = dma.done [#allocation5], 16
        $region104: #{tpu_custom_call.1} parent=91 // pred_fallthru
          _
        // Predicated region
        $region105: #{tpu_custom_call.1} parent=91 // pred_check
          %p608 = pneg %p181
        $region106: #{tpu_custom_call.1} parent=91 // pred_check_branch
          %610 = sbr.rel (%p608) target = $region108
        $region107: #{tpu_custom_call.1} parent=91 // pred_region
          %611 = dma.done [#allocation8], 16
        $region108: #{tpu_custom_call.1} parent=91 // pred_fallthru
          _
        // Predicated region
        $region109: #{tpu_custom_call.1} parent=91 // pred_check
          %p612 = pneg %p223
        $region110: #{tpu_custom_call.1} parent=91 // pred_check_branch
          %614 = sbr.rel (%p612) target = $region112
        $region111: #{tpu_custom_call.1} parent=91 // pred_region
          %615 = dma.done [#allocation8], 16
        $region112: #{tpu_custom_call.1} parent=91 // pred_fallthru
          _
        // Predicated region
        $region113: #{tpu_custom_call.1} parent=91 // pred_check
          %p616 = pneg %p244
        $region114: #{tpu_custom_call.1} parent=91 // pred_check_branch
          %618 = sbr.rel (%p616) target = $region116
        $region115: #{tpu_custom_call.1} parent=91 // pred_region
          %619 = dma.done [#allocation11], 1024
        $region116: #{tpu_custom_call.1} parent=91 // pred_fallthru
          _
        // Predicated region
        $region117: #{tpu_custom_call.1} parent=91 // pred_check
          %p620 = pneg %p307
        $region118: #{tpu_custom_call.1} parent=91 // pred_check_branch
          %622 = sbr.rel (%p620) target = $region120
        $region119: #{tpu_custom_call.1} parent=91 // pred_region
          %623 = dma.done [#allocation11], 1024
        $region120: #{tpu_custom_call.1} parent=91 // pred_fallthru
          _
        // Predicated region
        $region121: #{tpu_custom_call.1} parent=91 // pred_check
          %p624 = pneg %p349
        $region122: #{tpu_custom_call.1} parent=91 // pred_check_branch
          %626 = sbr.rel (%p624) target = $region124
        $region123: #{tpu_custom_call.1} parent=91 // pred_region
          %627 = dma.done [#allocation14], 1024
        $region124: #{tpu_custom_call.1} parent=91 // pred_fallthru
          _
        %s628 = smul.u32 8, %s34
        %p629 = scmp.lt.s32.totalorder %s628, 15
        %s630 = scalar_select %p629, %s628, 15
        %s631 = smul.addr %s630, 8
        %s632 = scalar_lea.vmem %s0, %s631
        %p633 = pneg %p55
        %p634 = pneg %p52
        %p635 = pneg %p76
        %p636 = pneg %p73
        %p637 = pneg %p97
        %p638 = pneg %p94
        %p639 = pneg %p118
        %p640 = pneg %p115
        %p641 = pneg %p139
        %p642 = pneg %p136
        %p643 = pneg %p160
        %p644 = pneg %p157
        %p645 = pneg %p181
        %p646 = pneg %p178
        %p647 = pneg %p202
        %p648 = pneg %p199
        %p649 = pneg %p223
        %p650 = pneg %p220
        %p651 = pneg %p244
        %p652 = pneg %p241
        %p653 = pneg %p265
        %p654 = pneg %p262
        %p655 = pneg %p286
        %p656 = pneg %p283
        %p657 = pneg %p307
        %p658 = pneg %p304
        %p659 = pneg %p328
        %p660 = pneg %p325
        %p661 = pneg %p349
        %p662 = pneg %p346
        %p663 = pneg %p370
        %p664 = pneg %p367
        %p665 = pneg %p391
        %p666 = pneg %p388
        %p667 = pneg %p412
        %p668 = pneg %p409
        %p669 = pneg %p438
        %p670 = pneg %p435
        %s671 = smul.u32 8, %s34
        %p672 = scmp.lt.s32.totalorder %s671, 15
        %s673 = scalar_select %p672, %s671, 15
        %s674 = smul.addr %s673, 8
        %s675 = scalar_lea.vmem %s18, %s674
        %s676 = smul.u32 8, %s34
        %p677 = scmp.lt.s32.totalorder %s676, 15
        %s678 = scalar_select %p677, %s676, 15
        %s679 = smul.addr %s678, 8
        %s680 = scalar_lea.vmem %s0, %s679
        %s681 = smul.u32 8, %s34
        %s682 = smul.u32 8, %s34
        %p683 = scmp.lt.s32.totalorder %s682, 15
        %s684 = scalar_select %p683, %s682, 15
        %s685 = smul.addr %s684, 8
        %s686 = scalar_lea.vmem %s18, %s685
        %s687 = smul.u32 8, %s34
        %v689 = vld [vmem:[%s680] sm:$0xff]
        %v690 = vld [vmem:[%s680 + $0x8] sm:$0xff]
        %v691 = vld [vmem:[%s680 + $0x10] sm:$0xff]
        %v692 = vld [vmem:[%s680 + $0x18] sm:$0xff]
        %v693 = vld [vmem:[%s680 + $0x20] sm:$0xff]
        %v694 = vld [vmem:[%s680 + $0x28] sm:$0xff]
        %v695 = vld [vmem:[%s680 + $0x30] sm:$0xff]
        %v696 = vld [vmem:[%s680 + $0x38] sm:$0xff]
        %v697 = vld [vmem:[#allocation2] sm:$0xf]
        %v698 = vld [vmem:[#allocation2 + $0x4] sm:$0xf]
        %v699 = vld [vmem:[#allocation2 + $0x8] sm:$0xf]
        %v700 = vld [vmem:[#allocation2 + $0xc] sm:$0xf]
        %v701 = vld [vmem:[#allocation2 + $0x10] sm:$0xf]
        %v702 = vld [vmem:[#allocation2 + $0x14] sm:$0xf]
        %v703 = vld [vmem:[#allocation2 + $0x18] sm:$0xf]
        %v704 = vld [vmem:[#allocation2 + $0x1c] sm:$0xf]
        %v705 = vld [vmem:[#allocation4] sm:$0x1]
        %v706 = vpack.c.bf16 %v690, %v689
        %v707 = vpack.c.bf16 %v692, %v691
        %v708 = vpack.c.bf16 %v694, %v693
        %v709 = vpack.c.bf16 %v696, %v695
        %v711 = vlaneseq
        %v712 = vshrl.u32 %v711, 7
        %v713 = vsub.s32 0, %v712
        %v714 = vrot.slane %v705, %v713
        %v724 = vunpack.c.l.b16 %v697
        %v725 = vunpack.c.l.b16 %v698
        %v726 = vunpack.c.l.b16 %v699
        %v727 = vunpack.c.l.b16 %v700
        %v728 = vunpack.c.l.b16 %v701
        %v729 = vunpack.c.l.b16 %v702
        %v730 = vunpack.c.l.b16 %v703
        %v731 = vunpack.c.l.b16 %v704
        %v732 = vpack.c.b16 %v725, %v724
        %v733 = vpack.c.b16 %v727, %v726
        %v734 = vpack.c.b16 %v729, %v728
        %v735 = vpack.c.b16 %v731, %v730
        %vm740 = vcmask 523264
        %v742 = vsel %vm740, %v706, 0
        %v745 = vsel %vm740, %v707, 0
        %v748 = vsel %vm740, %v708, 0
        %v751 = vsel %vm740, %v709, 0
        %753 = vmatprep.subr.bf16.mxu0 0
        %754 = vmatpush1.bf16.msra.mxu0 %v732
        %755 = vmatprep.subr.bf16.mxu0 0
        %756 = vmatpush1.bf16.msra.mxu0 %v733
        %757 = vmatprep.subr.bf16.mxu0 0
        %758 = vmatpush1.bf16.msra.mxu0 %v734
        %759 = vmatprep.subr.bf16.mxu0 0
        %760 = vmatpush1.bf16.msra.mxu0 %v735
        %761 = vmatprep.subr.bf16.mxu0 0
        %762 = vmatpush1.bf16.msra.mxu0 0
        %763 = vmatprep.subr.bf16.mxu0 0
        %764 = vmatpush1.bf16.msra.mxu0 0
        %765 = vmatprep.subr.bf16.mxu0 0
        %766 = vmatpush1.bf16.msra.mxu0 0
        %767 = vmatprep.subr.bf16.mxu0 0
        %768 = vmatpush1.bf16.msra.mxu0 0
        %769 = vmatprep.subr.bf16.mxu0 0
        %770 = vmatpush1.bf16.msra.mxu0 0
        %771 = vmatprep.subr.bf16.mxu0 0
        %772 = vmatpush1.bf16.msra.mxu0 0
        %773 = vmatprep.subr.bf16.mxu0 0
        %774 = vmatpush1.bf16.msra.mxu0 0
        %775 = vmatprep.subr.bf16.mxu0 0
        %776 = vmatpush1.bf16.msra.mxu0 0
        %777 = vmatprep.subr.bf16.mxu0 0
        %778 = vmatpush1.bf16.msra.mxu0 0
        %779 = vmatprep.subr.bf16.mxu0 0
        %780 = vmatpush1.bf16.msra.mxu0 0
        %781 = vmatprep.subr.bf16.mxu0 0
        %782 = vmatpush1.bf16.msra.mxu0 0
        %783 = vmatprep.subr.bf16.mxu0 0
        %784 = vmatpush1.bf16.msra.mxu0 0
        %785 = vmatprep.mubr.bf16.mxu0 0
        %786 = vmatmul.mubr.bf16.gmra.mrb[0].mxu0 %v742
        %v787 = vpop.f32.mrb[0].mxu0
        %v788 = vadd.f32 %v714, %v787
        %v789 = vpop.f32.mrb[0].mxu0
        %v790 = vpop.f32.mrb[0].mxu0
        %v791 = vadd.f32 %v714, %v790
        %v792 = vpop.f32.mrb[0].mxu0
        %793 = vmatprep.mubr.bf16.mxu0 0
        %794 = vmatmul.mubr.bf16.gmra.mrb[0].mxu0 %v745
        %v795 = vpop.f32.mrb[0].mxu0
        %v796 = vadd.f32 %v714, %v795
        %v797 = vpop.f32.mrb[0].mxu0
        %v798 = vpop.f32.mrb[0].mxu0
        %v799 = vadd.f32 %v714, %v798
        %v800 = vpop.f32.mrb[0].mxu0
        %801 = vmatprep.mubr.bf16.mxu0 0
        %802 = vmatmul.mubr.bf16.gmra.mrb[0].mxu0 %v748
        %v803 = vpop.f32.mrb[0].mxu0
        %v804 = vadd.f32 %v714, %v803
        %v805 = vpop.f32.mrb[0].mxu0
        %v806 = vpop.f32.mrb[0].mxu0
        %v807 = vadd.f32 %v714, %v806
        %v808 = vpop.f32.mrb[0].mxu0
        %809 = vmatprep.mubr.bf16.mxu0 0
        %810 = vmatmul.mubr.bf16.gmra.mrb[0].mxu0 %v751
        %v811 = vpop.f32.mrb[0].mxu0
        %v812 = vadd.f32 %v714, %v811
        %v813 = vpop.f32.mrb[0].mxu0
        %v814 = vpop.f32.mrb[0].mxu0
        %v815 = vadd.f32 %v714, %v814
        %v816 = vpop.f32.mrb[0].mxu0
        %817 = vdwg.mxu0
        %v818 = vmax.f32 %v788, 0.0
        %v819 = vmax.f32 %v791, 0.0
        %v820 = vmax.f32 %v796, 0.0
        %v821 = vmax.f32 %v799, 0.0
        %v822 = vmax.f32 %v804, 0.0
        %v823 = vmax.f32 %v807, 0.0
        %v824 = vmax.f32 %v812, 0.0
        %v825 = vmax.f32 %v815, 0.0
        %v826 = vld [vmem:[%s3] sm:$0xf]
        %v827 = vld [vmem:[%s3 + $0x4] sm:$0xf]
        %v828 = vld [vmem:[%s3 + $0x8] sm:$0xf]
        %v829 = vld [vmem:[%s3 + $0xc] sm:$0xf]
        %v830 = vld [vmem:[%s3 + $0x10] sm:$0xf]
        %v831 = vld [vmem:[%s3 + $0x14] sm:$0xf]
        %v832 = vld [vmem:[%s3 + $0x18] sm:$0xf]
        %v833 = vld [vmem:[%s3 + $0x1c] sm:$0xf]
        %v834 = vld [vmem:[%s3 + $0x20] sm:$0xf]
        %v835 = vld [vmem:[%s3 + $0x24] sm:$0xf]
        %v836 = vld [vmem:[%s3 + $0x28] sm:$0xf]
        %v837 = vld [vmem:[%s3 + $0x2c] sm:$0xf]
        %v838 = vld [vmem:[%s3 + $0x30] sm:$0xf]
        %v839 = vld [vmem:[%s3 + $0x34] sm:$0xf]
        %v840 = vld [vmem:[%s3 + $0x38] sm:$0xf]
        %v841 = vld [vmem:[%s3 + $0x3c] sm:$0xf]
        %v842 = vld [vmem:[#allocation6] sm:$0x1]
        %v843 = vpack.c.bf16 %v819, %v818
        %v844 = vpack.c.bf16 %v821, %v820
        %v845 = vpack.c.bf16 %v823, %v822
        %v846 = vpack.c.bf16 %v825, %v824
        %v848 = vlaneseq
        %v849 = vshrl.u32 %v848, 7
        %v850 = vsub.s32 0, %v849
        %v851 = vrot.slane %v842, %v850
        %v869 = vunpack.c.l.b16 %v826
        %v870 = vunpack.c.l.b16 %v827
        %v871 = vunpack.c.l.b16 %v828
        %v872 = vunpack.c.l.b16 %v829
        %v873 = vunpack.c.l.b16 %v830
        %v874 = vunpack.c.l.b16 %v831
        %v875 = vunpack.c.l.b16 %v832
        %v876 = vunpack.c.l.b16 %v833
        %v877 = vunpack.c.l.b16 %v834
        %v878 = vunpack.c.l.b16 %v835
        %v879 = vunpack.c.l.b16 %v836
        %v880 = vunpack.c.l.b16 %v837
        %v881 = vunpack.c.l.b16 %v838
        %v882 = vunpack.c.l.b16 %v839
        %v883 = vunpack.c.l.b16 %v840
        %v884 = vunpack.c.l.b16 %v841
        %v885 = vpack.c.b16 %v870, %v869
        %v886 = vpack.c.b16 %v872, %v871
        %v887 = vpack.c.b16 %v874, %v873
        %v888 = vpack.c.b16 %v876, %v875
        %v889 = vpack.c.b16 %v878, %v877
        %v890 = vpack.c.b16 %v880, %v879
        %v891 = vpack.c.b16 %v882, %v881
        %v892 = vpack.c.b16 %v884, %v883
        %901 = vmatprep.subr.bf16.mxu0 0
        %902 = vmatpush1.bf16.msra.mxu0 %v885
        %903 = vmatprep.subr.bf16.mxu0 0
        %904 = vmatpush1.bf16.msra.mxu0 %v886
        %905 = vmatprep.subr.bf16.mxu0 0
        %906 = vmatpush1.bf16.msra.mxu0 %v887
        %907 = vmatprep.subr.bf16.mxu0 0
        %908 = vmatpush1.bf16.msra.mxu0 %v888
        %909 = vmatprep.subr.bf16.mxu0 0
        %910 = vmatpush1.bf16.msra.mxu0 %v889
        %911 = vmatprep.subr.bf16.mxu0 0
        %912 = vmatpush1.bf16.msra.mxu0 %v890
        %913 = vmatprep.subr.bf16.mxu0 0
        %914 = vmatpush1.bf16.msra.mxu0 %v891
        %915 = vmatprep.subr.bf16.mxu0 0
        %916 = vmatpush1.bf16.msra.mxu0 %v892
        %917 = vmatprep.subr.bf16.mxu0 0
        %918 = vmatpush1.bf16.msra.mxu0 0
        %919 = vmatprep.subr.bf16.mxu0 0
        %920 = vmatpush1.bf16.msra.mxu0 0
        %921 = vmatprep.subr.bf16.mxu0 0
        %922 = vmatpush1.bf16.msra.mxu0 0
        %923 = vmatprep.subr.bf16.mxu0 0
        %924 = vmatpush1.bf16.msra.mxu0 0
        %925 = vmatprep.subr.bf16.mxu0 0
        %926 = vmatpush1.bf16.msra.mxu0 0
        %927 = vmatprep.subr.bf16.mxu0 0
        %928 = vmatpush1.bf16.msra.mxu0 0
        %929 = vmatprep.subr.bf16.mxu0 0
        %930 = vmatpush1.bf16.msra.mxu0 0
        %931 = vmatprep.subr.bf16.mxu0 0
        %932 = vmatpush1.bf16.msra.mxu0 0
        %933 = vmatprep.mubr.bf16.mxu0 0
        %934 = vmatmul.mubr.bf16.gmra.mrb[0].mxu0 %v843
        %v935 = vpop.f32.mrb[0].mxu0
        %v936 = vadd.f32 %v851, %v935
        %v937 = vpop.f32.mrb[0].mxu0
        %v938 = vpop.f32.mrb[0].mxu0
        %v939 = vadd.f32 %v851, %v938
        %v940 = vpop.f32.mrb[0].mxu0
        %941 = vmatprep.mubr.bf16.mxu0 0
        %942 = vmatmul.mubr.bf16.gmra.mrb[0].mxu0 %v844
        %v943 = vpop.f32.mrb[0].mxu0
        %v944 = vadd.f32 %v851, %v943
        %v945 = vpop.f32.mrb[0].mxu0
        %v946 = vpop.f32.mrb[0].mxu0
        %v947 = vadd.f32 %v851, %v946
        %v948 = vpop.f32.mrb[0].mxu0
        %949 = vmatprep.mubr.bf16.mxu0 0
        %950 = vmatmul.mubr.bf16.gmra.mrb[0].mxu0 %v845
        %v951 = vpop.f32.mrb[0].mxu0
        %v952 = vadd.f32 %v851, %v951
        %v953 = vpop.f32.mrb[0].mxu0
        %v954 = vpop.f32.mrb[0].mxu0
        %v955 = vadd.f32 %v851, %v954
        %v956 = vpop.f32.mrb[0].mxu0
        %957 = vmatprep.mubr.bf16.mxu0 0
        %958 = vmatmul.mubr.bf16.gmra.mrb[0].mxu0 %v846
        %v959 = vpop.f32.mrb[0].mxu0
        %v960 = vadd.f32 %v851, %v959
        %v961 = vpop.f32.mrb[0].mxu0
        %v962 = vpop.f32.mrb[0].mxu0
        %v963 = vadd.f32 %v851, %v962
        %v964 = vpop.f32.mrb[0].mxu0
        %965 = vdwg.mxu0
        %v966 = vmax.f32 %v936, 0.0
        %v967 = vmax.f32 %v939, 0.0
        %v968 = vmax.f32 %v944, 0.0
        %v969 = vmax.f32 %v947, 0.0
        %v970 = vmax.f32 %v952, 0.0
        %v971 = vmax.f32 %v955, 0.0
        %v972 = vmax.f32 %v960, 0.0
        %v973 = vmax.f32 %v963, 0.0
        %v974 = vld [vmem:[%s5] sm:$0xf]
        %v975 = vld [vmem:[%s5 + $0x4] sm:$0xf]
        %v976 = vld [vmem:[%s5 + $0x8] sm:$0xf]
        %v977 = vld [vmem:[%s5 + $0xc] sm:$0xf]
        %v978 = vld [vmem:[%s5 + $0x10] sm:$0xf]
        %v979 = vld [vmem:[%s5 + $0x14] sm:$0xf]
        %v980 = vld [vmem:[%s5 + $0x18] sm:$0xf]
        %v981 = vld [vmem:[%s5 + $0x1c] sm:$0xf]
        %v982 = vld [vmem:[%s5 + $0x20] sm:$0xf]
        %v983 = vld [vmem:[%s5 + $0x24] sm:$0xf]
        %v984 = vld [vmem:[%s5 + $0x28] sm:$0xf]
        %v985 = vld [vmem:[%s5 + $0x2c] sm:$0xf]
        %v986 = vld [vmem:[%s5 + $0x30] sm:$0xf]
        %v987 = vld [vmem:[%s5 + $0x34] sm:$0xf]
        %v988 = vld [vmem:[%s5 + $0x38] sm:$0xf]
        %v989 = vld [vmem:[%s5 + $0x3c] sm:$0xf]
        %v990 = vld [vmem:[#allocation7] sm:$0x1]
        %v991 = vpack.c.bf16 %v967, %v966
        %v992 = vpack.c.bf16 %v969, %v968
        %v993 = vpack.c.bf16 %v971, %v970
        %v994 = vpack.c.bf16 %v973, %v972
        %v996 = vlaneseq
        %v997 = vshrl.u32 %v996, 7
        %v998 = vsub.s32 0, %v997
        %v999 = vrot.slane %v990, %v998
        %v1017 = vunpack.c.l.b16 %v974
        %v1018 = vunpack.c.l.b16 %v975
        %v1019 = vunpack.c.l.b16 %v976
        %v1020 = vunpack.c.l.b16 %v977
        %v1021 = vunpack.c.l.b16 %v978
        %v1022 = vunpack.c.l.b16 %v979
        %v1023 = vunpack.c.l.b16 %v980
        %v1024 = vunpack.c.l.b16 %v981
        %v1025 = vunpack.c.l.b16 %v982
        %v1026 = vunpack.c.l.b16 %v983
        %v1027 = vunpack.c.l.b16 %v984
        %v1028 = vunpack.c.l.b16 %v985
        %v1029 = vunpack.c.l.b16 %v986
        %v1030 = vunpack.c.l.b16 %v987
        %v1031 = vunpack.c.l.b16 %v988
        %v1032 = vunpack.c.l.b16 %v989
        %v1033 = vpack.c.b16 %v1018, %v1017
        %v1034 = vpack.c.b16 %v1020, %v1019
        %v1035 = vpack.c.b16 %v1022, %v1021
        %v1036 = vpack.c.b16 %v1024, %v1023
        %v1037 = vpack.c.b16 %v1026, %v1025
        %v1038 = vpack.c.b16 %v1028, %v1027
        %v1039 = vpack.c.b16 %v1030, %v1029
        %v1040 = vpack.c.b16 %v1032, %v1031
        %1049 = vmatprep.subr.bf16.mxu0 0
        %1050 = vmatpush1.bf16.msra.mxu0 %v1033
        %1051 = vmatprep.subr.bf16.mxu0 0
        %1052 = vmatpush1.bf16.msra.mxu0 %v1034
        %1053 = vmatprep.subr.bf16.mxu0 0
        %1054 = vmatpush1.bf16.msra.mxu0 %v1035
        %1055 = vmatprep.subr.bf16.mxu0 0
        %1056 = vmatpush1.bf16.msra.mxu0 %v1036
        %1057 = vmatprep.subr.bf16.mxu0 0
        %1058 = vmatpush1.bf16.msra.mxu0 %v1037
        %1059 = vmatprep.subr.bf16.mxu0 0
        %1060 = vmatpush1.bf16.msra.mxu0 %v1038
        %1061 = vmatprep.subr.bf16.mxu0 0
        %1062 = vmatpush1.bf16.msra.mxu0 %v1039
        %1063 = vmatprep.subr.bf16.mxu0 0
        %1064 = vmatpush1.bf16.msra.mxu0 %v1040
        %1065 = vmatprep.subr.bf16.mxu0 0
        %1066 = vmatpush1.bf16.msra.mxu0 0
        %1067 = vmatprep.subr.bf16.mxu0 0
        %1068 = vmatpush1.bf16.msra.mxu0 0
        %1069 = vmatprep.subr.bf16.mxu0 0
        %1070 = vmatpush1.bf16.msra.mxu0 0
        %1071 = vmatprep.subr.bf16.mxu0 0
        %1072 = vmatpush1.bf16.msra.mxu0 0
        %1073 = vmatprep.subr.bf16.mxu0 0
        %1074 = vmatpush1.bf16.msra.mxu0 0
        %1075 = vmatprep.subr.bf16.mxu0 0
        %1076 = vmatpush1.bf16.msra.mxu0 0
        %1077 = vmatprep.subr.bf16.mxu0 0
        %1078 = vmatpush1.bf16.msra.mxu0 0
        %1079 = vmatprep.subr.bf16.mxu0 0
        %1080 = vmatpush1.bf16.msra.mxu0 0
        %1081 = vmatprep.mubr.bf16.mxu0 0
        %1082 = vmatmul.mubr.bf16.gmra.mrb[0].mxu0 %v991
        %v1083 = vpop.f32.mrb[0].mxu0
        %v1084 = vadd.f32 %v999, %v1083
        %v1085 = vpop.f32.mrb[0].mxu0
        %v1086 = vpop.f32.mrb[0].mxu0
        %v1087 = vadd.f32 %v999, %v1086
        %v1088 = vpop.f32.mrb[0].mxu0
        %1089 = vmatprep.mubr.bf16.mxu0 0
        %1090 = vmatmul.mubr.bf16.gmra.mrb[0].mxu0 %v992
        %v1091 = vpop.f32.mrb[0].mxu0
        %v1092 = vadd.f32 %v999, %v1091
        %v1093 = vpop.f32.mrb[0].mxu0
        %v1094 = vpop.f32.mrb[0].mxu0
        %v1095 = vadd.f32 %v999, %v1094
        %v1096 = vpop.f32.mrb[0].mxu0
        %1097 = vmatprep.mubr.bf16.mxu0 0
        %1098 = vmatmul.mubr.bf16.gmra.mrb[0].mxu0 %v993
        %v1099 = vpop.f32.mrb[0].mxu0
        %v1100 = vadd.f32 %v999, %v1099
        %v1101 = vpop.f32.mrb[0].mxu0
        %v1102 = vpop.f32.mrb[0].mxu0
        %v1103 = vadd.f32 %v999, %v1102
        %v1104 = vpop.f32.mrb[0].mxu0
        %1105 = vmatprep.mubr.bf16.mxu0 0
        %1106 = vmatmul.mubr.bf16.gmra.mrb[0].mxu0 %v994
        %v1107 = vpop.f32.mrb[0].mxu0
        %v1108 = vadd.f32 %v999, %v1107
        %v1109 = vpop.f32.mrb[0].mxu0
        %v1110 = vpop.f32.mrb[0].mxu0
        %v1111 = vadd.f32 %v999, %v1110
        %v1112 = vpop.f32.mrb[0].mxu0
        %1113 = vdwg.mxu0
        %v1114 = vmax.f32 %v1084, 0.0
        %v1115 = vmax.f32 %v1087, 0.0
        %v1116 = vmax.f32 %v1092, 0.0
        %v1117 = vmax.f32 %v1095, 0.0
        %v1118 = vmax.f32 %v1100, 0.0
        %v1119 = vmax.f32 %v1103, 0.0
        %v1120 = vmax.f32 %v1108, 0.0
        %v1121 = vmax.f32 %v1111, 0.0
        %v1122 = vld [vmem:[%s7] sm:$0xf]
        %v1123 = vld [vmem:[%s7 + $0x4] sm:$0xf]
        %v1124 = vld [vmem:[%s7 + $0x8] sm:$0xf]
        %v1125 = vld [vmem:[%s7 + $0xc] sm:$0xf]
        %v1126 = vld [vmem:[%s7 + $0x10] sm:$0xf]
        %v1127 = vld [vmem:[%s7 + $0x14] sm:$0xf]
        %v1128 = vld [vmem:[%s7 + $0x18] sm:$0xf]
        %v1129 = vld [vmem:[%s7 + $0x1c] sm:$0xf]
        %v1130 = vld [vmem:[%s7 + $0x20] sm:$0xf]
        %v1131 = vld [vmem:[%s7 + $0x24] sm:$0xf]
        %v1132 = vld [vmem:[%s7 + $0x28] sm:$0xf]
        %v1133 = vld [vmem:[%s7 + $0x2c] sm:$0xf]
        %v1134 = vld [vmem:[%s7 + $0x30] sm:$0xf]
        %v1135 = vld [vmem:[%s7 + $0x34] sm:$0xf]
        %v1136 = vld [vmem:[%s7 + $0x38] sm:$0xf]
        %v1137 = vld [vmem:[%s7 + $0x3c] sm:$0xf]
        %v1138 = vld [vmem:[#allocation9] sm:$0x1]
        %v1139 = vpack.c.bf16 %v1115, %v1114
        %v1140 = vpack.c.bf16 %v1117, %v1116
        %v1141 = vpack.c.bf16 %v1119, %v1118
        %v1142 = vpack.c.bf16 %v1121, %v1120
        %v1144 = vlaneseq
        %v1145 = vshrl.u32 %v1144, 7
        %v1146 = vsub.s32 0, %v1145
        %v1147 = vrot.slane %v1138, %v1146
        %v1165 = vunpack.c.l.b16 %v1122
        %v1166 = vunpack.c.l.b16 %v1123
        %v1167 = vunpack.c.l.b16 %v1124
        %v1168 = vunpack.c.l.b16 %v1125
        %v1169 = vunpack.c.l.b16 %v1126
        %v1170 = vunpack.c.l.b16 %v1127
        %v1171 = vunpack.c.l.b16 %v1128
        %v1172 = vunpack.c.l.b16 %v1129
        %v1173 = vunpack.c.l.b16 %v1130
        %v1174 = vunpack.c.l.b16 %v1131
        %v1175 = vunpack.c.l.b16 %v1132
        %v1176 = vunpack.c.l.b16 %v1133
        %v1177 = vunpack.c.l.b16 %v1134
        %v1178 = vunpack.c.l.b16 %v1135
        %v1179 = vunpack.c.l.b16 %v1136
        %v1180 = vunpack.c.l.b16 %v1137
        %v1181 = vpack.c.b16 %v1166, %v1165
        %v1182 = vpack.c.b16 %v1168, %v1167
        %v1183 = vpack.c.b16 %v1170, %v1169
        %v1184 = vpack.c.b16 %v1172, %v1171
        %v1185 = vpack.c.b16 %v1174, %v1173
        %v1186 = vpack.c.b16 %v1176, %v1175
        %v1187 = vpack.c.b16 %v1178, %v1177
        %v1188 = vpack.c.b16 %v1180, %v1179
        %1197 = vmatprep.subr.bf16.mxu0 0
        %1198 = vmatpush1.bf16.msra.mxu0 %v1181
        %1199 = vmatprep.subr.bf16.mxu0 0
        %1200 = vmatpush1.bf16.msra.mxu0 %v1182
        %1201 = vmatprep.subr.bf16.mxu0 0
        %1202 = vmatpush1.bf16.msra.mxu0 %v1183
        %1203 = vmatprep.subr.bf16.mxu0 0
        %1204 = vmatpush1.bf16.msra.mxu0 %v1184
        %1205 = vmatprep.subr.bf16.mxu0 0
        %1206 = vmatpush1.bf16.msra.mxu0 %v1185
        %1207 = vmatprep.subr.bf16.mxu0 0
        %1208 = vmatpush1.bf16.msra.mxu0 %v1186
        %1209 = vmatprep.subr.bf16.mxu0 0
        %1210 = vmatpush1.bf16.msra.mxu0 %v1187
        %1211 = vmatprep.subr.bf16.mxu0 0
        %1212 = vmatpush1.bf16.msra.mxu0 %v1188
        %1213 = vmatprep.subr.bf16.mxu0 0
        %1214 = vmatpush1.bf16.msra.mxu0 0
        %1215 = vmatprep.subr.bf16.mxu0 0
        %1216 = vmatpush1.bf16.msra.mxu0 0
        %1217 = vmatprep.subr.bf16.mxu0 0
        %1218 = vmatpush1.bf16.msra.mxu0 0
        %1219 = vmatprep.subr.bf16.mxu0 0
        %1220 = vmatpush1.bf16.msra.mxu0 0
        %1221 = vmatprep.subr.bf16.mxu0 0
        %1222 = vmatpush1.bf16.msra.mxu0 0
        %1223 = vmatprep.subr.bf16.mxu0 0
        %1224 = vmatpush1.bf16.msra.mxu0 0
        %1225 = vmatprep.subr.bf16.mxu0 0
        %1226 = vmatpush1.bf16.msra.mxu0 0
        %1227 = vmatprep.subr.bf16.mxu0 0
        %1228 = vmatpush1.bf16.msra.mxu0 0
        %1229 = vmatprep.mubr.bf16.mxu0 0
        %1230 = vmatmul.mubr.bf16.gmra.mrb[0].mxu0 %v1139
        %v1231 = vpop.f32.mrb[0].mxu0
        %v1232 = vadd.f32 %v1147, %v1231
        %v1233 = vpop.f32.mrb[0].mxu0
        %v1234 = vpop.f32.mrb[0].mxu0
        %v1235 = vadd.f32 %v1147, %v1234
        %v1236 = vpop.f32.mrb[0].mxu0
        %1237 = vmatprep.mubr.bf16.mxu0 0
        %1238 = vmatmul.mubr.bf16.gmra.mrb[0].mxu0 %v1140
        %v1239 = vpop.f32.mrb[0].mxu0
        %v1240 = vadd.f32 %v1147, %v1239
        %v1241 = vpop.f32.mrb[0].mxu0
        %v1242 = vpop.f32.mrb[0].mxu0
        %v1243 = vadd.f32 %v1147, %v1242
        %v1244 = vpop.f32.mrb[0].mxu0
        %1245 = vmatprep.mubr.bf16.mxu0 0
        %1246 = vmatmul.mubr.bf16.gmra.mrb[0].mxu0 %v1141
        %v1247 = vpop.f32.mrb[0].mxu0
        %v1248 = vadd.f32 %v1147, %v1247
        %v1249 = vpop.f32.mrb[0].mxu0
        %v1250 = vpop.f32.mrb[0].mxu0
        %v1251 = vadd.f32 %v1147, %v1250
        %v1252 = vpop.f32.mrb[0].mxu0
        %1253 = vmatprep.mubr.bf16.mxu0 0
        %1254 = vmatmul.mubr.bf16.gmra.mrb[0].mxu0 %v1142
        %v1255 = vpop.f32.mrb[0].mxu0
        %v1256 = vadd.f32 %v1147, %v1255
        %v1257 = vpop.f32.mrb[0].mxu0
        %v1258 = vpop.f32.mrb[0].mxu0
        %v1259 = vadd.f32 %v1147, %v1258
        %v1260 = vpop.f32.mrb[0].mxu0
        %1261 = vdwg.mxu0
        %v1262 = vmax.f32 %v1232, 0.0
        %v1263 = vmax.f32 %v1235, 0.0
        %v1264 = vmax.f32 %v1240, 0.0
        %v1265 = vmax.f32 %v1243, 0.0
        %v1266 = vmax.f32 %v1248, 0.0
        %v1267 = vmax.f32 %v1251, 0.0
        %v1268 = vmax.f32 %v1256, 0.0
        %v1269 = vmax.f32 %v1259, 0.0
        %v1270 = vld [vmem:[#allocation10] sm:$0xf]
        %v1271 = vld [vmem:[#allocation10 + $0x4] sm:$0xf]
        %v1272 = vld [vmem:[#allocation10 + $0x8] sm:$0xf]
        %v1273 = vld [vmem:[#allocation10 + $0xc] sm:$0xf]
        %v1274 = vld [vmem:[#allocation10 + $0x10] sm:$0xf]
        %v1275 = vld [vmem:[#allocation10 + $0x14] sm:$0xf]
        %v1276 = vld [vmem:[#allocation10 + $0x18] sm:$0xf]
        %v1277 = vld [vmem:[#allocation10 + $0x1c] sm:$0xf]
        %v1278 = vld [vmem:[#allocation10 + $0x20] sm:$0xf]
        %v1279 = vld [vmem:[#allocation10 + $0x24] sm:$0xf]
        %v1280 = vld [vmem:[#allocation10 + $0x28] sm:$0xf]
        %v1281 = vld [vmem:[#allocation10 + $0x2c] sm:$0xf]
        %v1282 = vld [vmem:[#allocation10 + $0x30] sm:$0xf]
        %v1283 = vld [vmem:[#allocation10 + $0x34] sm:$0xf]
        %v1284 = vld [vmem:[#allocation10 + $0x38] sm:$0xf]
        %v1285 = vld [vmem:[#allocation10 + $0x3c] sm:$0xf]
        %v1286 = vld [vmem:[%s10] sm:$0xf]
        %v1287 = vld [vmem:[%s10 + $0x4] sm:$0xf]
        %v1288 = vld [vmem:[%s10 + $0x8] sm:$0xf]
        %v1289 = vld [vmem:[%s10 + $0xc] sm:$0xf]
        %v1290 = vld [vmem:[%s10 + $0x10] sm:$0xf]
        %v1291 = vld [vmem:[%s10 + $0x14] sm:$0xf]
        %v1292 = vld [vmem:[%s10 + $0x18] sm:$0xf]
        %v1293 = vld [vmem:[%s10 + $0x1c] sm:$0xf]
        %v1294 = vld [vmem:[%s11] sm:$0x1]
        %v1295 = vpack.c.bf16 %v1263, %v1262
        %v1296 = vpack.c.bf16 %v1265, %v1264
        %v1297 = vpack.c.bf16 %v1267, %v1266
        %v1298 = vpack.c.bf16 %v1269, %v1268
        %v1307 = vunpack.c.l.b16 %v1286
        %v1308 = vunpack.c.l.b16 %v1287
        %v1309 = vunpack.c.l.b16 %v1288
        %v1310 = vunpack.c.l.b16 %v1289
        %v1311 = vunpack.c.l.b16 %v1290
        %v1312 = vunpack.c.l.b16 %v1291
        %v1313 = vunpack.c.l.b16 %v1292
        %v1314 = vunpack.c.l.b16 %v1293
        %v1315 = vpack.c.b16 %v1308, %v1307
        %v1316 = vpack.c.b16 %v1310, %v1309
        %v1317 = vpack.c.b16 %v1312, %v1311
        %v1318 = vpack.c.b16 %v1314, %v1313
        %1323 = vmatprep.subr.bf16.mxu0 0
        %1324 = vmatpush1.bf16.msra.mxu0 %v1315
        %1325 = vmatprep.subr.bf16.mxu0 0
        %1326 = vmatpush1.bf16.msra.mxu0 %v1316
        %1327 = vmatprep.subr.bf16.mxu0 0
        %1328 = vmatpush1.bf16.msra.mxu0 %v1317
        %1329 = vmatprep.subr.bf16.mxu0 0
        %1330 = vmatpush1.bf16.msra.mxu0 %v1318
        %1331 = vmatprep.subr.bf16.mxu0 0
        %1332 = vmatpush1.bf16.msra.mxu0 0
        %1333 = vmatprep.subr.bf16.mxu0 0
        %1334 = vmatpush1.bf16.msra.mxu0 0
        %1335 = vmatprep.subr.bf16.mxu0 0
        %1336 = vmatpush1.bf16.msra.mxu0 0
        %1337 = vmatprep.subr.bf16.mxu0 0
        %1338 = vmatpush1.bf16.msra.mxu0 0
        %1339 = vmatprep.subr.bf16.mxu0 0
        %1340 = vmatpush1.bf16.msra.mxu0 0
        %1341 = vmatprep.subr.bf16.mxu0 0
        %1342 = vmatpush1.bf16.msra.mxu0 0
        %1343 = vmatprep.subr.bf16.mxu0 0
        %1344 = vmatpush1.bf16.msra.mxu0 0
        %1345 = vmatprep.subr.bf16.mxu0 0
        %1346 = vmatpush1.bf16.msra.mxu0 0
        %1347 = vmatprep.subr.bf16.mxu0 0
        %1348 = vmatpush1.bf16.msra.mxu0 0
        %1349 = vmatprep.subr.bf16.mxu0 0
        %1350 = vmatpush1.bf16.msra.mxu0 0
        %1351 = vmatprep.subr.bf16.mxu0 0
        %1352 = vmatpush1.bf16.msra.mxu0 0
        %1353 = vmatprep.subr.bf16.mxu0 0
        %1354 = vmatpush1.bf16.msra.mxu0 0
        %1355 = vmatprep.mubr.bf16.mxu0 0
        %1356 = vmatmul.mubr.bf16.gmra.mrb[0].mxu0 %v742
        %v1357 = vpop.f32.mrb[0].mxu0
        %v1358 = vadd.f32 0.0, %v1357
        %v1359 = vpop.f32.mrb[0].mxu0
        %v1360 = vpop.f32.mrb[0].mxu0
        %v1361 = vadd.f32 0.0, %v1360
        %v1362 = vpop.f32.mrb[0].mxu0
        %1363 = vmatprep.mubr.bf16.mxu0 0
        %1364 = vmatmul.mubr.bf16.gmra.mrb[0].mxu0 %v745
        %v1365 = vpop.f32.mrb[0].mxu0
        %v1366 = vadd.f32 0.0, %v1365
        %v1367 = vpop.f32.mrb[0].mxu0
        %v1368 = vpop.f32.mrb[0].mxu0
        %v1369 = vadd.f32 0.0, %v1368
        %v1370 = vpop.f32.mrb[0].mxu0
        %1371 = vmatprep.mubr.bf16.mxu0 0
        %1372 = vmatmul.mubr.bf16.gmra.mrb[0].mxu0 %v748
        %v1373 = vpop.f32.mrb[0].mxu0
        %v1374 = vadd.f32 0.0, %v1373
        %v1375 = vpop.f32.mrb[0].mxu0
        %v1376 = vpop.f32.mrb[0].mxu0
        %v1377 = vadd.f32 0.0, %v1376
        %v1378 = vpop.f32.mrb[0].mxu0
        %1379 = vmatprep.mubr.bf16.mxu0 0
        %1380 = vmatmul.mubr.bf16.gmra.mrb[0].mxu0 %v751
        %v1381 = vpop.f32.mrb[0].mxu0
        %v1382 = vadd.f32 0.0, %v1381
        %v1383 = vpop.f32.mrb[0].mxu0
        %v1384 = vpop.f32.mrb[0].mxu0
        %v1385 = vadd.f32 0.0, %v1384
        %v1386 = vpop.f32.mrb[0].mxu0
        %1387 = vdwg.mxu0
        %v1404 = vunpack.c.l.b16 %v1270
        %v1405 = vunpack.c.l.b16 %v1271
        %v1406 = vunpack.c.l.b16 %v1272
        %v1407 = vunpack.c.l.b16 %v1273
        %v1408 = vunpack.c.l.b16 %v1274
        %v1409 = vunpack.c.l.b16 %v1275
        %v1410 = vunpack.c.l.b16 %v1276
        %v1411 = vunpack.c.l.b16 %v1277
        %v1412 = vunpack.c.l.b16 %v1278
        %v1413 = vunpack.c.l.b16 %v1279
        %v1414 = vunpack.c.l.b16 %v1280
        %v1415 = vunpack.c.l.b16 %v1281
        %v1416 = vunpack.c.l.b16 %v1282
        %v1417 = vunpack.c.l.b16 %v1283
        %v1418 = vunpack.c.l.b16 %v1284
        %v1419 = vunpack.c.l.b16 %v1285
        %v1420 = vpack.c.b16 %v1405, %v1404
        %v1421 = vpack.c.b16 %v1407, %v1406
        %v1422 = vpack.c.b16 %v1409, %v1408
        %v1423 = vpack.c.b16 %v1411, %v1410
        %v1424 = vpack.c.b16 %v1413, %v1412
        %v1425 = vpack.c.b16 %v1415, %v1414
        %v1426 = vpack.c.b16 %v1417, %v1416
        %v1427 = vpack.c.b16 %v1419, %v1418
        %1436 = vmatprep.subr.bf16.mxu0 0
        %1437 = vmatpush1.bf16.msra.mxu0 %v1420
        %1438 = vmatprep.subr.bf16.mxu0 0
        %1439 = vmatpush1.bf16.msra.mxu0 %v1421
        %1440 = vmatprep.subr.bf16.mxu0 0
        %1441 = vmatpush1.bf16.msra.mxu0 %v1422
        %1442 = vmatprep.subr.bf16.mxu0 0
        %1443 = vmatpush1.bf16.msra.mxu0 %v1423
        %1444 = vmatprep.subr.bf16.mxu0 0
        %1445 = vmatpush1.bf16.msra.mxu0 %v1424
        %1446 = vmatprep.subr.bf16.mxu0 0
        %1447 = vmatpush1.bf16.msra.mxu0 %v1425
        %1448 = vmatprep.subr.bf16.mxu0 0
        %1449 = vmatpush1.bf16.msra.mxu0 %v1426
        %1450 = vmatprep.subr.bf16.mxu0 0
        %1451 = vmatpush1.bf16.msra.mxu0 %v1427
        %1452 = vmatprep.subr.bf16.mxu0 0
        %1453 = vmatpush1.bf16.msra.mxu0 0
        %1454 = vmatprep.subr.bf16.mxu0 0
        %1455 = vmatpush1.bf16.msra.mxu0 0
        %1456 = vmatprep.subr.bf16.mxu0 0
        %1457 = vmatpush1.bf16.msra.mxu0 0
        %1458 = vmatprep.subr.bf16.mxu0 0
        %1459 = vmatpush1.bf16.msra.mxu0 0
        %1460 = vmatprep.subr.bf16.mxu0 0
        %1461 = vmatpush1.bf16.msra.mxu0 0
        %1462 = vmatprep.subr.bf16.mxu0 0
        %1463 = vmatpush1.bf16.msra.mxu0 0
        %1464 = vmatprep.subr.bf16.mxu0 0
        %1465 = vmatpush1.bf16.msra.mxu0 0
        %1466 = vmatprep.subr.bf16.mxu0 0
        %1467 = vmatpush1.bf16.msra.mxu0 0
        %1468 = vmatprep.mubr.bf16.mxu0 0
        %1469 = vmatmul.mubr.bf16.gmra.mrb[0].mxu0 %v1295
        %v1470 = vpop.f32.mrb[0].mxu0
        %v1471 = vadd.f32 %v1358, %v1470
        %v1472 = vpop.f32.mrb[0].mxu0
        %v1473 = vpop.f32.mrb[0].mxu0
        %v1474 = vadd.f32 %v1361, %v1473
        %v1475 = vpop.f32.mrb[0].mxu0
        %1476 = vmatprep.mubr.bf16.mxu0 0
        %1477 = vmatmul.mubr.bf16.gmra.mrb[0].mxu0 %v1296
        %v1478 = vpop.f32.mrb[0].mxu0
        %v1479 = vadd.f32 %v1366, %v1478
        %v1480 = vpop.f32.mrb[0].mxu0
        %v1481 = vpop.f32.mrb[0].mxu0
        %v1482 = vadd.f32 %v1369, %v1481
        %v1483 = vpop.f32.mrb[0].mxu0
        %1484 = vmatprep.mubr.bf16.mxu0 0
        %1485 = vmatmul.mubr.bf16.gmra.mrb[0].mxu0 %v1297
        %v1486 = vpop.f32.mrb[0].mxu0
        %v1487 = vadd.f32 %v1374, %v1486
        %v1488 = vpop.f32.mrb[0].mxu0
        %v1489 = vpop.f32.mrb[0].mxu0
        %v1490 = vadd.f32 %v1377, %v1489
        %v1491 = vpop.f32.mrb[0].mxu0
        %1492 = vmatprep.mubr.bf16.mxu0 0
        %1493 = vmatmul.mubr.bf16.gmra.mrb[0].mxu0 %v1298
        %v1494 = vpop.f32.mrb[0].mxu0
        %v1495 = vadd.f32 %v1382, %v1494
        %v1496 = vpop.f32.mrb[0].mxu0
        %v1497 = vpop.f32.mrb[0].mxu0
        %v1498 = vadd.f32 %v1385, %v1497
        %v1499 = vpop.f32.mrb[0].mxu0
        %1500 = vdwg.mxu0
        %v1502 = vlaneseq
        %v1503 = vshrl.u32 %v1502, 7
        %v1504 = vsub.s32 0, %v1503
        %v1505 = vrot.slane %v1294, %v1504
        %v1507 = vadd.f32 %v1471, %v1505
        %v1508 = vadd.f32 %v1474, %v1505
        %v1509 = vadd.f32 %v1479, %v1505
        %v1510 = vadd.f32 %v1482, %v1505
        %v1511 = vadd.f32 %v1487, %v1505
        %v1512 = vadd.f32 %v1490, %v1505
        %v1513 = vadd.f32 %v1495, %v1505
        %v1514 = vadd.f32 %v1498, %v1505
        %v1515 = vmax.f32 %v1507, 0.0
        %v1516 = vmax.f32 %v1508, 0.0
        %v1517 = vmax.f32 %v1509, 0.0
        %v1518 = vmax.f32 %v1510, 0.0
        %v1519 = vmax.f32 %v1511, 0.0
        %v1520 = vmax.f32 %v1512, 0.0
        %v1521 = vmax.f32 %v1513, 0.0
        %v1522 = vmax.f32 %v1514, 0.0
        %v1523 = vld [vmem:[#allocation12] sm:$0xf]
        %v1524 = vld [vmem:[#allocation12 + $0x4] sm:$0xf]
        %v1525 = vld [vmem:[#allocation12 + $0x8] sm:$0xf]
        %v1526 = vld [vmem:[#allocation12 + $0xc] sm:$0xf]
        %v1527 = vld [vmem:[#allocation12 + $0x10] sm:$0xf]
        %v1528 = vld [vmem:[#allocation12 + $0x14] sm:$0xf]
        %v1529 = vld [vmem:[#allocation12 + $0x18] sm:$0xf]
        %v1530 = vld [vmem:[#allocation12 + $0x1c] sm:$0xf]
        %v1531 = vld [vmem:[#allocation12 + $0x20] sm:$0xf]
        %v1532 = vld [vmem:[#allocation12 + $0x24] sm:$0xf]
        %v1533 = vld [vmem:[#allocation12 + $0x28] sm:$0xf]
        %v1534 = vld [vmem:[#allocation12 + $0x2c] sm:$0xf]
        %v1535 = vld [vmem:[#allocation12 + $0x30] sm:$0xf]
        %v1536 = vld [vmem:[#allocation12 + $0x34] sm:$0xf]
        %v1537 = vld [vmem:[#allocation12 + $0x38] sm:$0xf]
        %v1538 = vld [vmem:[#allocation12 + $0x3c] sm:$0xf]
        %v1539 = vld [vmem:[%s13] sm:$0x1]
        %v1540 = vpack.c.bf16 %v1516, %v1515
        %v1541 = vpack.c.bf16 %v1518, %v1517
        %v1542 = vpack.c.bf16 %v1520, %v1519
        %v1543 = vpack.c.bf16 %v1522, %v1521
        %v1545 = vlaneseq
        %v1546 = vshrl.u32 %v1545, 7
        %v1547 = vsub.s32 0, %v1546
        %v1548 = vrot.slane %v1539, %v1547
        %v1566 = vunpack.c.l.b16 %v1523
        %v1567 = vunpack.c.l.b16 %v1524
        %v1568 = vunpack.c.l.b16 %v1525
        %v1569 = vunpack.c.l.b16 %v1526
        %v1570 = vunpack.c.l.b16 %v1527
        %v1571 = vunpack.c.l.b16 %v1528
        %v1572 = vunpack.c.l.b16 %v1529
        %v1573 = vunpack.c.l.b16 %v1530
        %v1574 = vunpack.c.l.b16 %v1531
        %v1575 = vunpack.c.l.b16 %v1532
        %v1576 = vunpack.c.l.b16 %v1533
        %v1577 = vunpack.c.l.b16 %v1534
        %v1578 = vunpack.c.l.b16 %v1535
        %v1579 = vunpack.c.l.b16 %v1536
        %v1580 = vunpack.c.l.b16 %v1537
        %v1581 = vunpack.c.l.b16 %v1538
        %v1582 = vpack.c.b16 %v1567, %v1566
        %v1583 = vpack.c.b16 %v1569, %v1568
        %v1584 = vpack.c.b16 %v1571, %v1570
        %v1585 = vpack.c.b16 %v1573, %v1572
        %v1586 = vpack.c.b16 %v1575, %v1574
        %v1587 = vpack.c.b16 %v1577, %v1576
        %v1588 = vpack.c.b16 %v1579, %v1578
        %v1589 = vpack.c.b16 %v1581, %v1580
        %1598 = vmatprep.subr.bf16.mxu0 0
        %1599 = vmatpush1.bf16.msra.mxu0 %v1582
        %1600 = vmatprep.subr.bf16.mxu0 0
        %1601 = vmatpush1.bf16.msra.mxu0 %v1583
        %1602 = vmatprep.subr.bf16.mxu0 0
        %1603 = vmatpush1.bf16.msra.mxu0 %v1584
        %1604 = vmatprep.subr.bf16.mxu0 0
        %1605 = vmatpush1.bf16.msra.mxu0 %v1585
        %1606 = vmatprep.subr.bf16.mxu0 0
        %1607 = vmatpush1.bf16.msra.mxu0 %v1586
        %1608 = vmatprep.subr.bf16.mxu0 0
        %1609 = vmatpush1.bf16.msra.mxu0 %v1587
        %1610 = vmatprep.subr.bf16.mxu0 0
        %1611 = vmatpush1.bf16.msra.mxu0 %v1588
        %1612 = vmatprep.subr.bf16.mxu0 0
        %1613 = vmatpush1.bf16.msra.mxu0 %v1589
        %1614 = vmatprep.subr.bf16.mxu0 0
        %1615 = vmatpush1.bf16.msra.mxu0 0
        %1616 = vmatprep.subr.bf16.mxu0 0
        %1617 = vmatpush1.bf16.msra.mxu0 0
        %1618 = vmatprep.subr.bf16.mxu0 0
        %1619 = vmatpush1.bf16.msra.mxu0 0
        %1620 = vmatprep.subr.bf16.mxu0 0
        %1621 = vmatpush1.bf16.msra.mxu0 0
        %1622 = vmatprep.subr.bf16.mxu0 0
        %1623 = vmatpush1.bf16.msra.mxu0 0
        %1624 = vmatprep.subr.bf16.mxu0 0
        %1625 = vmatpush1.bf16.msra.mxu0 0
        %1626 = vmatprep.subr.bf16.mxu0 0
        %1627 = vmatpush1.bf16.msra.mxu0 0
        %1628 = vmatprep.subr.bf16.mxu0 0
        %1629 = vmatpush1.bf16.msra.mxu0 0
        %1630 = vmatprep.mubr.bf16.mxu0 0
        %1631 = vmatmul.mubr.bf16.gmra.mrb[0].mxu0 %v1540
        %v1632 = vpop.f32.mrb[0].mxu0
        %v1633 = vadd.f32 %v1548, %v1632
        %v1634 = vpop.f32.mrb[0].mxu0
        %v1635 = vpop.f32.mrb[0].mxu0
        %v1636 = vadd.f32 %v1548, %v1635
        %v1637 = vpop.f32.mrb[0].mxu0
        %1638 = vmatprep.mubr.bf16.mxu0 0
        %1639 = vmatmul.mubr.bf16.gmra.mrb[0].mxu0 %v1541
        %v1640 = vpop.f32.mrb[0].mxu0
        %v1641 = vadd.f32 %v1548, %v1640
        %v1642 = vpop.f32.mrb[0].mxu0
        %v1643 = vpop.f32.mrb[0].mxu0
        %v1644 = vadd.f32 %v1548, %v1643
        %v1645 = vpop.f32.mrb[0].mxu0
        %1646 = vmatprep.mubr.bf16.mxu0 0
        %1647 = vmatmul.mubr.bf16.gmra.mrb[0].mxu0 %v1542
        %v1648 = vpop.f32.mrb[0].mxu0
        %v1649 = vadd.f32 %v1548, %v1648
        %v1650 = vpop.f32.mrb[0].mxu0
        %v1651 = vpop.f32.mrb[0].mxu0
        %v1652 = vadd.f32 %v1548, %v1651
        %v1653 = vpop.f32.mrb[0].mxu0
        %1654 = vmatprep.mubr.bf16.mxu0 0
        %1655 = vmatmul.mubr.bf16.gmra.mrb[0].mxu0 %v1543
        %v1656 = vpop.f32.mrb[0].mxu0
        %v1657 = vadd.f32 %v1548, %v1656
        %v1658 = vpop.f32.mrb[0].mxu0
        %v1659 = vpop.f32.mrb[0].mxu0
        %v1660 = vadd.f32 %v1548, %v1659
        %v1661 = vpop.f32.mrb[0].mxu0
        %1662 = vdwg.mxu0
        %v1663 = vmax.f32 %v1633, 0.0
        %v1664 = vmax.f32 %v1636, 0.0
        %v1665 = vmax.f32 %v1641, 0.0
        %v1666 = vmax.f32 %v1644, 0.0
        %v1667 = vmax.f32 %v1649, 0.0
        %v1668 = vmax.f32 %v1652, 0.0
        %v1669 = vmax.f32 %v1657, 0.0
        %v1670 = vmax.f32 %v1660, 0.0
        %v1671 = vld [vmem:[#allocation13] sm:$0xf]
        %v1672 = vld [vmem:[#allocation13 + $0x4] sm:$0xf]
        %v1673 = vld [vmem:[#allocation13 + $0x8] sm:$0xf]
        %v1674 = vld [vmem:[#allocation13 + $0xc] sm:$0xf]
        %v1675 = vld [vmem:[#allocation13 + $0x10] sm:$0xf]
        %v1676 = vld [vmem:[#allocation13 + $0x14] sm:$0xf]
        %v1677 = vld [vmem:[#allocation13 + $0x18] sm:$0xf]
        %v1678 = vld [vmem:[#allocation13 + $0x1c] sm:$0xf]
        %v1679 = vld [vmem:[#allocation13 + $0x20] sm:$0xf]
        %v1680 = vld [vmem:[#allocation13 + $0x24] sm:$0xf]
        %v1681 = vld [vmem:[#allocation13 + $0x28] sm:$0xf]
        %v1682 = vld [vmem:[#allocation13 + $0x2c] sm:$0xf]
        %v1683 = vld [vmem:[#allocation13 + $0x30] sm:$0xf]
        %v1684 = vld [vmem:[#allocation13 + $0x34] sm:$0xf]
        %v1685 = vld [vmem:[#allocation13 + $0x38] sm:$0xf]
        %v1686 = vld [vmem:[#allocation13 + $0x3c] sm:$0xf]
        %v1687 = vld [vmem:[%s15] sm:$0x1]
        %v1688 = vpack.c.bf16 %v1664, %v1663
        %v1689 = vpack.c.bf16 %v1666, %v1665
        %v1690 = vpack.c.bf16 %v1668, %v1667
        %v1691 = vpack.c.bf16 %v1670, %v1669
        %v1693 = vlaneseq
        %v1694 = vshrl.u32 %v1693, 7
        %v1695 = vsub.s32 0, %v1694
        %v1696 = vrot.slane %v1687, %v1695
        %v1714 = vunpack.c.l.b16 %v1671
        %v1715 = vunpack.c.l.b16 %v1672
        %v1716 = vunpack.c.l.b16 %v1673
        %v1717 = vunpack.c.l.b16 %v1674
        %v1718 = vunpack.c.l.b16 %v1675
        %v1719 = vunpack.c.l.b16 %v1676
        %v1720 = vunpack.c.l.b16 %v1677
        %v1721 = vunpack.c.l.b16 %v1678
        %v1722 = vunpack.c.l.b16 %v1679
        %v1723 = vunpack.c.l.b16 %v1680
        %v1724 = vunpack.c.l.b16 %v1681
        %v1725 = vunpack.c.l.b16 %v1682
        %v1726 = vunpack.c.l.b16 %v1683
        %v1727 = vunpack.c.l.b16 %v1684
        %v1728 = vunpack.c.l.b16 %v1685
        %v1729 = vunpack.c.l.b16 %v1686
        %v1730 = vpack.c.b16 %v1715, %v1714
        %v1731 = vpack.c.b16 %v1717, %v1716
        %v1732 = vpack.c.b16 %v1719, %v1718
        %v1733 = vpack.c.b16 %v1721, %v1720
        %v1734 = vpack.c.b16 %v1723, %v1722
        %v1735 = vpack.c.b16 %v1725, %v1724
        %v1736 = vpack.c.b16 %v1727, %v1726
        %v1737 = vpack.c.b16 %v1729, %v1728
        %1746 = vmatprep.subr.bf16.mxu0 0
        %1747 = vmatpush1.bf16.msra.mxu0 %v1730
        %1748 = vmatprep.subr.bf16.mxu0 0
        %1749 = vmatpush1.bf16.msra.mxu0 %v1731
        %1750 = vmatprep.subr.bf16.mxu0 0
        %1751 = vmatpush1.bf16.msra.mxu0 %v1732
        %1752 = vmatprep.subr.bf16.mxu0 0
        %1753 = vmatpush1.bf16.msra.mxu0 %v1733
        %1754 = vmatprep.subr.bf16.mxu0 0
        %1755 = vmatpush1.bf16.msra.mxu0 %v1734
        %1756 = vmatprep.subr.bf16.mxu0 0
        %1757 = vmatpush1.bf16.msra.mxu0 %v1735
        %1758 = vmatprep.subr.bf16.mxu0 0
        %1759 = vmatpush1.bf16.msra.mxu0 %v1736
        %1760 = vmatprep.subr.bf16.mxu0 0
        %1761 = vmatpush1.bf16.msra.mxu0 %v1737
        %1762 = vmatprep.subr.bf16.mxu0 0
        %1763 = vmatpush1.bf16.msra.mxu0 0
        %1764 = vmatprep.subr.bf16.mxu0 0
        %1765 = vmatpush1.bf16.msra.mxu0 0
        %1766 = vmatprep.subr.bf16.mxu0 0
        %1767 = vmatpush1.bf16.msra.mxu0 0
        %1768 = vmatprep.subr.bf16.mxu0 0
        %1769 = vmatpush1.bf16.msra.mxu0 0
        %1770 = vmatprep.subr.bf16.mxu0 0
        %1771 = vmatpush1.bf16.msra.mxu0 0
        %1772 = vmatprep.subr.bf16.mxu0 0
        %1773 = vmatpush1.bf16.msra.mxu0 0
        %1774 = vmatprep.subr.bf16.mxu0 0
        %1775 = vmatpush1.bf16.msra.mxu0 0
        %1776 = vmatprep.subr.bf16.mxu0 0
        %1777 = vmatpush1.bf16.msra.mxu0 0
        %1778 = vmatprep.mubr.bf16.mxu0 0
        %1779 = vmatmul.mubr.bf16.gmra.mrb[0].mxu0 %v1688
        %v1780 = vpop.f32.mrb[0].mxu0
        %v1781 = vadd.f32 %v1696, %v1780
        %v1782 = vpop.f32.mrb[0].mxu0
        %v1783 = vpop.f32.mrb[0].mxu0
        %v1784 = vadd.f32 %v1696, %v1783
        %v1785 = vpop.f32.mrb[0].mxu0
        %1786 = vmatprep.mubr.bf16.mxu0 0
        %1787 = vmatmul.mubr.bf16.gmra.mrb[0].mxu0 %v1689
        %v1788 = vpop.f32.mrb[0].mxu0
        %v1789 = vadd.f32 %v1696, %v1788
        %v1790 = vpop.f32.mrb[0].mxu0
        %v1791 = vpop.f32.mrb[0].mxu0
        %v1792 = vadd.f32 %v1696, %v1791
        %v1793 = vpop.f32.mrb[0].mxu0
        %1794 = vmatprep.mubr.bf16.mxu0 0
        %1795 = vmatmul.mubr.bf16.gmra.mrb[0].mxu0 %v1690
        %v1796 = vpop.f32.mrb[0].mxu0
        %v1797 = vadd.f32 %v1696, %v1796
        %v1798 = vpop.f32.mrb[0].mxu0
        %v1799 = vpop.f32.mrb[0].mxu0
        %v1800 = vadd.f32 %v1696, %v1799
        %v1801 = vpop.f32.mrb[0].mxu0
        %1802 = vmatprep.mubr.bf16.mxu0 0
        %1803 = vmatmul.mubr.bf16.gmra.mrb[0].mxu0 %v1691
        %v1804 = vpop.f32.mrb[0].mxu0
        %v1805 = vadd.f32 %v1696, %v1804
        %v1806 = vpop.f32.mrb[0].mxu0
        %v1807 = vpop.f32.mrb[0].mxu0
        %v1808 = vadd.f32 %v1696, %v1807
        %v1809 = vpop.f32.mrb[0].mxu0
        %1810 = vdwg.mxu0
        %v1811 = vmax.f32 %v1781, 0.0
        %v1812 = vmax.f32 %v1784, 0.0
        %v1813 = vmax.f32 %v1789, 0.0
        %v1814 = vmax.f32 %v1792, 0.0
        %v1815 = vmax.f32 %v1797, 0.0
        %v1816 = vmax.f32 %v1800, 0.0
        %v1817 = vmax.f32 %v1805, 0.0
        %v1818 = vmax.f32 %v1808, 0.0
        %v1819 = vld [vmem:[%s16] sm:$0xf]
        %v1820 = vld [vmem:[%s16 + $0x4] sm:$0xf]
        %v1821 = vld [vmem:[%s16 + $0x8] sm:$0xf]
        %v1822 = vld [vmem:[%s16 + $0xc] sm:$0xf]
        %v1823 = vld [vmem:[%s16 + $0x10] sm:$0xf]
        %v1824 = vld [vmem:[%s16 + $0x14] sm:$0xf]
        %v1825 = vld [vmem:[%s16 + $0x18] sm:$0xf]
        %v1826 = vld [vmem:[%s16 + $0x1c] sm:$0xf]
        %v1827 = vld [vmem:[%s16 + $0x20] sm:$0xf]
        %v1828 = vld [vmem:[%s16 + $0x24] sm:$0xf]
        %v1829 = vld [vmem:[%s16 + $0x28] sm:$0xf]
        %v1830 = vld [vmem:[%s16 + $0x2c] sm:$0xf]
        %v1831 = vld [vmem:[%s16 + $0x30] sm:$0xf]
        %v1832 = vld [vmem:[%s16 + $0x34] sm:$0xf]
        %v1833 = vld [vmem:[%s16 + $0x38] sm:$0xf]
        %v1834 = vld [vmem:[%s16 + $0x3c] sm:$0xf]
        %v1835 = vld [vmem:[%s17] sm:$0x1]
        %v1836 = vpack.c.bf16 %v1812, %v1811
        %v1837 = vpack.c.bf16 %v1814, %v1813
        %v1838 = vpack.c.bf16 %v1816, %v1815
        %v1839 = vpack.c.bf16 %v1818, %v1817
        %v1841 = vlaneseq
        %v1842 = vshrl.u32 %v1841, 7
        %v1843 = vsub.s32 0, %v1842
        %v1844 = vrot.slane %v1835, %v1843
        %v1862 = vunpack.c.l.b16 %v1819
        %v1863 = vunpack.c.l.b16 %v1820
        %v1864 = vunpack.c.l.b16 %v1821
        %v1865 = vunpack.c.l.b16 %v1822
        %v1866 = vunpack.c.l.b16 %v1823
        %v1867 = vunpack.c.l.b16 %v1824
        %v1868 = vunpack.c.l.b16 %v1825
        %v1869 = vunpack.c.l.b16 %v1826
        %v1870 = vunpack.c.l.b16 %v1827
        %v1871 = vunpack.c.l.b16 %v1828
        %v1872 = vunpack.c.l.b16 %v1829
        %v1873 = vunpack.c.l.b16 %v1830
        %v1874 = vunpack.c.l.b16 %v1831
        %v1875 = vunpack.c.l.b16 %v1832
        %v1876 = vunpack.c.l.b16 %v1833
        %v1877 = vunpack.c.l.b16 %v1834
        %v1878 = vpack.c.b16 %v1863, %v1862
        %v1879 = vpack.c.b16 %v1865, %v1864
        %v1880 = vpack.c.b16 %v1867, %v1866
        %v1881 = vpack.c.b16 %v1869, %v1868
        %v1882 = vpack.c.b16 %v1871, %v1870
        %v1883 = vpack.c.b16 %v1873, %v1872
        %v1884 = vpack.c.b16 %v1875, %v1874
        %v1885 = vpack.c.b16 %v1877, %v1876
        %1894 = vmatprep.subr.bf16.mxu0 0
        %1895 = vmatpush1.bf16.msra.mxu0 %v1878
        %1896 = vmatprep.subr.bf16.mxu0 0
        %1897 = vmatpush1.bf16.msra.mxu0 %v1879
        %1898 = vmatprep.subr.bf16.mxu0 0
        %1899 = vmatpush1.bf16.msra.mxu0 %v1880
        %1900 = vmatprep.subr.bf16.mxu0 0
        %1901 = vmatpush1.bf16.msra.mxu0 %v1881
        %1902 = vmatprep.subr.bf16.mxu0 0
        %1903 = vmatpush1.bf16.msra.mxu0 %v1882
        %1904 = vmatprep.subr.bf16.mxu0 0
        %1905 = vmatpush1.bf16.msra.mxu0 %v1883
        %1906 = vmatprep.subr.bf16.mxu0 0
        %1907 = vmatpush1.bf16.msra.mxu0 %v1884
        %1908 = vmatprep.subr.bf16.mxu0 0
        %1909 = vmatpush1.bf16.msra.mxu0 %v1885
        %1910 = vmatprep.subr.bf16.mxu0 0
        %1911 = vmatpush1.bf16.msra.mxu0 0
        %1912 = vmatprep.subr.bf16.mxu0 0
        %1913 = vmatpush1.bf16.msra.mxu0 0
        %1914 = vmatprep.subr.bf16.mxu0 0
        %1915 = vmatpush1.bf16.msra.mxu0 0
        %1916 = vmatprep.subr.bf16.mxu0 0
        %1917 = vmatpush1.bf16.msra.mxu0 0
        %1918 = vmatprep.subr.bf16.mxu0 0
        %1919 = vmatpush1.bf16.msra.mxu0 0
        %1920 = vmatprep.subr.bf16.mxu0 0
        %1921 = vmatpush1.bf16.msra.mxu0 0
        %1922 = vmatprep.subr.bf16.mxu0 0
        %1923 = vmatpush1.bf16.msra.mxu0 0
        %1924 = vmatprep.subr.bf16.mxu0 0
        %1925 = vmatpush1.bf16.msra.mxu0 0
        %1926 = vmatprep.mubr.bf16.mxu0 0
        %1927 = vmatmul.mubr.bf16.gmra.mrb[0].mxu0 %v1836
        %v1928 = vpop.f32.mrb[0].mxu0
        %v1929 = vadd.f32 %v1844, %v1928
        %v1930 = vpop.f32.mrb[0].mxu0
        %v1931 = vpop.f32.mrb[0].mxu0
        %v1932 = vadd.f32 %v1844, %v1931
        %v1933 = vpop.f32.mrb[0].mxu0
        %1934 = vmatprep.mubr.bf16.mxu0 0
        %1935 = vmatmul.mubr.bf16.gmra.mrb[0].mxu0 %v1837
        %v1936 = vpop.f32.mrb[0].mxu0
        %v1937 = vadd.f32 %v1844, %v1936
        %v1938 = vpop.f32.mrb[0].mxu0
        %v1939 = vpop.f32.mrb[0].mxu0
        %v1940 = vadd.f32 %v1844, %v1939
        %v1941 = vpop.f32.mrb[0].mxu0
        %1942 = vmatprep.mubr.bf16.mxu0 0
        %1943 = vmatmul.mubr.bf16.gmra.mrb[0].mxu0 %v1838
        %v1944 = vpop.f32.mrb[0].mxu0
        %v1945 = vadd.f32 %v1844, %v1944
        %v1946 = vpop.f32.mrb[0].mxu0
        %v1947 = vpop.f32.mrb[0].mxu0
        %v1948 = vadd.f32 %v1844, %v1947
        %v1949 = vpop.f32.mrb[0].mxu0
        %1950 = vmatprep.mubr.bf16.mxu0 0
        %1951 = vmatmul.mubr.bf16.gmra.mrb[0].mxu0 %v1839
        %v1952 = vpop.f32.mrb[0].mxu0
        %v1953 = vadd.f32 %v1844, %v1952
        %v1954 = vpop.f32.mrb[0].mxu0
        %v1955 = vpop.f32.mrb[0].mxu0
        %v1956 = vadd.f32 %v1844, %v1955
        %v1957 = vpop.f32.mrb[0].mxu0
        %1958 = vdwg.mxu0
        %vm1959 = vcmask 31744
        %1960 = vst.msk [vmem:[%s686] sm:$0xff] %vm1959, %v1929
        %1961 = vst.msk [vmem:[%s686 + $0x8] sm:$0xff] %vm1959, %v1932
        %1962 = vst.msk [vmem:[%s686 + $0x10] sm:$0xff] %vm1959, %v1937
        %1963 = vst.msk [vmem:[%s686 + $0x18] sm:$0xff] %vm1959, %v1940
        %1964 = vst.msk [vmem:[%s686 + $0x20] sm:$0xff] %vm1959, %v1945
        %1965 = vst.msk [vmem:[%s686 + $0x28] sm:$0xff] %vm1959, %v1948
        %1966 = vst.msk [vmem:[%s686 + $0x30] sm:$0xff] %vm1959, %v1953
        %1967 = vst.msk [vmem:[%s686 + $0x38] sm:$0xff] %vm1959, %v1956
        %s1968 = smul.u32 8, %s34
        %p1969 = scmp.lt.s32.totalorder %s1968, 15
        %s1970 = scalar_select %p1969, %s1968, 15
        %s1971 = smul.addr %s1970, 8
        %s1972 = scalar_lea.vmem %s18, %s1971
        // Predicated region
        $region125: #{tpu_custom_call.1} parent=91 // pred_check
          %p1973 = pneg %p435
        $region126: #{tpu_custom_call.1} parent=91 // pred_check_branch
          %1975 = sbr.rel (%p1973) target = $region128
        $region127: #{tpu_custom_call.1} parent=91 // pred_region
          %s1976 = smul.u32 8, %s34
        $region128: #{tpu_custom_call.1} parent=91 // pred_fallthru
          _
      $region92: #{tpu_custom_call.1} parent=5 // pred_fallthru
        _
      %p1977 = scmp.le.s32.totalorder 2, %s29
      // Predicated region
      $region129: #{tpu_custom_call.1} parent=5 // pred_check
        %p1978 = pneg %p1977
      $region130: #{tpu_custom_call.1} parent=5 // pred_check_branch
        %1980 = sbr.rel (%p1978) target = $region132
      $region131: #{tpu_custom_call.1} parent=5 // pred_region
        %s1981 = ssub.s32 %s29, 2
        // Predicated region
        $region133: #{tpu_custom_call.1} parent=131 // pred_check
          %p1982 = pneg %p441
        $region134: #{tpu_custom_call.1} parent=131 // pred_check_branch
          %1984 = sbr.rel (%p1982) target = $region136
        $region135: #{tpu_custom_call.1} parent=131 // pred_region
          %s1985 = smul.u32 8, %s35
          %p1986 = scmp.lt.s32.totalorder %s1985, 15
          %s1987 = scalar_select %p1986, %s1985, 15
          %s1988 = smul.addr %s1987, 8
          %s1989 = scalar_lea.vmem %s18, %s1988
        $region136: #{tpu_custom_call.1} parent=131 // pred_fallthru
          _
      $region132: #{tpu_custom_call.1} parent=5 // pred_fallthru
        _
    $region6: #{tpu_custom_call.1} parent=1 // loop_footer
      %s33 = sadd.s32 1, %s29
    $region7: #{tpu_custom_call.1} parent=1 // loop_footer_branch
      %28 = sbr.rel target = $region3
    $region8: #{tpu_custom_call.1} parent=1 // loop_exit
      _
    %1990 = vsyncpa [#allocation3], 1
    %s1991 = scalar_lea.sflag [#allocation3], 1
    %1992 = vsyncpa %s1991, 1
    %1993 = vsyncpa [#allocation5], 1
    %1994 = vsyncpa [#allocation8], 1
    %1995 = vsyncpa [#allocation11], 1
    %1996 = vsyncpa [#allocation14], 1

</llo_original>
